<compile_context>
chip_gen: v7x
topology: tpu7x:2x2x1
jax: 0.10.0
libtpu: 0.0.40
codegen_flags: <defaults>
</compile_context>

<pallas_src>
import functools

import jax
import jax.numpy as jnp
from jax.experimental import pallas as pl
from jax.experimental.pallas import tpu as pltpu

EPS = 1e-5
_VMEM_LIMIT = 64 * 1024 * 1024   # comfortable on v5e/v6e, fits v7x's 64 MiB


def _cparams(num_grid_axes=1):
    return pltpu.CompilerParams(
        dimension_semantics=("parallel",) * num_grid_axes,
        vmem_limit_bytes=_VMEM_LIMIT,
    )


def _choose_tile(m, preferred=512):
    """Largest multiple-of-8 divisor of m that is <= preferred (v7x-safe)."""
    if m <= preferred:
        return m
    for t in range(preferred, 0, -8):
        if m % t == 0:
            return t
    return preferred   # ragged last tile handled by in-kernel masking


# ---------------------------------------------------------------------------
# Pass 1: tiled (bf16 x bf16 -> f32) matmul + per-tile BN partial statistics.
# Used for conv1 / conv3 / skip-projection (all 1x1 convs).
# ---------------------------------------------------------------------------
def _mm_stats_kernel(x_ref, w_ref, y_ref, stats_ref, *, tile_m, m_total=None):
    y = jnp.dot(x_ref[...], w_ref[...], preferred_element_type=jnp.float32)
    if m_total is None:
        yv = y
    else:  # ragged last tile: keep padded rows out of the statistics
        valid = m_total - pl.program_id(0) * tile_m
        rows = jax.lax.broadcasted_iota(jnp.int32, (tile_m, 1), 0)
        yv = jnp.where(rows < valid, y, 0.0)
    y_ref[...] = y
    stats_ref[0, 0:1, :] = jnp.sum(yv, axis=0, keepdims=True)
    stats_ref[0, 1:2, :] = jnp.sum(yv * yv, axis=0, keepdims=True)


def _mm_stats(x_bf16, w_bf16, tile_m):
    m, k = x_bf16.shape
    cout = w_bf16.shape[1]
    grid_m = pl.cdiv(m, tile_m)
    kern = functools.partial(
        _mm_stats_kernel, tile_m=tile_m,
        m_total=(m if m % tile_m != 0 else None))
    return pl.pallas_call(
        kern,
        grid=(grid_m,),
        in_specs=[
            pl.BlockSpec((tile_m, k), lambda i: (i, 0)),
            pl.BlockSpec((k, cout), lambda i: (0, 0)),   # weight stays resident
        ],
        out_specs=[
            pl.BlockSpec((tile_m, cout), lambda i: (i, 0)),
            pl.BlockSpec((1, 2, cout), lambda i: (i, 0, 0)),
        ],
        out_shape=[
            jax.ShapeDtypeStruct((m, cout), jnp.float32),
            jax.ShapeDtypeStruct((grid_m, 2, cout), jnp.float32),
        ],
        compiler_params=_cparams(),
    )(x_bf16, w_bf16)


# ---------------------------------------------------------------------------
# Pass 1 for the 3x3 conv: per-image 9-tap accumulation over a zero-padded,
# stride-phase-decomposed v1 (no im2col materialization in HBM).
# ---------------------------------------------------------------------------
def _conv3x3_stats_kernel(*refs, stride, ho, wq, cout):
    s = stride
    nph = s * s
    phase_refs = refs[:nph]
    w_ref, mask_ref = refs[nph], refs[nph + 1]
    y_ref, stats_ref = refs[nph + 2], refs[nph + 3]

    # Load the 9 (cin, cout) weight taps once.
    w_taps = [[w_ref[dy, dx] for dx in range(3)] for dy in range(3)]

    # Chunk output rows to bound the live f32 accumulator.
    rows_per_chunk = max(1, min(ho, 256 // wq))
    ssum = jnp.zeros((1, cout), jnp.float32)
    ssq = jnp.zeros((1, cout), jnp.float32)
    for h0 in range(0, ho, rows_per_chunk):
        hrows = min(rows_per_chunk, ho - h0)
        lc = hrows * wq
        base = h0 * wq
        acc = jnp.zeros((lc, cout), jnp.float32)
        for dy in range(3):
            for dx in range(3):
                pref = phase_refs[(dy % s) * s + (dx % s)]
                off = base + (dy // s) * wq + (dx // s)
                acc = acc + jnp.dot(pref[0, off:off + lc, :], w_taps[dy][dx],
                                    preferred_element_type=jnp.float32)
        y_ref[0, base:base + lc, :] = acc
        av = acc * mask_ref[base:base + lc, :]   # drop wrap-around garbage cols
        ssum = ssum + jnp.sum(av, axis=0, keepdims=True)
        ssq = ssq + jnp.sum(av * av, axis=0, keepdims=True)
    stats_ref[0, 0:1, :] = ssum
    stats_ref[0, 1:2, :] = ssq


def _conv3x3_stats(phases, w2_bf16, mask, ho, wq, stride):
    n, lphase, cin = phases[0].shape
    cout = w2_bf16.shape[-1]
    l_out = ho * wq
    nph = stride * stride
    in_specs = (
        [pl.BlockSpec((1, lphase, cin), lambda b: (b, 0, 0))] * nph
        + [pl.BlockSpec((3, 3, cin, cout), lambda b: (0, 0, 0, 0)),
           pl.BlockSpec((l_out, 1), lambda b: (0, 0))]
    )
    kern = functools.partial(_conv3x3_stats_kernel, stride=stride,
                             ho=ho, wq=wq, cout=cout)
    return pl.pallas_call(
        kern,
        grid=(n,),
        in_specs=in_specs,
        out_specs=[
            pl.BlockSpec((1, l_out, cout), lambda b: (b, 0, 0)),
            pl.BlockSpec((1, 2, cout), lambda b: (b, 0, 0)),
        ],
        out_shape=[
            jax.ShapeDtypeStruct((n, l_out, cout), jnp.float32),
            jax.ShapeDtypeStruct((n, 2, cout), jnp.float32),
        ],
        compiler_params=_cparams(),
    )(*phases, w2_bf16, mask)


# ---------------------------------------------------------------------------
# Pass 2 kernels: tiled normalize (+relu) (+skip add + final relu).
# ---------------------------------------------------------------------------
def _bn_relu_kernel(y_ref, scale_ref, shift_ref, o_ref):
    o = jnp.maximum(y_ref[...] * scale_ref[...] + shift_ref[...], 0.0)
    o_ref[...] = o.astype(o_ref.dtype)


def _bn_relu(y, scale, shift, tile_m, out_dtype):
    m, c = y.shape
    grid_m = pl.cdiv(m, tile_m)
    tile_spec = pl.BlockSpec((tile_m, c), lambda i: (i, 0))
    vec_spec = pl.BlockSpec((1, c), lambda i: (0, 0))
    return pl.pallas_call(
        _bn_relu_kernel,
        grid=(grid_m,),
        in_specs=[tile_spec, vec_spec, vec_spec],
        out_specs=tile_spec,
        out_shape=jax.ShapeDtypeStruct((m, c), out_dtype),
        compiler_params=_cparams(),
    )(y, scale, shift)


def _bn_relu_trim_kernel(y_ref, scale_ref, shift_ref, o_ref, *, wo):
    y = y_ref[0, :, :wo, :]                       # trim the wq -> wo padding
    o = jnp.maximum(y * scale_ref[...] + shift_ref[...], 0.0)
    o_ref[0] = o.astype(o_ref.dtype)


def _bn_relu_trim(y4d, scale, shift, wo, out_dtype):
    n, ho, wq, c = y4d.shape
    return pl.pallas_call(
        functools.partial(_bn_relu_trim_kernel, wo=wo),
        grid=(n,),
        in_specs=[
            pl.BlockSpec((1, ho, wq, c), lambda b: (b, 0, 0, 0)),
            pl.BlockSpec((1, c), lambda b: (0, 0)),
            pl.BlockSpec((1, c), lambda b: (0, 0)),
        ],
        out_specs=pl.BlockSpec((1, ho, wo, c), lambda b: (b, 0, 0, 0)),
        out_shape=jax.ShapeDtypeStruct((n, ho, wo, c), out_dtype),
        compiler_params=_cparams(),
    )(y4d, scale, shift)


def _bn_relu_add_relu_kernel(y_ref, sc_ref, sh_ref, s_ref, ssc_ref, ssh_ref, o_ref):
    v3 = jnp.maximum(y_ref[...] * sc_ref[...] + sh_ref[...], 0.0)
    sk = s_ref[...] * ssc_ref[...] + ssh_ref[...]
    o_ref[...] = jnp.maximum(v3 + sk, 0.0).astype(o_ref.dtype)


def _bn_relu_add_relu(y3, sc3, sh3, skip, scs, shs, tile_m):
    m, c = y3.shape
    grid_m = pl.cdiv(m, tile_m)
    tile_spec = pl.BlockSpec((tile_m, c), lambda i: (i, 0))
    vec_spec = pl.BlockSpec((1, c), lambda i: (0, 0))
    return pl.pallas_call(
        _bn_relu_add_relu_kernel,
        grid=(grid_m,),
        in_specs=[tile_spec, vec_spec, vec_spec, tile_spec, vec_spec, vec_spec],
        out_specs=tile_spec,
        out_shape=jax.ShapeDtypeStruct((m, c), jnp.float32),
        compiler_params=_cparams(),
    )(y3, sc3, sh3, skip, scs, shs)


# ---------------------------------------------------------------------------
# Tiny XLA glue: stats merge (two-pass BN) and conv2 padding / phase prep.
# ---------------------------------------------------------------------------
def _bn_scale_shift(stats, count):
    total = jnp.sum(stats, axis=0)                       # (2, C)
    mean = total[0] / count
    var = jnp.maximum(total[1] / count - mean * mean, 0.0)   # biased var
    rstd = jax.lax.rsqrt(var + EPS)
    return rstd[None, :], (-mean * rstd)[None, :]


def _conv2_phases(v1_nhwc, stride):
    """Zero-pad v1 by 1 and split into stride x stride phase arrays so every
    3x3 tap becomes an unstrided, contiguous flat-offset slice in the kernel."""
    n, h, w, c = v1_nhwc.shape
    s = stride
    ho = (h - 1) // s + 1
    wo = (w - 1) // s + 1
    hp = -(-(h + 2) // s) * s + s        # ceil to multiple of s, + s slack rows
    wp = -(-(w + 2) // s) * s
    hq, wq = hp // s, wp // s
    xp = jnp.pad(v1_nhwc, ((0, 0), (1, hp - h - 1), (1, wp - w - 1), (0, 0)))
    phases = [xp[:, py::s, px::s, :].reshape(n, hq * wq, c)
              for py in range(s) for px in range(s)]
    return phases, (ho, wo, hq, wq)


# ---------------------------------------------------------------------------
# Parameters (kaiming_normal fan_out / relu, matching the PyTorch module).
# Conv biases are omitted: they are exactly cancelled by the training-mode BN
# that follows every conv, so the forward output is unchanged.
# ---------------------------------------------------------------------------
def init_params(key, in_channels, out_channels, downsample):
    c4 = out_channels // 4
    keys = jax.random.split(key, 4)

    def kaiming(k, shape, fan_out):
        return jax.random.normal(k, shape, jnp.float32) * jnp.sqrt(2.0 / fan_out)

    params = dict(
        w1=kaiming(keys[0], (in_channels, c4), fan_out=c4),
        w2=kaiming(keys[1], (3, 3, c4, c4), fan_out=c4 * 9),    # (kh,kw,in,out)
        w3=kaiming(keys[2], (c4, out_channels), fan_out=out_channels),
    )
    if downsample or in_channels != out_channels:
        params['ws'] = kaiming(keys[3], (in_channels, out_channels),
                               fan_out=out_channels)
    return params


# ---------------------------------------------------------------------------
# Forward pass (equivalent to BottleneckBlock.forward, training-mode BN).
# ---------------------------------------------------------------------------
def bottleneck_block_nhwc(x_nhwc, params, downsample):
    n, h, w, cin = x_nhwc.shape
    stride = 2 if downsample else 1
    c4 = params['w1'].shape[1]
    cout = params['w3'].shape[1]

    x_f32 = x_nhwc.astype(jnp.float32)
    x_flat = x_f32.reshape(n * h * w, cin)

    # conv1 (1x1) + bn1 + relu
    m1 = n * h * w
    t1 = _choose_tile(m1)
    y1, st1 = _mm_stats(x_flat.astype(jnp.bfloat16),
                        params['w1'].astype(jnp.bfloat16), t1)
    sc1, sh1 = _bn_scale_shift(st1, m1)
    v1 = _bn_relu(y1, sc1, sh1, t1, jnp.bfloat16).reshape(n, h, w, c4)

    # conv2 (3x3, pad=1, stride) + bn2 + relu  -- no HBM im2col
    phases, (ho, wo, hq, wq) = _conv2_phases(v1, stride)
    mask = ((jnp.arange(ho * wq) % wq) < wo).astype(jnp.float32)[:, None]
    y2, st2 = _conv3x3_stats(phases, params['w2'].astype(jnp.bfloat16),
                             mask, ho, wq, stride)
    m2 = n * ho * wo
    sc2, sh2 = _bn_scale_shift(st2, m2)
    v2 = _bn_relu_trim(y2.reshape(n, ho, wq, c4), sc2, sh2, wo, jnp.bfloat16)
    v2_flat = v2.reshape(m2, c4)

    # skip path
    t2 = _choose_tile(m2)
    if 'ws' in params:   # projection: 1x1 strided conv + bn (no relu)
        xs = x_nhwc[:, ::stride, ::stride, :].reshape(m2, cin)
        ys, sts = _mm_stats(xs.astype(jnp.bfloat16),
                            params['ws'].astype(jnp.bfloat16), t2)
        scs, shs = _bn_scale_shift(sts, m2)
    else:                # identity skip
        ys = x_flat
        scs = jnp.ones((1, cout), jnp.float32)
        shs = jnp.zeros((1, cout), jnp.float32)

    # conv3 (1x1) + bn3 + relu, fused with the skip add and final relu
    y3, st3 = _mm_stats(v2_flat, params['w3'].astype(jnp.bfloat16), t2)
    sc3, sh3 = _bn_scale_shift(st3, m2)
    out = _bn_relu_add_relu(y3, sc3, sh3, ys, scs, shs, t2)
    return out.reshape(n, ho, wo, cout)


def bottleneck_block(x_nchw, params, downsample):
    # NCHW wrapper for parity with the PyTorch module.  (Callers that can use
    # NHWC should call bottleneck_block_nhwc and skip these two transposes.)
    x_nhwc = jnp.transpose(x_nchw, (0, 2, 3, 1))
    out = bottleneck_block_nhwc(x_nhwc, params, downsample)
    return jnp.transpose(out, (0, 3, 1, 2))


# ---------------------------------------------------------------------------
# Pure-JAX reference (XLA convs, f32) for numerical verification.
# ---------------------------------------------------------------------------
def reference_forward(x_nchw, params, downsample):
    s = 2 if downsample else 1

    def conv(x, wgt, stride, padding):
        return jax.lax.conv_general_dilated(
            x, wgt, window_strides=(stride, stride), padding=padding,
            dimension_numbers=('NCHW', 'HWIO', 'NCHW'))

    def bn(x):
        mean = jnp.mean(x, axis=(0, 2, 3), keepdims=True)
        var = jnp.mean((x - mean) ** 2, axis=(0, 2, 3), keepdims=True)
        return (x - mean) * jax.lax.rsqrt(var + EPS)

    v1 = jax.nn.relu(bn(conv(x_nchw, params['w1'][None, None], 1, 'VALID')))
    v2 = jax.nn.relu(bn(conv(v1, params['w2'], s, [(1, 1), (1, 1)])))
    v3 = jax.nn.relu(bn(conv(v2, params['w3'][None, None], 1, 'VALID')))
    if 'ws' in params:
        skip = bn(conv(x_nchw, params['ws'][None, None], s, 'VALID'))
    else:
        skip = x_nchw
    return jax.nn.relu(v3 + skip)


if __name__ == "__main__":
    key = jax.random.PRNGKey(0)
    k_x, k_p = jax.random.split(key)

    in_channels, out_channels, downsample = 4, 16, True
    x = jax.random.normal(k_x, (2, in_channels, 16, 16), jnp.float32)  # NCHW
    params = init_params(k_p, in_channels, out_channels, downsample)

    fwd = jax.jit(functools.partial(bottleneck_block, downsample=downsample))
    out = jax.block_until_ready(fwd(x, params))

    assert out.shape == (2, out_channels, 8, 8), out.shape
    assert bool(jnp.all(out >= 0.0))            # final relu
    ref = reference_forward(x, params, downsample)
    err = jnp.abs(out - ref)
    assert bool(jnp.all(err <= 0.1 + 0.05 * jnp.abs(ref))), float(jnp.max(err))
    print("KERNEL_OK")
</pallas_src>

<mosaic_0001>
module attributes {stable_mosaic.version = 11 : i64} {
  func.func @_mm_stats_kernel(%arg0: i32, %arg1: memref<512x4xbf16, #tpu.memory_space<vmem>>, %arg2: memref<4x4xbf16, #tpu.memory_space<vmem>>, %arg3: memref<512x4xf32, #tpu.memory_space<vmem>>, %arg4: memref<1x2x4xf32, #tpu.memory_space<vmem>>) attributes {dimension_semantics = [#tpu.dimension_semantics<parallel>], iteration_bounds = array<i64: 1>, scalar_prefetch = 0 : i64, scratch_operands = 0 : i64, tpu.core_type = #tpu.core_type<tc>, window_params = [{transform_indices = @transform_0, window_bounds = array<i64: 512, 4>}, {pipeline_mode = #tpu.pipeline_mode<synchronous>, transform_indices = @transform_1, window_bounds = array<i64: 4, 4>}, {transform_indices = @transform_2, window_bounds = array<i64: 512, 4>}, {transform_indices = @transform_3, window_bounds = array<i64: 1, 2, 4>}]} {
    %c0 = arith.constant 0 : index
    %c0_0 = arith.constant 0 : index
    %0 = vector.load %arg1[%c0, %c0_0] : memref<512x4xbf16, #tpu.memory_space<vmem>>, vector<512x4xbf16>
    %c0_1 = arith.constant 0 : index
    %c0_2 = arith.constant 0 : index
    %1 = vector.load %arg2[%c0_1, %c0_2] : memref<4x4xbf16, #tpu.memory_space<vmem>>, vector<4x4xbf16>
    %cst = arith.constant dense<0.000000e+00> : vector<512x4xf32>
    %2 = tpu.matmul %0, %1, %cst {dimension_numbers = #tpu.dot_dimension_numbers<[1], [0], [0], [1], [0, 0, 1, 1], [], []>} : vector<512x4xbf16>, vector<4x4xbf16>, vector<512x4xf32> -> vector<512x4xf32>
    %c0_3 = arith.constant 0 : index
    %c0_4 = arith.constant 0 : index
    %3 = vector.load %arg3[%c0_3, %c0_4] : memref<512x4xf32, #tpu.memory_space<vmem>>, vector<512x4xf32>
    tpu.vector_store %arg3[%c0_3, %c0_4], %2 {strides = array<i32>} : memref<512x4xf32, #tpu.memory_space<vmem>>, vector<512x4xf32>,
    %cst_5 = arith.constant dense<0.000000e+00> : vector<4xf32>
    %4 = vector.multi_reduction <add>, %2, %cst_5 [0] : vector<512x4xf32> to vector<4xf32>
    %5 = vector.shape_cast %4 : vector<4xf32> to vector<1x4xf32>
    %c0_6 = arith.constant 0 : index
    %c0_7 = arith.constant 0 : index
    %c0_8 = arith.constant 0 : index
    %6 = vector.load %arg4[%c0_6, %c0_7, %c0_8] : memref<1x2x4xf32, #tpu.memory_space<vmem>>, vector<1x1x4xf32>
    %7 = vector.shape_cast %6 : vector<1x1x4xf32> to vector<1x4xf32>
    %8 = vector.shape_cast %5 : vector<1x4xf32> to vector<1x1x4xf32>
    tpu.vector_store %arg4[%c0_6, %c0_7, %c0_8], %8 {strides = array<i32>} : memref<1x2x4xf32, #tpu.memory_space<vmem>>, vector<1x1x4xf32>,
    %9 = arith.mulf %2, %2 : vector<512x4xf32>
    %cst_9 = arith.constant dense<0.000000e+00> : vector<4xf32>
    %10 = vector.multi_reduction <add>, %9, %cst_9 [0] : vector<512x4xf32> to vector<4xf32>
    %11 = vector.shape_cast %10 : vector<4xf32> to vector<1x4xf32>
    %c0_10 = arith.constant 0 : index
    %c1 = arith.constant 1 : index
    %c0_11 = arith.constant 0 : index
    %12 = vector.load %arg4[%c0_10, %c1, %c0_11] : memref<1x2x4xf32, #tpu.memory_space<vmem>>, vector<1x1x4xf32>
    %13 = vector.shape_cast %12 : vector<1x1x4xf32> to vector<1x4xf32>
    %14 = vector.shape_cast %11 : vector<1x4xf32> to vector<1x1x4xf32>
    tpu.vector_store %arg4[%c0_10, %c1, %c0_11], %14 {strides = array<i32>} : memref<1x2x4xf32, #tpu.memory_space<vmem>>, vector<1x1x4xf32>,
    return
  }
  func.func @transform_0(%arg0: i32) -> (i32, i32) {
    %c0_i32 = arith.constant 0 : i32
    %c0_i32_0 = arith.constant 0 : i32
    return %arg0, %c0_i32 : i32, i32
  }
  func.func @transform_1(%arg0: i32) -> (i32, i32) {
    %c0_i32 = arith.constant 0 : i32
    %c0_i32_0 = arith.constant 0 : i32
    %c0_i32_1 = arith.constant 0 : i32
    return %c0_i32, %c0_i32_0 : i32, i32
  }
  func.func @transform_2(%arg0: i32) -> (i32, i32) {
    %c0_i32 = arith.constant 0 : i32
    %c0_i32_0 = arith.constant 0 : i32
    return %arg0, %c0_i32 : i32, i32
  }
  func.func @transform_3(%arg0: i32) -> (i32, i32, i32) {
    %c0_i32 = arith.constant 0 : i32
    %c0_i32_0 = arith.constant 0 : i32
    %c0_i32_1 = arith.constant 0 : i32
    return %arg0, %c0_i32, %c0_i32_0 : i32, i32, i32
  }
}

module attributes {stable_mosaic.version = 11 : i64} {
  func.func @_bn_relu_kernel(%arg0: i32, %arg1: memref<512x4xf32, #tpu.memory_space<vmem>>, %arg2: memref<1x4xf32, #tpu.memory_space<vmem>>, %arg3: memref<1x4xf32, #tpu.memory_space<vmem>>, %arg4: memref<512x4xbf16, #tpu.memory_space<vmem>>) attributes {dimension_semantics = [#tpu.dimension_semantics<parallel>], iteration_bounds = array<i64: 1>, scalar_prefetch = 0 : i64, scratch_operands = 0 : i64, tpu.core_type = #tpu.core_type<tc>, window_params = [{transform_indices = @transform_0, window_bounds = array<i64: 512, 4>}, {pipeline_mode = #tpu.pipeline_mode<synchronous>, transform_indices = @transform_1, window_bounds = array<i64: 1, 4>}, {pipeline_mode = #tpu.pipeline_mode<synchronous>, transform_indices = @transform_2, window_bounds = array<i64: 1, 4>}, {transform_indices = @transform_3, window_bounds = array<i64: 512, 4>}]} {
    %c0 = arith.constant 0 : index
    %c0_0 = arith.constant 0 : index
    %0 = vector.load %arg1[%c0, %c0_0] : memref<512x4xf32, #tpu.memory_space<vmem>>, vector<512x4xf32>
    %c0_1 = arith.constant 0 : index
    %c0_2 = arith.constant 0 : index
    %1 = vector.load %arg2[%c0_1, %c0_2] : memref<1x4xf32, #tpu.memory_space<vmem>>, vector<1x4xf32>
    %2 = vector.broadcast %1 : vector<1x4xf32> to vector<512x4xf32>
    %3 = arith.mulf %0, %2 : vector<512x4xf32>
    %c0_3 = arith.constant 0 : index
    %c0_4 = arith.constant 0 : index
    %4 = vector.load %arg3[%c0_3, %c0_4] : memref<1x4xf32, #tpu.memory_space<vmem>>, vector<1x4xf32>
    %5 = vector.broadcast %4 : vector<1x4xf32> to vector<512x4xf32>
    %6 = arith.addf %3, %5 : vector<512x4xf32>
    %cst = arith.constant 0.000000e+00 : f32
    %7 = vector.broadcast %cst : f32 to vector<512x4xf32>
    %8 = arith.maximumf %6, %7 : vector<512x4xf32>
    %9 = arith.truncf %8 : vector<512x4xf32> to vector<512x4xbf16>
    %c0_5 = arith.constant 0 : index
    %c0_6 = arith.constant 0 : index
    %10 = vector.load %arg4[%c0_5, %c0_6] : memref<512x4xbf16, #tpu.memory_space<vmem>>, vector<512x4xbf16>
    tpu.vector_store %arg4[%c0_5, %c0_6], %9 {strides = array<i32>} : memref<512x4xbf16, #tpu.memory_space<vmem>>, vector<512x4xbf16>,
    return
  }
  func.func @transform_0(%arg0: i32) -> (i32, i32) {
    %c0_i32 = arith.constant 0 : i32
    %c0_i32_0 = arith.constant 0 : i32
    return %arg0, %c0_i32 : i32, i32
  }
  func.func @transform_1(%arg0: i32) -> (i32, i32) {
    %c0_i32 = arith.constant 0 : i32
    %c0_i32_0 = arith.constant 0 : i32
    %c0_i32_1 = arith.constant 0 : i32
    return %c0_i32, %c0_i32_0 : i32, i32
  }
  func.func @transform_2(%arg0: i32) -> (i32, i32) {
    %c0_i32 = arith.constant 0 : i32
    %c0_i32_0 = arith.constant 0 : i32
    %c0_i32_1 = arith.constant 0 : i32
    return %c0_i32, %c0_i32_0 : i32, i32
  }
  func.func @transform_3(%arg0: i32) -> (i32, i32) {
    %c0_i32 = arith.constant 0 : i32
    %c0_i32_0 = arith.constant 0 : i32
    return %arg0, %c0_i32 : i32, i32
  }
}

module attributes {stable_mosaic.version = 11 : i64} {
  func.func @_bn_relu_trim_kernel(%arg0: i32, %arg1: memref<1x8x9x4xf32, #tpu.memory_space<vmem>>, %arg2: memref<1x4xf32, #tpu.memory_space<vmem>>, %arg3: memref<1x4xf32, #tpu.memory_space<vmem>>, %arg4: memref<1x8x8x4xbf16, #tpu.memory_space<vmem>>) attributes {dimension_semantics = [#tpu.dimension_semantics<parallel>], iteration_bounds = array<i64: 2>, scalar_prefetch = 0 : i64, scratch_operands = 0 : i64, tpu.core_type = #tpu.core_type<tc>, window_params = [{transform_indices = @transform_0, window_bounds = array<i64: 1, 8, 9, 4>}, {pipeline_mode = #tpu.pipeline_mode<synchronous>, transform_indices = @transform_1, window_bounds = array<i64: 1, 4>}, {pipeline_mode = #tpu.pipeline_mode<synchronous>, transform_indices = @transform_2, window_bounds = array<i64: 1, 4>}, {transform_indices = @transform_3, window_bounds = array<i64: 1, 8, 8, 4>}]} {
    %c0 = arith.constant 0 : index
    %c0_0 = arith.constant 0 : index
    %c0_1 = arith.constant 0 : index
    %c0_2 = arith.constant 0 : index
    %0 = vector.load %arg1[%c0, %c0_0, %c0_1, %c0_2] : memref<1x8x9x4xf32, #tpu.memory_space<vmem>>, vector<1x8x8x4xf32>
    %1 = vector.shape_cast %0 : vector<1x8x8x4xf32> to vector<8x8x4xf32>
    %c0_3 = arith.constant 0 : index
    %c0_4 = arith.constant 0 : index
    %2 = vector.load %arg2[%c0_3, %c0_4] : memref<1x4xf32, #tpu.memory_space<vmem>>, vector<1x4xf32>
    %3 = vector.shape_cast %2 : vector<1x4xf32> to vector<1x1x4xf32>
    %4 = vector.broadcast %3 : vector<1x1x4xf32> to vector<8x8x4xf32>
    %5 = arith.mulf %1, %4 : vector<8x8x4xf32>
    %c0_5 = arith.constant 0 : index
    %c0_6 = arith.constant 0 : index
    %6 = vector.load %arg3[%c0_5, %c0_6] : memref<1x4xf32, #tpu.memory_space<vmem>>, vector<1x4xf32>
    %7 = vector.shape_cast %6 : vector<1x4xf32> to vector<1x1x4xf32>
    %8 = vector.broadcast %7 : vector<1x1x4xf32> to vector<8x8x4xf32>
    %9 = arith.addf %5, %8 : vector<8x8x4xf32>
    %cst = arith.constant 0.000000e+00 : f32
    %10 = vector.broadcast %cst : f32 to vector<8x8x4xf32>
    %11 = arith.maximumf %9, %10 : vector<8x8x4xf32>
    %12 = arith.truncf %11 : vector<8x8x4xf32> to vector<8x8x4xbf16>
    %c0_7 = arith.constant 0 : index
    %c0_8 = arith.constant 0 : index
    %c0_9 = arith.constant 0 : index
    %c0_10 = arith.constant 0 : index
    %13 = vector.load %arg4[%c0_7, %c0_8, %c0_9, %c0_10] : memref<1x8x8x4xbf16, #tpu.memory_space<vmem>>, vector<1x8x8x4xbf16>
    %14 = vector.shape_cast %13 : vector<1x8x8x4xbf16> to vector<8x8x4xbf16>
    %15 = vector.shape_cast %12 : vector<8x8x4xbf16> to vector<1x8x8x4xbf16>
    tpu.vector_store %arg4[%c0_7, %c0_8, %c0_9, %c0_10], %15 {strides = array<i32>} : memref<1x8x8x4xbf16, #tpu.memory_space<vmem>>, vector<1x8x8x4xbf16>,
    return
  }
  func.func @transform_0(%arg0: i32) -> (i32, i32, i32, i32) {
    %c0_i32 = arith.constant 0 : i32
    %c0_i32_0 = arith.constant 0 : i32
    %c0_i32_1 = arith.constant 0 : i32
    %c0_i32_2 = arith.constant 0 : i32
    return %arg0, %c0_i32, %c0_i32_0, %c0_i32_1 : i32, i32, i32, i32
  }
  func.func @transform_1(%arg0: i32) -> (i32, i32) {
    %c0_i32 = arith.constant 0 : i32
    %c0_i32_0 = arith.constant 0 : i32
    %c0_i32_1 = arith.constant 0 : i32
    return %c0_i32, %c0_i32_0 : i32, i32
  }
  func.func @transform_2(%arg0: i32) -> (i32, i32) {
    %c0_i32 = arith.constant 0 : i32
    %c0_i32_0 = arith.constant 0 : i32
    %c0_i32_1 = arith.constant 0 : i32
    return %c0_i32, %c0_i32_0 : i32, i32
  }
  func.func @transform_3(%arg0: i32) -> (i32, i32, i32, i32) {
    %c0_i32 = arith.constant 0 : i32
    %c0_i32_0 = arith.constant 0 : i32
    %c0_i32_1 = arith.constant 0 : i32
    %c0_i32_2 = arith.constant 0 : i32
    return %arg0, %c0_i32, %c0_i32_0, %c0_i32_1 : i32, i32, i32, i32
  }
}

module attributes {stable_mosaic.version = 11 : i64} {
  func.func @_conv3x3_stats_kernel(%arg0: i32, %arg1: memref<1x90x4xbf16, #tpu.memory_space<vmem>>, %arg2: memref<1x90x4xbf16, #tpu.memory_space<vmem>>, %arg3: memref<1x90x4xbf16, #tpu.memory_space<vmem>>, %arg4: memref<1x90x4xbf16, #tpu.memory_space<vmem>>, %arg5: memref<3x3x4x4xbf16, #tpu.memory_space<vmem>>, %arg6: memref<72x1xf32, #tpu.memory_space<vmem>>, %arg7: memref<1x72x4xf32, #tpu.memory_space<vmem>>, %arg8: memref<1x2x4xf32, #tpu.memory_space<vmem>>) attributes {dimension_semantics = [#tpu.dimension_semantics<parallel>], iteration_bounds = array<i64: 2>, scalar_prefetch = 0 : i64, scratch_operands = 0 : i64, tpu.core_type = #tpu.core_type<tc>, window_params = [{transform_indices = @transform_0, window_bounds = array<i64: 1, 90, 4>}, {transform_indices = @transform_1, window_bounds = array<i64: 1, 90, 4>}, {transform_indices = @transform_2, window_bounds = array<i64: 1, 90, 4>}, {transform_indices = @transform_3, window_bounds = array<i64: 1, 90, 4>}, {pipeline_mode = #tpu.pipeline_mode<synchronous>, transform_indices = @transform_4, window_bounds = array<i64: 3, 3, 4, 4>}, {pipeline_mode = #tpu.pipeline_mode<synchronous>, transform_indices = @transform_5, window_bounds = array<i64: 72, 1>}, {transform_indices = @transform_6, window_bounds = array<i64: 1, 72, 4>}, {transform_indices = @transform_7, window_bounds = array<i64: 1, 2, 4>}]} {
    %c0 = arith.constant 0 : index
    %c0_0 = arith.constant 0 : index
    %c0_1 = arith.constant 0 : index
    %c0_2 = arith.constant 0 : index
    %0 = vector.load %arg5[%c0, %c0_0, %c0_1, %c0_2] : memref<3x3x4x4xbf16, #tpu.memory_space<vmem>>, vector<1x1x4x4xbf16>
    %1 = vector.shape_cast %0 : vector<1x1x4x4xbf16> to vector<4x4xbf16>
    %c0_3 = arith.constant 0 : index
    %c1 = arith.constant 1 : index
    %c0_4 = arith.constant 0 : index
    %c0_5 = arith.constant 0 : index
    %2 = vector.load %arg5[%c0_3, %c1, %c0_4, %c0_5] : memref<3x3x4x4xbf16, #tpu.memory_space<vmem>>, vector<1x1x4x4xbf16>
    %3 = vector.shape_cast %2 : vector<1x1x4x4xbf16> to vector<4x4xbf16>
    %c0_6 = arith.constant 0 : index
    %c2 = arith.constant 2 : index
    %c0_7 = arith.constant 0 : index
    %c0_8 = arith.constant 0 : index
    %4 = vector.load %arg5[%c0_6, %c2, %c0_7, %c0_8] : memref<3x3x4x4xbf16, #tpu.memory_space<vmem>>, vector<1x1x4x4xbf16>
    %5 = vector.shape_cast %4 : vector<1x1x4x4xbf16> to vector<4x4xbf16>
    %c1_9 = arith.constant 1 : index
    %c0_10 = arith.constant 0 : index
    %c0_11 = arith.constant 0 : index
    %c0_12 = arith.constant 0 : index
    %6 = vector.load %arg5[%c1_9, %c0_10, %c0_11, %c0_12] : memref<3x3x4x4xbf16, #tpu.memory_space<vmem>>, vector<1x1x4x4xbf16>
    %7 = vector.shape_cast %6 : vector<1x1x4x4xbf16> to vector<4x4xbf16>
    %c1_13 = arith.constant 1 : index
    %c1_14 = arith.constant 1 : index
    %c0_15 = arith.constant 0 : index
    %c0_16 = arith.constant 0 : index
    %8 = vector.load %arg5[%c1_13, %c1_14, %c0_15, %c0_16] : memref<3x3x4x4xbf16, #tpu.memory_space<vmem>>, vector<1x1x4x4xbf16>
    %9 = vector.shape_cast %8 : vector<1x1x4x4xbf16> to vector<4x4xbf16>
    %c1_17 = arith.constant 1 : index
    %c2_18 = arith.constant 2 : index
    %c0_19 = arith.constant 0 : index
    %c0_20 = arith.constant 0 : index
    %10 = vector.load %arg5[%c1_17, %c2_18, %c0_19, %c0_20] : memref<3x3x4x4xbf16, #tpu.memory_space<vmem>>, vector<1x1x4x4xbf16>
    %11 = vector.shape_cast %10 : vector<1x1x4x4xbf16> to vector<4x4xbf16>
    %c2_21 = arith.constant 2 : index
    %c0_22 = arith.constant 0 : index
    %c0_23 = arith.constant 0 : index
    %c0_24 = arith.constant 0 : index
    %12 = vector.load %arg5[%c2_21, %c0_22, %c0_23, %c0_24] : memref<3x3x4x4xbf16, #tpu.memory_space<vmem>>, vector<1x1x4x4xbf16>
    %13 = vector.shape_cast %12 : vector<1x1x4x4xbf16> to vector<4x4xbf16>
    %c2_25 = arith.constant 2 : index
    %c1_26 = arith.constant 1 : index
    %c0_27 = arith.constant 0 : index
    %c0_28 = arith.constant 0 : index
    %14 = vector.load %arg5[%c2_25, %c1_26, %c0_27, %c0_28] : memref<3x3x4x4xbf16, #tpu.memory_space<vmem>>, vector<1x1x4x4xbf16>
    %15 = vector.shape_cast %14 : vector<1x1x4x4xbf16> to vector<4x4xbf16>
    %c2_29 = arith.constant 2 : index
    %c2_30 = arith.constant 2 : index
    %c0_31 = arith.constant 0 : index
    %c0_32 = arith.constant 0 : index
    %16 = vector.load %arg5[%c2_29, %c2_30, %c0_31, %c0_32] : memref<3x3x4x4xbf16, #tpu.memory_space<vmem>>, vector<1x1x4x4xbf16>
    %17 = vector.shape_cast %16 : vector<1x1x4x4xbf16> to vector<4x4xbf16>
    %cst = arith.constant 0.000000e+00 : f32
    %18 = vector.broadcast %cst : f32 to vector<1x4xf32>
    %cst_33 = arith.constant 0.000000e+00 : f32
    %19 = vector.broadcast %cst_33 : f32 to vector<1x4xf32>
    %cst_34 = arith.constant 0.000000e+00 : f32
    %20 = vector.broadcast %cst_34 : f32 to vector<72x4xf32>
    %c0_35 = arith.constant 0 : index
    %c0_36 = arith.constant 0 : index
    %c0_37 = arith.constant 0 : index
    %21 = vector.load %arg1[%c0_35, %c0_36, %c0_37] : memref<1x90x4xbf16, #tpu.memory_space<vmem>>, vector<1x72x4xbf16>
    %22 = vector.shape_cast %21 : vector<1x72x4xbf16> to vector<72x4xbf16>
    %cst_38 = arith.constant dense<0.000000e+00> : vector<72x4xf32>
    %23 = tpu.matmul %22, %1, %cst_38 {dimension_numbers = #tpu.dot_dimension_numbers<[1], [0], [0], [1], [0, 0, 1, 1], [], []>} : vector<72x4xbf16>, vector<4x4xbf16>, vector<72x4xf32> -> vector<72x4xf32>
    %24 = arith.addf %20, %23 : vector<72x4xf32>
    %c0_39 = arith.constant 0 : index
    %c0_40 = arith.constant 0 : index
    %c0_41 = arith.constant 0 : index
    %25 = vector.load %arg2[%c0_39, %c0_40, %c0_41] : memref<1x90x4xbf16, #tpu.memory_space<vmem>>, vector<1x72x4xbf16>
    %26 = vector.shape_cast %25 : vector<1x72x4xbf16> to vector<72x4xbf16>
    %cst_42 = arith.constant dense<0.000000e+00> : vector<72x4xf32>
    %27 = tpu.matmul %26, %3, %cst_42 {dimension_numbers = #tpu.dot_dimension_numbers<[1], [0], [0], [1], [0, 0, 1, 1], [], []>} : vector<72x4xbf16>, vector<4x4xbf16>, vector<72x4xf32> -> vector<72x4xf32>
    %28 = arith.addf %24, %27 : vector<72x4xf32>
    %c0_43 = arith.constant 0 : index
    %c1_44 = arith.constant 1 : index
    %c0_45 = arith.constant 0 : index
    %29 = vector.load %arg1[%c0_43, %c1_44, %c0_45] : memref<1x90x4xbf16, #tpu.memory_space<vmem>>, vector<1x72x4xbf16>
    %30 = vector.shape_cast %29 : vector<1x72x4xbf16> to vector<72x4xbf16>
    %cst_46 = arith.constant dense<0.000000e+00> : vector<72x4xf32>
    %31 = tpu.matmul %30, %5, %cst_46 {dimension_numbers = #tpu.dot_dimension_numbers<[1], [0], [0], [1], [0, 0, 1, 1], [], []>} : vector<72x4xbf16>, vector<4x4xbf16>, vector<72x4xf32> -> vector<72x4xf32>
    %32 = arith.addf %28, %31 : vector<72x4xf32>
    %c0_47 = arith.constant 0 : index
    %c0_48 = arith.constant 0 : index
    %c0_49 = arith.constant 0 : index
    %33 = vector.load %arg3[%c0_47, %c0_48, %c0_49] : memref<1x90x4xbf16, #tpu.memory_space<vmem>>, vector<1x72x4xbf16>
    %34 = vector.shape_cast %33 : vector<1x72x4xbf16> to vector<72x4xbf16>
    %cst_50 = arith.constant dense<0.000000e+00> : vector<72x4xf32>
    %35 = tpu.matmul %34, %7, %cst_50 {dimension_numbers = #tpu.dot_dimension_numbers<[1], [0], [0], [1], [0, 0, 1, 1], [], []>} : vector<72x4xbf16>, vector<4x4xbf16>, vector<72x4xf32> -> vector<72x4xf32>
    %36 = arith.addf %32, %35 : vector<72x4xf32>
    %c0_51 = arith.constant 0 : index
    %c0_52 = arith.constant 0 : index
    %c0_53 = arith.constant 0 : index
    %37 = vector.load %arg4[%c0_51, %c0_52, %c0_53] : memref<1x90x4xbf16, #tpu.memory_space<vmem>>, vector<1x72x4xbf16>
    %38 = vector.shape_cast %37 : vector<1x72x4xbf16> to vector<72x4xbf16>
    %cst_54 = arith.constant dense<0.000000e+00> : vector<72x4xf32>
    %39 = tpu.matmul %38, %9, %cst_54 {dimension_numbers = #tpu.dot_dimension_numbers<[1], [0], [0], [1], [0, 0, 1, 1], [], []>} : vector<72x4xbf16>, vector<4x4xbf16>, vector<72x4xf32> -> vector<72x4xf32>
    %40 = arith.addf %36, %39 : vector<72x4xf32>
    %c0_55 = arith.constant 0 : index
    %c1_56 = arith.constant 1 : index
    %c0_57 = arith.constant 0 : index
    %41 = vector.load %arg3[%c0_55, %c1_56, %c0_57] : memref<1x90x4xbf16, #tpu.memory_space<vmem>>, vector<1x72x4xbf16>
    %42 = vector.shape_cast %41 : vector<1x72x4xbf16> to vector<72x4xbf16>
    %cst_58 = arith.constant dense<0.000000e+00> : vector<72x4xf32>
    %43 = tpu.matmul %42, %11, %cst_58 {dimension_numbers = #tpu.dot_dimension_numbers<[1], [0], [0], [1], [0, 0, 1, 1], [], []>} : vector<72x4xbf16>, vector<4x4xbf16>, vector<72x4xf32> -> vector<72x4xf32>
    %44 = arith.addf %40, %43 : vector<72x4xf32>
    %c0_59 = arith.constant 0 : index
    %c9 = arith.constant 9 : index
    %c0_60 = arith.constant 0 : index
    %45 = vector.load %arg1[%c0_59, %c9, %c0_60] : memref<1x90x4xbf16, #tpu.memory_space<vmem>>, vector<1x72x4xbf16>
    %46 = vector.shape_cast %45 : vector<1x72x4xbf16> to vector<72x4xbf16>
    %cst_61 = arith.constant dense<0.000000e+00> : vector<72x4xf32>
    %47 = tpu.matmul %46, %13, %cst_61 {dimension_numbers = #tpu.dot_dimension_numbers<[1], [0], [0], [1], [0, 0, 1, 1], [], []>} : vector<72x4xbf16>, vector<4x4xbf16>, vector<72x4xf32> -> vector<72x4xf32>
    %48 = arith.addf %44, %47 : vector<72x4xf32>
    %c0_62 = arith.constant 0 : index
    %c9_63 = arith.constant 9 : index
    %c0_64 = arith.constant 0 : index
    %49 = vector.load %arg2[%c0_62, %c9_63, %c0_64] : memref<1x90x4xbf16, #tpu.memory_space<vmem>>, vector<1x72x4xbf16>
    %50 = vector.shape_cast %49 : vector<1x72x4xbf16> to vector<72x4xbf16>
    %cst_65 = arith.constant dense<0.000000e+00> : vector<72x4xf32>
    %51 = tpu.matmul %50, %15, %cst_65 {dimension_numbers = #tpu.dot_dimension_numbers<[1], [0], [0], [1], [0, 0, 1, 1], [], []>} : vector<72x4xbf16>, vector<4x4xbf16>, vector<72x4xf32> -> vector<72x4xf32>
    %52 = arith.addf %48, %51 : vector<72x4xf32>
    %c0_66 = arith.constant 0 : index
    %c10 = arith.constant 10 : index
    %c0_67 = arith.constant 0 : index
    %53 = vector.load %arg1[%c0_66, %c10, %c0_67] : memref<1x90x4xbf16, #tpu.memory_space<vmem>>, vector<1x72x4xbf16>
    %54 = vector.shape_cast %53 : vector<1x72x4xbf16> to vector<72x4xbf16>
    %cst_68 = arith.constant dense<0.000000e+00> : vector<72x4xf32>
    %55 = tpu.matmul %54, %17, %cst_68 {dimension_numbers = #tpu.dot_dimension_numbers<[1], [0], [0], [1], [0, 0, 1, 1], [], []>} : vector<72x4xbf16>, vector<4x4xbf16>, vector<72x4xf32> -> vector<72x4xf32>
    %56 = arith.addf %52, %55 : vector<72x4xf32>
    %c0_69 = arith.constant 0 : index
    %c0_70 = arith.constant 0 : index
    %c0_71 = arith.constant 0 : index
    %57 = vector.load %arg7[%c0_69, %c0_70, %c0_71] : memref<1x72x4xf32, #tpu.memory_space<vmem>>, vector<1x72x4xf32>
    %58 = vector.shape_cast %57 : vector<1x72x4xf32> to vector<72x4xf32>
    %59 = vector.shape_cast %56 : vector<72x4xf32> to vector<1x72x4xf32>
    tpu.vector_store %arg7[%c0_69, %c0_70, %c0_71], %59 {strides = array<i32>} : memref<1x72x4xf32, #tpu.memory_space<vmem>>, vector<1x72x4xf32>,
    %c0_72 = arith.constant 0 : index
    %c0_73 = arith.constant 0 : index
    %60 = vector.load %arg6[%c0_72, %c0_73] : memref<72x1xf32, #tpu.memory_space<vmem>>, vector<72x1xf32>
    %61 = vector.broadcast %60 : vector<72x1xf32> to vector<72x4xf32>
    %62 = arith.mulf %56, %61 : vector<72x4xf32>
    %cst_74 = arith.constant dense<0.000000e+00> : vector<4xf32>
    %63 = vector.multi_reduction <add>, %62, %cst_74 [0] : vector<72x4xf32> to vector<4xf32>
    %64 = vector.shape_cast %63 : vector<4xf32> to vector<1x4xf32>
    %65 = arith.addf %18, %64 : vector<1x4xf32>
    %66 = arith.mulf %62, %62 : vector<72x4xf32>
    %cst_75 = arith.constant dense<0.000000e+00> : vector<4xf32>
    %67 = vector.multi_reduction <add>, %66, %cst_75 [0] : vector<72x4xf32> to vector<4xf32>
    %68 = vector.shape_cast %67 : vector<4xf32> to vector<1x4xf32>
    %69 = arith.addf %19, %68 : vector<1x4xf32>
    %c0_76 = arith.constant 0 : index
    %c0_77 = arith.constant 0 : index
    %c0_78 = arith.constant 0 : index
    %70 = vector.load %arg8[%c0_76, %c0_77, %c0_78] : memref<1x2x4xf32, #tpu.memory_space<vmem>>, vector<1x1x4xf32>
    %71 = vector.shape_cast %70 : vector<1x1x4xf32> to vector<1x4xf32>
    %72 = vector.shape_cast %65 : vector<1x4xf32> to vector<1x1x4xf32>
    tpu.vector_store %arg8[%c0_76, %c0_77, %c0_78], %72 {strides = array<i32>} : memref<1x2x4xf32, #tpu.memory_space<vmem>>, vector<1x1x4xf32>,
    %c0_79 = arith.constant 0 : index
    %c1_80 = arith.constant 1 : index
    %c0_81 = arith.constant 0 : index
    %73 = vector.load %arg8[%c0_79, %c1_80, %c0_81] : memref<1x2x4xf32, #tpu.memory_space<vmem>>, vector<1x1x4xf32>
    %74 = vector.shape_cast %73 : vector<1x1x4xf32> to vector<1x4xf32>
    %75 = vector.shape_cast %69 : vector<1x4xf32> to vector<1x1x4xf32>
    tpu.vector_store %arg8[%c0_79, %c1_80, %c0_81], %75 {strides = array<i32>} : memref<1x2x4xf32, #tpu.memory_space<vmem>>, vector<1x1x4xf32>,
    return
  }
  func.func @transform_0(%arg0: i32) -> (i32, i32, i32) {
    %c0_i32 = arith.constant 0 : i32
    %c0_i32_0 = arith.constant 0 : i32
    %c0_i32_1 = arith.constant 0 : i32
    return %arg0, %c0_i32, %c0_i32_0 : i32, i32, i32
  }
  func.func @transform_1(%arg0: i32) -> (i32, i32, i32) {
    %c0_i32 = arith.constant 0 : i32
    %c0_i32_0 = arith.constant 0 : i32
    %c0_i32_1 = arith.constant 0 : i32
    return %arg0, %c0_i32, %c0_i32_0 : i32, i32, i32
  }
  func.func @transform_2(%arg0: i32) -> (i32, i32, i32) {
    %c0_i32 = arith.constant 0 : i32
    %c0_i32_0 = arith.constant 0 : i32
    %c0_i32_1 = arith.constant 0 : i32
    return %arg0, %c0_i32, %c0_i32_0 : i32, i32, i32
  }
  func.func @transform_3(%arg0: i32) -> (i32, i32, i32) {
    %c0_i32 = arith.constant 0 : i32
    %c0_i32_0 = arith.constant 0 : i32
    %c0_i32_1 = arith.constant 0 : i32
    return %arg0, %c0_i32, %c0_i32_0 : i32, i32, i32
  }
  func.func @transform_4(%arg0: i32) -> (i32, i32, i32, i32) {
    %c0_i32 = arith.constant 0 : i32
    %c0_i32_0 = arith.constant 0 : i32
    %c0_i32_1 = arith.constant 0 : i32
    %c0_i32_2 = arith.constant 0 : i32
    %c0_i32_3 = arith.constant 0 : i32
    return %c0_i32, %c0_i32_0, %c0_i32_1, %c0_i32_2 : i32, i32, i32, i32
  }
  func.func @transform_5(%arg0: i32) -> (i32, i32) {
    %c0_i32 = arith.constant 0 : i32
    %c0_i32_0 = arith.constant 0 : i32
    %c0_i32_1 = arith.constant 0 : i32
    return %c0_i32, %c0_i32_0 : i32, i32
  }
  func.func @transform_6(%arg0: i32) -> (i32, i32, i32) {
    %c0_i32 = arith.constant 0 : i32
    %c0_i32_0 = arith.constant 0 : i32
    %c0_i32_1 = arith.constant 0 : i32
    return %arg0, %c0_i32, %c0_i32_0 : i32, i32, i32
  }
  func.func @transform_7(%arg0: i32) -> (i32, i32, i32) {
    %c0_i32 = arith.constant 0 : i32
    %c0_i32_0 = arith.constant 0 : i32
    %c0_i32_1 = arith.constant 0 : i32
    return %arg0, %c0_i32, %c0_i32_0 : i32, i32, i32
  }
}

module attributes {stable_mosaic.version = 11 : i64} {
  func.func @_bn_relu_add_relu_kernel(%arg0: i32, %arg1: memref<128x16xf32, #tpu.memory_space<vmem>>, %arg2: memref<1x16xf32, #tpu.memory_space<vmem>>, %arg3: memref<1x16xf32, #tpu.memory_space<vmem>>, %arg4: memref<128x16xf32, #tpu.memory_space<vmem>>, %arg5: memref<1x16xf32, #tpu.memory_space<vmem>>, %arg6: memref<1x16xf32, #tpu.memory_space<vmem>>, %arg7: memref<128x16xf32, #tpu.memory_space<vmem>>) attributes {dimension_semantics = [#tpu.dimension_semantics<parallel>], iteration_bounds = array<i64: 1>, scalar_prefetch = 0 : i64, scratch_operands = 0 : i64, tpu.core_type = #tpu.core_type<tc>, window_params = [{transform_indices = @transform_0, window_bounds = array<i64: 128, 16>}, {pipeline_mode = #tpu.pipeline_mode<synchronous>, transform_indices = @transform_1, window_bounds = array<i64: 1, 16>}, {pipeline_mode = #tpu.pipeline_mode<synchronous>, transform_indices = @transform_2, window_bounds = array<i64: 1, 16>}, {transform_indices = @transform_3, window_bounds = array<i64: 128, 16>}, {pipeline_mode = #tpu.pipeline_mode<synchronous>, transform_indices = @transform_4, window_bounds = array<i64: 1, 16>}, {pipeline_mode = #tpu.pipeline_mode<synchronous>, transform_indices = @transform_5, window_bounds = array<i64: 1, 16>}, {transform_indices = @transform_6, window_bounds = array<i64: 128, 16>}]} {
    %c0 = arith.constant 0 : index
    %c0_0 = arith.constant 0 : index
    %0 = vector.load %arg1[%c0, %c0_0] : memref<128x16xf32, #tpu.memory_space<vmem>>, vector<128x16xf32>
    %c0_1 = arith.constant 0 : index
    %c0_2 = arith.constant 0 : index
    %1 = vector.load %arg2[%c0_1, %c0_2] : memref<1x16xf32, #tpu.memory_space<vmem>>, vector<1x16xf32>
    %2 = vector.broadcast %1 : vector<1x16xf32> to vector<128x16xf32>
    %3 = arith.mulf %0, %2 : vector<128x16xf32>
    %c0_3 = arith.constant 0 : index
    %c0_4 = arith.constant 0 : index
    %4 = vector.load %arg3[%c0_3, %c0_4] : memref<1x16xf32, #tpu.memory_space<vmem>>, vector<1x16xf32>
    %5 = vector.broadcast %4 : vector<1x16xf32> to vector<128x16xf32>
    %6 = arith.addf %3, %5 : vector<128x16xf32>
    %cst = arith.constant 0.000000e+00 : f32
    %7 = vector.broadcast %cst : f32 to vector<128x16xf32>
    %8 = arith.maximumf %6, %7 : vector<128x16xf32>
    %c0_5 = arith.constant 0 : index
    %c0_6 = arith.constant 0 : index
    %9 = vector.load %arg4[%c0_5, %c0_6] : memref<128x16xf32, #tpu.memory_space<vmem>>, vector<128x16xf32>
    %c0_7 = arith.constant 0 : index
    %c0_8 = arith.constant 0 : index
    %10 = vector.load %arg5[%c0_7, %c0_8] : memref<1x16xf32, #tpu.memory_space<vmem>>, vector<1x16xf32>
    %11 = vector.broadcast %10 : vector<1x16xf32> to vector<128x16xf32>
    %12 = arith.mulf %9, %11 : vector<128x16xf32>
    %c0_9 = arith.constant 0 : index
    %c0_10 = arith.constant 0 : index
    %13 = vector.load %arg6[%c0_9, %c0_10] : memref<1x16xf32, #tpu.memory_space<vmem>>, vector<1x16xf32>
    %14 = vector.broadcast %13 : vector<1x16xf32> to vector<128x16xf32>
    %15 = arith.addf %12, %14 : vector<128x16xf32>
    %16 = arith.addf %8, %15 : vector<128x16xf32>
    %cst_11 = arith.constant 0.000000e+00 : f32
    %17 = vector.broadcast %cst_11 : f32 to vector<128x16xf32>
    %18 = arith.maximumf %16, %17 : vector<128x16xf32>
    %c0_12 = arith.constant 0 : index
    %c0_13 = arith.constant 0 : index
    %19 = vector.load %arg7[%c0_12, %c0_13] : memref<128x16xf32, #tpu.memory_space<vmem>>, vector<128x16xf32>
    tpu.vector_store %arg7[%c0_12, %c0_13], %18 {strides = array<i32>} : memref<128x16xf32, #tpu.memory_space<vmem>>, vector<128x16xf32>,
    return
  }
  func.func @transform_0(%arg0: i32) -> (i32, i32) {
    %c0_i32 = arith.constant 0 : i32
    %c0_i32_0 = arith.constant 0 : i32
    return %arg0, %c0_i32 : i32, i32
  }
  func.func @transform_1(%arg0: i32) -> (i32, i32) {
    %c0_i32 = arith.constant 0 : i32
    %c0_i32_0 = arith.constant 0 : i32
    %c0_i32_1 = arith.constant 0 : i32
    return %c0_i32, %c0_i32_0 : i32, i32
  }
  func.func @transform_2(%arg0: i32) -> (i32, i32) {
    %c0_i32 = arith.constant 0 : i32
    %c0_i32_0 = arith.constant 0 : i32
    %c0_i32_1 = arith.constant 0 : i32
    return %c0_i32, %c0_i32_0 : i32, i32
  }
  func.func @transform_3(%arg0: i32) -> (i32, i32) {
    %c0_i32 = arith.constant 0 : i32
    %c0_i32_0 = arith.constant 0 : i32
    return %arg0, %c0_i32 : i32, i32
  }
  func.func @transform_4(%arg0: i32) -> (i32, i32) {
    %c0_i32 = arith.constant 0 : i32
    %c0_i32_0 = arith.constant 0 : i32
    %c0_i32_1 = arith.constant 0 : i32
    return %c0_i32, %c0_i32_0 : i32, i32
  }
  func.func @transform_5(%arg0: i32) -> (i32, i32) {
    %c0_i32 = arith.constant 0 : i32
    %c0_i32_0 = arith.constant 0 : i32
    %c0_i32_1 = arith.constant 0 : i32
    return %c0_i32, %c0_i32_0 : i32, i32
  }
  func.func @transform_6(%arg0: i32) -> (i32, i32) {
    %c0_i32 = arith.constant 0 : i32
    %c0_i32_0 = arith.constant 0 : i32
    return %arg0, %c0_i32 : i32, i32
  }
}

module attributes {stable_mosaic.version = 11 : i64} {
  func.func @_mm_stats_kernel(%arg0: i32, %arg1: memref<128x4xbf16, #tpu.memory_space<vmem>>, %arg2: memref<4x16xbf16, #tpu.memory_space<vmem>>, %arg3: memref<128x16xf32, #tpu.memory_space<vmem>>, %arg4: memref<1x2x16xf32, #tpu.memory_space<vmem>>) attributes {dimension_semantics = [#tpu.dimension_semantics<parallel>], iteration_bounds = array<i64: 1>, scalar_prefetch = 0 : i64, scratch_operands = 0 : i64, tpu.core_type = #tpu.core_type<tc>, window_params = [{transform_indices = @transform_0, window_bounds = array<i64: 128, 4>}, {pipeline_mode = #tpu.pipeline_mode<synchronous>, transform_indices = @transform_1, window_bounds = array<i64: 4, 16>}, {transform_indices = @transform_2, window_bounds = array<i64: 128, 16>}, {transform_indices = @transform_3, window_bounds = array<i64: 1, 2, 16>}]} {
    %c0 = arith.constant 0 : index
    %c0_0 = arith.constant 0 : index
    %0 = vector.load %arg1[%c0, %c0_0] : memref<128x4xbf16, #tpu.memory_space<vmem>>, vector<128x4xbf16>
    %c0_1 = arith.constant 0 : index
    %c0_2 = arith.constant 0 : index
    %1 = vector.load %arg2[%c0_1, %c0_2] : memref<4x16xbf16, #tpu.memory_space<vmem>>, vector<4x16xbf16>
    %cst = arith.constant dense<0.000000e+00> : vector<128x16xf32>
    %2 = tpu.matmul %0, %1, %cst {dimension_numbers = #tpu.dot_dimension_numbers<[1], [0], [0], [1], [0, 0, 1, 1], [], []>} : vector<128x4xbf16>, vector<4x16xbf16>, vector<128x16xf32> -> vector<128x16xf32>
    %c0_3 = arith.constant 0 : index
    %c0_4 = arith.constant 0 : index
    %3 = vector.load %arg3[%c0_3, %c0_4] : memref<128x16xf32, #tpu.memory_space<vmem>>, vector<128x16xf32>
    tpu.vector_store %arg3[%c0_3, %c0_4], %2 {strides = array<i32>} : memref<128x16xf32, #tpu.memory_space<vmem>>, vector<128x16xf32>,
    %cst_5 = arith.constant dense<0.000000e+00> : vector<16xf32>
    %4 = vector.multi_reduction <add>, %2, %cst_5 [0] : vector<128x16xf32> to vector<16xf32>
    %5 = vector.shape_cast %4 : vector<16xf32> to vector<1x16xf32>
    %c0_6 = arith.constant 0 : index
    %c0_7 = arith.constant 0 : index
    %c0_8 = arith.constant 0 : index
    %6 = vector.load %arg4[%c0_6, %c0_7, %c0_8] : memref<1x2x16xf32, #tpu.memory_space<vmem>>, vector<1x1x16xf32>
    %7 = vector.shape_cast %6 : vector<1x1x16xf32> to vector<1x16xf32>
    %8 = vector.shape_cast %5 : vector<1x16xf32> to vector<1x1x16xf32>
    tpu.vector_store %arg4[%c0_6, %c0_7, %c0_8], %8 {strides = array<i32>} : memref<1x2x16xf32, #tpu.memory_space<vmem>>, vector<1x1x16xf32>,
    %9 = arith.mulf %2, %2 : vector<128x16xf32>
    %cst_9 = arith.constant dense<0.000000e+00> : vector<16xf32>
    %10 = vector.multi_reduction <add>, %9, %cst_9 [0] : vector<128x16xf32> to vector<16xf32>
    %11 = vector.shape_cast %10 : vector<16xf32> to vector<1x16xf32>
    %c0_10 = arith.constant 0 : index
    %c1 = arith.constant 1 : index
    %c0_11 = arith.constant 0 : index
    %12 = vector.load %arg4[%c0_10, %c1, %c0_11] : memref<1x2x16xf32, #tpu.memory_space<vmem>>, vector<1x1x16xf32>
    %13 = vector.shape_cast %12 : vector<1x1x16xf32> to vector<1x16xf32>
    %14 = vector.shape_cast %11 : vector<1x16xf32> to vector<1x1x16xf32>
    tpu.vector_store %arg4[%c0_10, %c1, %c0_11], %14 {strides = array<i32>} : memref<1x2x16xf32, #tpu.memory_space<vmem>>, vector<1x1x16xf32>,
    return
  }
  func.func @transform_0(%arg0: i32) -> (i32, i32) {
    %c0_i32 = arith.constant 0 : i32
    %c0_i32_0 = arith.constant 0 : i32
    return %arg0, %c0_i32 : i32, i32
  }
  func.func @transform_1(%arg0: i32) -> (i32, i32) {
    %c0_i32 = arith.constant 0 : i32
    %c0_i32_0 = arith.constant 0 : i32
    %c0_i32_1 = arith.constant 0 : i32
    return %c0_i32, %c0_i32_0 : i32, i32
  }
  func.func @transform_2(%arg0: i32) -> (i32, i32) {
    %c0_i32 = arith.constant 0 : i32
    %c0_i32_0 = arith.constant 0 : i32
    return %arg0, %c0_i32 : i32, i32
  }
  func.func @transform_3(%arg0: i32) -> (i32, i32, i32) {
    %c0_i32 = arith.constant 0 : i32
    %c0_i32_0 = arith.constant 0 : i32
    %c0_i32_1 = arith.constant 0 : i32
    return %arg0, %c0_i32, %c0_i32_0 : i32, i32, i32
  }
}

</mosaic_0001>

<llo_original>
// kernel: bottleneck_block.8
$region0: #{bottleneck_block.8}
  #allocation0 [shape = 'u32[]', space=smem, size = 0x4, offset = 0x4, fixed_abs, tag = 'smem constant byte address 0x4 - core index']
  #allocation1 [shape = 'u32[144,128]{1,0:T(1,128)}', space=vmem, size = 0x12000, scoped, tag = 'internal scratch']
  %s0 = inlined_call_operand.hbm [shape: f32[512,4], index: 0, kind: input, shape index: {}]
  %s1 = inlined_call_operand.hbm [shape: f32[1,4], index: 1, kind: input, shape index: {}]
  %s2 = inlined_call_operand.hbm [shape: f32[1,4], index: 2, kind: input, shape index: {}]
  %s3 = inlined_call_operand.hbm [shape: bf16[512,4], index: 3, kind: output, shape index: {}]
  %s4 = sld [smem:[#allocation0]]
  $region34: #{bottleneck_block.8} parent=0
    _
  %s6 = ssub.s32 1, %s4
  %s7 = scalar_select 0, %s6, %s4
  $region1: #{bottleneck_block.8} parent=0
    #allocation2 [shape = 'u8[262144]{0}', space=vmem, size = 0x40000, scoped, tag = 'input window, operand 0, single buffered']
    #allocation3 [shape = 's32[1]{0}', space=sflag, size = 0x4, scoped, tag = 'scoped memory for bottleneck_block.8']
    #allocation4 [shape = 's32[1]{0}', space=sflag, size = 0x4, scoped, tag = 'scoped memory for bottleneck_block.8']
    #allocation5 [shape = 'u8[512]{0}', space=vmem, size = 0x400, scoped, tag = 'input window, operand 1, single buffered']
    #allocation6 [shape = 's32[1]{0}', space=sflag, size = 0x4, scoped, tag = 'scoped memory for bottleneck_block.8']
    #allocation7 [shape = 'u8[512]{0}', space=vmem, size = 0x400, scoped, tag = 'input window, operand 2, single buffered']
    #allocation8 [shape = 'u8[131072]{0}', space=vmem, size = 0x20000, scoped, tag = 'output window, operand 0, single buffered']
    %8 = vsyncpa [#allocation3], 0
    %9 = vsyncpa [#allocation6], 0
    %10 = vsyncpa [#allocation4], 0
    // Predicated region
    $region2: #{bottleneck_block.8} parent=1 // pred_check
      _
    $region3: #{bottleneck_block.8} parent=1 // pred_check_branch
      %12 = sbr.rel (0) target = $region5
    $region4: #{bottleneck_block.8} parent=1 // pred_region
      %s14 = ssub.s32 8192, 8192
      %15 = vsyncadd [#allocation3], %s14
      %s16 = sshll.u32 [#allocation2], 4
      %s17 = int_to_ptr.vmem [resolvable:$true] %s16
      %22 = dma.hbm_to_vmem [thread:$0]  %s0, 8192, %s17, [#allocation3], 128, 128, 8
    $region5: #{bottleneck_block.8} parent=1 // pred_fallthru
      _
    // Predicated region
    $region6: #{bottleneck_block.8} parent=1 // pred_check
      _
    $region7: #{bottleneck_block.8} parent=1 // pred_check_branch
      %24 = sbr.rel (0) target = $region9
    $region8: #{bottleneck_block.8} parent=1 // pred_region
      %s26 = ssub.s32 16, 16
      %27 = vsyncadd [#allocation6], %s26
      %s29 = sshll.u32 [#allocation5], 4
      %s30 = int_to_ptr.vmem [resolvable:$true] %s29
      %32 = dma.hbm_to_vmem [thread:$0]  %s1, 16, %s30, [#allocation6]
    $region9: #{bottleneck_block.8} parent=1 // pred_fallthru
      _
    // Predicated region
    $region10: #{bottleneck_block.8} parent=1 // pred_check
      _
    $region11: #{bottleneck_block.8} parent=1 // pred_check_branch
      %34 = sbr.rel (0) target = $region13
    $region12: #{bottleneck_block.8} parent=1 // pred_region
      %s36 = ssub.s32 16, 16
      %37 = vsyncadd [#allocation6], %s36
      %s39 = sshll.u32 [#allocation7], 4
      %s40 = int_to_ptr.vmem [resolvable:$true] %s39
      %42 = dma.hbm_to_vmem [thread:$0]  %s2, 16, %s40, [#allocation6]
    $region13: #{bottleneck_block.8} parent=1 // pred_fallthru
      _
    // Predicated region
    $region14: #{bottleneck_block.8} parent=1 // pred_check
      _
    $region15: #{bottleneck_block.8} parent=1 // pred_check_branch
      %44 = sbr.rel (0) target = $region17
    $region16: #{bottleneck_block.8} parent=1 // pred_region
      %45 = dma.done [#allocation3], 8192
    $region17: #{bottleneck_block.8} parent=1 // pred_fallthru
      _
    // Predicated region
    $region18: #{bottleneck_block.8} parent=1 // pred_check
      _
    $region19: #{bottleneck_block.8} parent=1 // pred_check_branch
      %47 = sbr.rel (0) target = $region21
    $region20: #{bottleneck_block.8} parent=1 // pred_region
      %48 = dma.done [#allocation6], 16
    $region21: #{bottleneck_block.8} parent=1 // pred_fallthru
      _
    // Predicated region
    $region22: #{bottleneck_block.8} parent=1 // pred_check
      _
    $region23: #{bottleneck_block.8} parent=1 // pred_check_branch
      %50 = sbr.rel (0) target = $region25
    $region24: #{bottleneck_block.8} parent=1 // pred_region
      %51 = dma.done [#allocation6], 16
    $region25: #{bottleneck_block.8} parent=1 // pred_fallthru
      _
    %v52 = vld [vmem:[#allocation2] sm:$0xff]
    %v53 = vld [vmem:[#allocation2 + $0x8] sm:$0xff]
    %v54 = vld [vmem:[#allocation2 + $0x10] sm:$0xff]
    %v55 = vld [vmem:[#allocation2 + $0x18] sm:$0xff]
    %v56 = vld [vmem:[#allocation2 + $0x20] sm:$0xff]
    %v57 = vld [vmem:[#allocation2 + $0x28] sm:$0xff]
    %v58 = vld [vmem:[#allocation2 + $0x30] sm:$0xff]
    %v59 = vld [vmem:[#allocation2 + $0x38] sm:$0xff]
    %v60 = vld [vmem:[#allocation2 + $0x40] sm:$0xff]
    %v61 = vld [vmem:[#allocation2 + $0x48] sm:$0xff]
    %v62 = vld [vmem:[#allocation2 + $0x50] sm:$0xff]
    %v63 = vld [vmem:[#allocation2 + $0x58] sm:$0xff]
    %v64 = vld [vmem:[#allocation2 + $0x60] sm:$0xff]
    %v65 = vld [vmem:[#allocation2 + $0x68] sm:$0xff]
    %v66 = vld [vmem:[#allocation2 + $0x70] sm:$0xff]
    %v67 = vld [vmem:[#allocation2 + $0x78] sm:$0xff]
    %v68 = vld [vmem:[#allocation2 + $0x80] sm:$0xff]
    %v69 = vld [vmem:[#allocation2 + $0x88] sm:$0xff]
    %v70 = vld [vmem:[#allocation2 + $0x90] sm:$0xff]
    %v71 = vld [vmem:[#allocation2 + $0x98] sm:$0xff]
    %v72 = vld [vmem:[#allocation2 + $0xa0] sm:$0xff]
    %v73 = vld [vmem:[#allocation2 + $0xa8] sm:$0xff]
    %v74 = vld [vmem:[#allocation2 + $0xb0] sm:$0xff]
    %v75 = vld [vmem:[#allocation2 + $0xb8] sm:$0xff]
    %v76 = vld [vmem:[#allocation2 + $0xc0] sm:$0xff]
    %v77 = vld [vmem:[#allocation2 + $0xc8] sm:$0xff]
    %v78 = vld [vmem:[#allocation2 + $0xd0] sm:$0xff]
    %v79 = vld [vmem:[#allocation2 + $0xd8] sm:$0xff]
    %v80 = vld [vmem:[#allocation2 + $0xe0] sm:$0xff]
    %v81 = vld [vmem:[#allocation2 + $0xe8] sm:$0xff]
    %v82 = vld [vmem:[#allocation2 + $0xf0] sm:$0xff]
    %v83 = vld [vmem:[#allocation2 + $0xf8] sm:$0xff]
    %v84 = vld [vmem:[#allocation2 + $0x100] sm:$0xff]
    %v85 = vld [vmem:[#allocation2 + $0x108] sm:$0xff]
    %v86 = vld [vmem:[#allocation2 + $0x110] sm:$0xff]
    %v87 = vld [vmem:[#allocation2 + $0x118] sm:$0xff]
    %v88 = vld [vmem:[#allocation2 + $0x120] sm:$0xff]
    %v89 = vld [vmem:[#allocation2 + $0x128] sm:$0xff]
    %v90 = vld [vmem:[#allocation2 + $0x130] sm:$0xff]
    %v91 = vld [vmem:[#allocation2 + $0x138] sm:$0xff]
    %v92 = vld [vmem:[#allocation2 + $0x140] sm:$0xff]
    %v93 = vld [vmem:[#allocation2 + $0x148] sm:$0xff]
    %v94 = vld [vmem:[#allocation2 + $0x150] sm:$0xff]
    %v95 = vld [vmem:[#allocation2 + $0x158] sm:$0xff]
    %v96 = vld [vmem:[#allocation2 + $0x160] sm:$0xff]
    %v97 = vld [vmem:[#allocation2 + $0x168] sm:$0xff]
    %v98 = vld [vmem:[#allocation2 + $0x170] sm:$0xff]
    %v99 = vld [vmem:[#allocation2 + $0x178] sm:$0xff]
    %v100 = vld [vmem:[#allocation2 + $0x180] sm:$0xff]
    %v101 = vld [vmem:[#allocation2 + $0x188] sm:$0xff]
    %v102 = vld [vmem:[#allocation2 + $0x190] sm:$0xff]
    %v103 = vld [vmem:[#allocation2 + $0x198] sm:$0xff]
    %v104 = vld [vmem:[#allocation2 + $0x1a0] sm:$0xff]
    %v105 = vld [vmem:[#allocation2 + $0x1a8] sm:$0xff]
    %v106 = vld [vmem:[#allocation2 + $0x1b0] sm:$0xff]
    %v107 = vld [vmem:[#allocation2 + $0x1b8] sm:$0xff]
    %v108 = vld [vmem:[#allocation2 + $0x1c0] sm:$0xff]
    %v109 = vld [vmem:[#allocation2 + $0x1c8] sm:$0xff]
    %v110 = vld [vmem:[#allocation2 + $0x1d0] sm:$0xff]
    %v111 = vld [vmem:[#allocation2 + $0x1d8] sm:$0xff]
    %v112 = vld [vmem:[#allocation2 + $0x1e0] sm:$0xff]
    %v113 = vld [vmem:[#allocation2 + $0x1e8] sm:$0xff]
    %v114 = vld [vmem:[#allocation2 + $0x1f0] sm:$0xff]
    %v115 = vld [vmem:[#allocation2 + $0x1f8] sm:$0xff]
    %v116 = vld [vmem:[#allocation5] sm:$0x1]
    %v118 = vlaneseq
    %v119 = vshrl.u32 %v118, 7
    %v120 = vsub.s32 0, %v119
    %v121 = vrot.slane %v116, %v120
    %v123 = vmul.f32 %v52, %v121
    %v124 = vmul.f32 %v53, %v121
    %v125 = vmul.f32 %v54, %v121
    %v126 = vmul.f32 %v55, %v121
    %v127 = vmul.f32 %v56, %v121
    %v128 = vmul.f32 %v57, %v121
    %v129 = vmul.f32 %v58, %v121
    %v130 = vmul.f32 %v59, %v121
    %v131 = vmul.f32 %v60, %v121
    %v132 = vmul.f32 %v61, %v121
    %v133 = vmul.f32 %v62, %v121
    %v134 = vmul.f32 %v63, %v121
    %v135 = vmul.f32 %v64, %v121
    %v136 = vmul.f32 %v65, %v121
    %v137 = vmul.f32 %v66, %v121
    %v138 = vmul.f32 %v67, %v121
    %v139 = vmul.f32 %v68, %v121
    %v140 = vmul.f32 %v69, %v121
    %v141 = vmul.f32 %v70, %v121
    %v142 = vmul.f32 %v71, %v121
    %v143 = vmul.f32 %v72, %v121
    %v144 = vmul.f32 %v73, %v121
    %v145 = vmul.f32 %v74, %v121
    %v146 = vmul.f32 %v75, %v121
    %v147 = vmul.f32 %v76, %v121
    %v148 = vmul.f32 %v77, %v121
    %v149 = vmul.f32 %v78, %v121
    %v150 = vmul.f32 %v79, %v121
    %v151 = vmul.f32 %v80, %v121
    %v152 = vmul.f32 %v81, %v121
    %v153 = vmul.f32 %v82, %v121
    %v154 = vmul.f32 %v83, %v121
    %v155 = vmul.f32 %v84, %v121
    %v156 = vmul.f32 %v85, %v121
    %v157 = vmul.f32 %v86, %v121
    %v158 = vmul.f32 %v87, %v121
    %v159 = vmul.f32 %v88, %v121
    %v160 = vmul.f32 %v89, %v121
    %v161 = vmul.f32 %v90, %v121
    %v162 = vmul.f32 %v91, %v121
    %v163 = vmul.f32 %v92, %v121
    %v164 = vmul.f32 %v93, %v121
    %v165 = vmul.f32 %v94, %v121
    %v166 = vmul.f32 %v95, %v121
    %v167 = vmul.f32 %v96, %v121
    %v168 = vmul.f32 %v97, %v121
    %v169 = vmul.f32 %v98, %v121
    %v170 = vmul.f32 %v99, %v121
    %v171 = vmul.f32 %v100, %v121
    %v172 = vmul.f32 %v101, %v121
    %v173 = vmul.f32 %v102, %v121
    %v174 = vmul.f32 %v103, %v121
    %v175 = vmul.f32 %v104, %v121
    %v176 = vmul.f32 %v105, %v121
    %v177 = vmul.f32 %v106, %v121
    %v178 = vmul.f32 %v107, %v121
    %v179 = vmul.f32 %v108, %v121
    %v180 = vmul.f32 %v109, %v121
    %v181 = vmul.f32 %v110, %v121
    %v182 = vmul.f32 %v111, %v121
    %v183 = vmul.f32 %v112, %v121
    %v184 = vmul.f32 %v113, %v121
    %v185 = vmul.f32 %v114, %v121
    %v186 = vmul.f32 %v115, %v121
    %v187 = vld [vmem:[#allocation7] sm:$0x1]
    %v189 = vlaneseq
    %v190 = vshrl.u32 %v189, 7
    %v191 = vsub.s32 0, %v190
    %v192 = vrot.slane %v187, %v191
    %v194 = vadd.f32 %v123, %v192
    %v195 = vadd.f32 %v124, %v192
    %v196 = vadd.f32 %v125, %v192
    %v197 = vadd.f32 %v126, %v192
    %v198 = vadd.f32 %v127, %v192
    %v199 = vadd.f32 %v128, %v192
    %v200 = vadd.f32 %v129, %v192
    %v201 = vadd.f32 %v130, %v192
    %v202 = vadd.f32 %v131, %v192
    %v203 = vadd.f32 %v132, %v192
    %v204 = vadd.f32 %v133, %v192
    %v205 = vadd.f32 %v134, %v192
    %v206 = vadd.f32 %v135, %v192
    %v207 = vadd.f32 %v136, %v192
    %v208 = vadd.f32 %v137, %v192
    %v209 = vadd.f32 %v138, %v192
    %v210 = vadd.f32 %v139, %v192
    %v211 = vadd.f32 %v140, %v192
    %v212 = vadd.f32 %v141, %v192
    %v213 = vadd.f32 %v142, %v192
    %v214 = vadd.f32 %v143, %v192
    %v215 = vadd.f32 %v144, %v192
    %v216 = vadd.f32 %v145, %v192
    %v217 = vadd.f32 %v146, %v192
    %v218 = vadd.f32 %v147, %v192
    %v219 = vadd.f32 %v148, %v192
    %v220 = vadd.f32 %v149, %v192
    %v221 = vadd.f32 %v150, %v192
    %v222 = vadd.f32 %v151, %v192
    %v223 = vadd.f32 %v152, %v192
    %v224 = vadd.f32 %v153, %v192
    %v225 = vadd.f32 %v154, %v192
    %v226 = vadd.f32 %v155, %v192
    %v227 = vadd.f32 %v156, %v192
    %v228 = vadd.f32 %v157, %v192
    %v229 = vadd.f32 %v158, %v192
    %v230 = vadd.f32 %v159, %v192
    %v231 = vadd.f32 %v160, %v192
    %v232 = vadd.f32 %v161, %v192
    %v233 = vadd.f32 %v162, %v192
    %v234 = vadd.f32 %v163, %v192
    %v235 = vadd.f32 %v164, %v192
    %v236 = vadd.f32 %v165, %v192
    %v237 = vadd.f32 %v166, %v192
    %v238 = vadd.f32 %v167, %v192
    %v239 = vadd.f32 %v168, %v192
    %v240 = vadd.f32 %v169, %v192
    %v241 = vadd.f32 %v170, %v192
    %v242 = vadd.f32 %v171, %v192
    %v243 = vadd.f32 %v172, %v192
    %v244 = vadd.f32 %v173, %v192
    %v245 = vadd.f32 %v174, %v192
    %v246 = vadd.f32 %v175, %v192
    %v247 = vadd.f32 %v176, %v192
    %v248 = vadd.f32 %v177, %v192
    %v249 = vadd.f32 %v178, %v192
    %v250 = vadd.f32 %v179, %v192
    %v251 = vadd.f32 %v180, %v192
    %v252 = vadd.f32 %v181, %v192
    %v253 = vadd.f32 %v182, %v192
    %v254 = vadd.f32 %v183, %v192
    %v255 = vadd.f32 %v184, %v192
    %v256 = vadd.f32 %v185, %v192
    %v257 = vadd.f32 %v186, %v192
    %v258 = vmax.f32 %v194, 0.0
    %v259 = vmax.f32 %v195, 0.0
    %v260 = vmax.f32 %v196, 0.0
    %v261 = vmax.f32 %v197, 0.0
    %v262 = vmax.f32 %v198, 0.0
    %v263 = vmax.f32 %v199, 0.0
    %v264 = vmax.f32 %v200, 0.0
    %v265 = vmax.f32 %v201, 0.0
    %v266 = vmax.f32 %v202, 0.0
    %v267 = vmax.f32 %v203, 0.0
    %v268 = vmax.f32 %v204, 0.0
    %v269 = vmax.f32 %v205, 0.0
    %v270 = vmax.f32 %v206, 0.0
    %v271 = vmax.f32 %v207, 0.0
    %v272 = vmax.f32 %v208, 0.0
    %v273 = vmax.f32 %v209, 0.0
    %v274 = vmax.f32 %v210, 0.0
    %v275 = vmax.f32 %v211, 0.0
    %v276 = vmax.f32 %v212, 0.0
    %v277 = vmax.f32 %v213, 0.0
    %v278 = vmax.f32 %v214, 0.0
    %v279 = vmax.f32 %v215, 0.0
    %v280 = vmax.f32 %v216, 0.0
    %v281 = vmax.f32 %v217, 0.0
    %v282 = vmax.f32 %v218, 0.0
    %v283 = vmax.f32 %v219, 0.0
    %v284 = vmax.f32 %v220, 0.0
    %v285 = vmax.f32 %v221, 0.0
    %v286 = vmax.f32 %v222, 0.0
    %v287 = vmax.f32 %v223, 0.0
    %v288 = vmax.f32 %v224, 0.0
    %v289 = vmax.f32 %v225, 0.0
    %v290 = vmax.f32 %v226, 0.0
    %v291 = vmax.f32 %v227, 0.0
    %v292 = vmax.f32 %v228, 0.0
    %v293 = vmax.f32 %v229, 0.0
    %v294 = vmax.f32 %v230, 0.0
    %v295 = vmax.f32 %v231, 0.0
    %v296 = vmax.f32 %v232, 0.0
    %v297 = vmax.f32 %v233, 0.0
    %v298 = vmax.f32 %v234, 0.0
    %v299 = vmax.f32 %v235, 0.0
    %v300 = vmax.f32 %v236, 0.0
    %v301 = vmax.f32 %v237, 0.0
    %v302 = vmax.f32 %v238, 0.0
    %v303 = vmax.f32 %v239, 0.0
    %v304 = vmax.f32 %v240, 0.0
    %v305 = vmax.f32 %v241, 0.0
    %v306 = vmax.f32 %v242, 0.0
    %v307 = vmax.f32 %v243, 0.0
    %v308 = vmax.f32 %v244, 0.0
    %v309 = vmax.f32 %v245, 0.0
    %v310 = vmax.f32 %v246, 0.0
    %v311 = vmax.f32 %v247, 0.0
    %v312 = vmax.f32 %v248, 0.0
    %v313 = vmax.f32 %v249, 0.0
    %v314 = vmax.f32 %v250, 0.0
    %v315 = vmax.f32 %v251, 0.0
    %v316 = vmax.f32 %v252, 0.0
    %v317 = vmax.f32 %v253, 0.0
    %v318 = vmax.f32 %v254, 0.0
    %v319 = vmax.f32 %v255, 0.0
    %v320 = vmax.f32 %v256, 0.0
    %v321 = vmax.f32 %v257, 0.0
    %v322 = vpack.c.bf16 %v259, %v258
    %v323 = vpack.c.bf16 %v261, %v260
    %v324 = vpack.c.bf16 %v263, %v262
    %v325 = vpack.c.bf16 %v265, %v264
    %v326 = vpack.c.bf16 %v267, %v266
    %v327 = vpack.c.bf16 %v269, %v268
    %v328 = vpack.c.bf16 %v271, %v270
    %v329 = vpack.c.bf16 %v273, %v272
    %v330 = vpack.c.bf16 %v275, %v274
    %v331 = vpack.c.bf16 %v277, %v276
    %v332 = vpack.c.bf16 %v279, %v278
    %v333 = vpack.c.bf16 %v281, %v280
    %v334 = vpack.c.bf16 %v283, %v282
    %v335 = vpack.c.bf16 %v285, %v284
    %v336 = vpack.c.bf16 %v287, %v286
    %v337 = vpack.c.bf16 %v289, %v288
    %v338 = vpack.c.bf16 %v291, %v290
    %v339 = vpack.c.bf16 %v293, %v292
    %v340 = vpack.c.bf16 %v295, %v294
    %v341 = vpack.c.bf16 %v297, %v296
    %v342 = vpack.c.bf16 %v299, %v298
    %v343 = vpack.c.bf16 %v301, %v300
    %v344 = vpack.c.bf16 %v303, %v302
    %v345 = vpack.c.bf16 %v305, %v304
    %v346 = vpack.c.bf16 %v307, %v306
    %v347 = vpack.c.bf16 %v309, %v308
    %v348 = vpack.c.bf16 %v311, %v310
    %v349 = vpack.c.bf16 %v313, %v312
    %v350 = vpack.c.bf16 %v315, %v314
    %v351 = vpack.c.bf16 %v317, %v316
    %v352 = vpack.c.bf16 %v319, %v318
    %v353 = vpack.c.bf16 %v321, %v320
    %v386 = vunpack.c.l.b16 %v322
    %v387 = vunpack.c.h.b16 %v322
    %v388 = vunpack.c.l.b16 %v323
    %v389 = vunpack.c.h.b16 %v323
    %v390 = vunpack.c.l.b16 %v324
    %v391 = vunpack.c.h.b16 %v324
    %v392 = vunpack.c.l.b16 %v325
    %v393 = vunpack.c.h.b16 %v325
    %v394 = vunpack.c.l.b16 %v326
    %v395 = vunpack.c.h.b16 %v326
    %v396 = vunpack.c.l.b16 %v327
    %v397 = vunpack.c.h.b16 %v327
    %v398 = vunpack.c.l.b16 %v328
    %v399 = vunpack.c.h.b16 %v328
    %v400 = vunpack.c.l.b16 %v329
    %v401 = vunpack.c.h.b16 %v329
    %v402 = vunpack.c.l.b16 %v330
    %v403 = vunpack.c.h.b16 %v330
    %v404 = vunpack.c.l.b16 %v331
    %v405 = vunpack.c.h.b16 %v331
    %v406 = vunpack.c.l.b16 %v332
    %v407 = vunpack.c.h.b16 %v332
    %v408 = vunpack.c.l.b16 %v333
    %v409 = vunpack.c.h.b16 %v333
    %v410 = vunpack.c.l.b16 %v334
    %v411 = vunpack.c.h.b16 %v334
    %v412 = vunpack.c.l.b16 %v335
    %v413 = vunpack.c.h.b16 %v335
    %v414 = vunpack.c.l.b16 %v336
    %v415 = vunpack.c.h.b16 %v336
    %v416 = vunpack.c.l.b16 %v337
    %v417 = vunpack.c.h.b16 %v337
    %v418 = vunpack.c.l.b16 %v338
    %v419 = vunpack.c.h.b16 %v338
    %v420 = vunpack.c.l.b16 %v339
    %v421 = vunpack.c.h.b16 %v339
    %v422 = vunpack.c.l.b16 %v340
    %v423 = vunpack.c.h.b16 %v340
    %v424 = vunpack.c.l.b16 %v341
    %v425 = vunpack.c.h.b16 %v341
    %v426 = vunpack.c.l.b16 %v342
    %v427 = vunpack.c.h.b16 %v342
    %v428 = vunpack.c.l.b16 %v343
    %v429 = vunpack.c.h.b16 %v343
    %v430 = vunpack.c.l.b16 %v344
    %v431 = vunpack.c.h.b16 %v344
    %v432 = vunpack.c.l.b16 %v345
    %v433 = vunpack.c.h.b16 %v345
    %v434 = vunpack.c.l.b16 %v346
    %v435 = vunpack.c.h.b16 %v346
    %v436 = vunpack.c.l.b16 %v347
    %v437 = vunpack.c.h.b16 %v347
    %v438 = vunpack.c.l.b16 %v348
    %v439 = vunpack.c.h.b16 %v348
    %v440 = vunpack.c.l.b16 %v349
    %v441 = vunpack.c.h.b16 %v349
    %v442 = vunpack.c.l.b16 %v350
    %v443 = vunpack.c.h.b16 %v350
    %v444 = vunpack.c.l.b16 %v351
    %v445 = vunpack.c.h.b16 %v351
    %v446 = vunpack.c.l.b16 %v352
    %v447 = vunpack.c.h.b16 %v352
    %v448 = vunpack.c.l.b16 %v353
    %v449 = vunpack.c.h.b16 %v353
    %v450 = vpack.c.b16 %v386, %v386
    %v451 = vpack.c.b16 %v387, %v387
    %v452 = vpack.c.b16 %v388, %v388
    %v453 = vpack.c.b16 %v389, %v389
    %v454 = vpack.c.b16 %v390, %v390
    %v455 = vpack.c.b16 %v391, %v391
    %v456 = vpack.c.b16 %v392, %v392
    %v457 = vpack.c.b16 %v393, %v393
    %v458 = vpack.c.b16 %v394, %v394
    %v459 = vpack.c.b16 %v395, %v395
    %v460 = vpack.c.b16 %v396, %v396
    %v461 = vpack.c.b16 %v397, %v397
    %v462 = vpack.c.b16 %v398, %v398
    %v463 = vpack.c.b16 %v399, %v399
    %v464 = vpack.c.b16 %v400, %v400
    %v465 = vpack.c.b16 %v401, %v401
    %v466 = vpack.c.b16 %v402, %v402
    %v467 = vpack.c.b16 %v403, %v403
    %v468 = vpack.c.b16 %v404, %v404
    %v469 = vpack.c.b16 %v405, %v405
    %v470 = vpack.c.b16 %v406, %v406
    %v471 = vpack.c.b16 %v407, %v407
    %v472 = vpack.c.b16 %v408, %v408
    %v473 = vpack.c.b16 %v409, %v409
    %v474 = vpack.c.b16 %v410, %v410
    %v475 = vpack.c.b16 %v411, %v411
    %v476 = vpack.c.b16 %v412, %v412
    %v477 = vpack.c.b16 %v413, %v413
    %v478 = vpack.c.b16 %v414, %v414
    %v479 = vpack.c.b16 %v415, %v415
    %v480 = vpack.c.b16 %v416, %v416
    %v481 = vpack.c.b16 %v417, %v417
    %v482 = vpack.c.b16 %v418, %v418
    %v483 = vpack.c.b16 %v419, %v419
    %v484 = vpack.c.b16 %v420, %v420
    %v485 = vpack.c.b16 %v421, %v421
    %v486 = vpack.c.b16 %v422, %v422
    %v487 = vpack.c.b16 %v423, %v423
    %v488 = vpack.c.b16 %v424, %v424
    %v489 = vpack.c.b16 %v425, %v425
    %v490 = vpack.c.b16 %v426, %v426
    %v491 = vpack.c.b16 %v427, %v427
    %v492 = vpack.c.b16 %v428, %v428
    %v493 = vpack.c.b16 %v429, %v429
    %v494 = vpack.c.b16 %v430, %v430
    %v495 = vpack.c.b16 %v431, %v431
    %v496 = vpack.c.b16 %v432, %v432
    %v497 = vpack.c.b16 %v433, %v433
    %v498 = vpack.c.b16 %v434, %v434
    %v499 = vpack.c.b16 %v435, %v435
    %v500 = vpack.c.b16 %v436, %v436
    %v501 = vpack.c.b16 %v437, %v437
    %v502 = vpack.c.b16 %v438, %v438
    %v503 = vpack.c.b16 %v439, %v439
    %v504 = vpack.c.b16 %v440, %v440
    %v505 = vpack.c.b16 %v441, %v441
    %v506 = vpack.c.b16 %v442, %v442
    %v507 = vpack.c.b16 %v443, %v443
    %v508 = vpack.c.b16 %v444, %v444
    %v509 = vpack.c.b16 %v445, %v445
    %v510 = vpack.c.b16 %v446, %v446
    %v511 = vpack.c.b16 %v447, %v447
    %v512 = vpack.c.b16 %v448, %v448
    %v513 = vpack.c.b16 %v449, %v449
    %vm578 = vcmask 27648
    %579 = vst.msk [vmem:[#allocation8] sm:$0xf] %vm578, %v450
    %580 = vst.msk [vmem:[#allocation8 + $0x4] sm:$0xf] %vm578, %v451
    %581 = vst.msk [vmem:[#allocation8 + $0x8] sm:$0xf] %vm578, %v452
    %582 = vst.msk [vmem:[#allocation8 + $0xc] sm:$0xf] %vm578, %v453
    %583 = vst.msk [vmem:[#allocation8 + $0x10] sm:$0xf] %vm578, %v454
    %584 = vst.msk [vmem:[#allocation8 + $0x14] sm:$0xf] %vm578, %v455
    %585 = vst.msk [vmem:[#allocation8 + $0x18] sm:$0xf] %vm578, %v456
    %586 = vst.msk [vmem:[#allocation8 + $0x1c] sm:$0xf] %vm578, %v457
    %587 = vst.msk [vmem:[#allocation8 + $0x20] sm:$0xf] %vm578, %v458
    %588 = vst.msk [vmem:[#allocation8 + $0x24] sm:$0xf] %vm578, %v459
    %589 = vst.msk [vmem:[#allocation8 + $0x28] sm:$0xf] %vm578, %v460
    %590 = vst.msk [vmem:[#allocation8 + $0x2c] sm:$0xf] %vm578, %v461
    %591 = vst.msk [vmem:[#allocation8 + $0x30] sm:$0xf] %vm578, %v462
    %592 = vst.msk [vmem:[#allocation8 + $0x34] sm:$0xf] %vm578, %v463
    %593 = vst.msk [vmem:[#allocation8 + $0x38] sm:$0xf] %vm578, %v464
    %594 = vst.msk [vmem:[#allocation8 + $0x3c] sm:$0xf] %vm578, %v465
    %595 = vst.msk [vmem:[#allocation8 + $0x40] sm:$0xf] %vm578, %v466
    %596 = vst.msk [vmem:[#allocation8 + $0x44] sm:$0xf] %vm578, %v467
    %597 = vst.msk [vmem:[#allocation8 + $0x48] sm:$0xf] %vm578, %v468
    %598 = vst.msk [vmem:[#allocation8 + $0x4c] sm:$0xf] %vm578, %v469
    %599 = vst.msk [vmem:[#allocation8 + $0x50] sm:$0xf] %vm578, %v470
    %600 = vst.msk [vmem:[#allocation8 + $0x54] sm:$0xf] %vm578, %v471
    %601 = vst.msk [vmem:[#allocation8 + $0x58] sm:$0xf] %vm578, %v472
    %602 = vst.msk [vmem:[#allocation8 + $0x5c] sm:$0xf] %vm578, %v473
    %603 = vst.msk [vmem:[#allocation8 + $0x60] sm:$0xf] %vm578, %v474
    %604 = vst.msk [vmem:[#allocation8 + $0x64] sm:$0xf] %vm578, %v475
    %605 = vst.msk [vmem:[#allocation8 + $0x68] sm:$0xf] %vm578, %v476
    %606 = vst.msk [vmem:[#allocation8 + $0x6c] sm:$0xf] %vm578, %v477
    %607 = vst.msk [vmem:[#allocation8 + $0x70] sm:$0xf] %vm578, %v478
    %608 = vst.msk [vmem:[#allocation8 + $0x74] sm:$0xf] %vm578, %v479
    %609 = vst.msk [vmem:[#allocation8 + $0x78] sm:$0xf] %vm578, %v480
    %610 = vst.msk [vmem:[#allocation8 + $0x7c] sm:$0xf] %vm578, %v481
    %611 = vst.msk [vmem:[#allocation8 + $0x80] sm:$0xf] %vm578, %v482
    %612 = vst.msk [vmem:[#allocation8 + $0x84] sm:$0xf] %vm578, %v483
    %613 = vst.msk [vmem:[#allocation8 + $0x88] sm:$0xf] %vm578, %v484
    %614 = vst.msk [vmem:[#allocation8 + $0x8c] sm:$0xf] %vm578, %v485
    %615 = vst.msk [vmem:[#allocation8 + $0x90] sm:$0xf] %vm578, %v486
    %616 = vst.msk [vmem:[#allocation8 + $0x94] sm:$0xf] %vm578, %v487
    %617 = vst.msk [vmem:[#allocation8 + $0x98] sm:$0xf] %vm578, %v488
    %618 = vst.msk [vmem:[#allocation8 + $0x9c] sm:$0xf] %vm578, %v489
    %619 = vst.msk [vmem:[#allocation8 + $0xa0] sm:$0xf] %vm578, %v490
    %620 = vst.msk [vmem:[#allocation8 + $0xa4] sm:$0xf] %vm578, %v491
    %621 = vst.msk [vmem:[#allocation8 + $0xa8] sm:$0xf] %vm578, %v492
    %622 = vst.msk [vmem:[#allocation8 + $0xac] sm:$0xf] %vm578, %v493
    %623 = vst.msk [vmem:[#allocation8 + $0xb0] sm:$0xf] %vm578, %v494
    %624 = vst.msk [vmem:[#allocation8 + $0xb4] sm:$0xf] %vm578, %v495
    %625 = vst.msk [vmem:[#allocation8 + $0xb8] sm:$0xf] %vm578, %v496
    %626 = vst.msk [vmem:[#allocation8 + $0xbc] sm:$0xf] %vm578, %v497
    %627 = vst.msk [vmem:[#allocation8 + $0xc0] sm:$0xf] %vm578, %v498
    %628 = vst.msk [vmem:[#allocation8 + $0xc4] sm:$0xf] %vm578, %v499
    %629 = vst.msk [vmem:[#allocation8 + $0xc8] sm:$0xf] %vm578, %v500
    %630 = vst.msk [vmem:[#allocation8 + $0xcc] sm:$0xf] %vm578, %v501
    %631 = vst.msk [vmem:[#allocation8 + $0xd0] sm:$0xf] %vm578, %v502
    %632 = vst.msk [vmem:[#allocation8 + $0xd4] sm:$0xf] %vm578, %v503
    %633 = vst.msk [vmem:[#allocation8 + $0xd8] sm:$0xf] %vm578, %v504
    %634 = vst.msk [vmem:[#allocation8 + $0xdc] sm:$0xf] %vm578, %v505
    %635 = vst.msk [vmem:[#allocation8 + $0xe0] sm:$0xf] %vm578, %v506
    %636 = vst.msk [vmem:[#allocation8 + $0xe4] sm:$0xf] %vm578, %v507
    %637 = vst.msk [vmem:[#allocation8 + $0xe8] sm:$0xf] %vm578, %v508
    %638 = vst.msk [vmem:[#allocation8 + $0xec] sm:$0xf] %vm578, %v509
    %639 = vst.msk [vmem:[#allocation8 + $0xf0] sm:$0xf] %vm578, %v510
    %640 = vst.msk [vmem:[#allocation8 + $0xf4] sm:$0xf] %vm578, %v511
    %641 = vst.msk [vmem:[#allocation8 + $0xf8] sm:$0xf] %vm578, %v512
    %642 = vst.msk [vmem:[#allocation8 + $0xfc] sm:$0xf] %vm578, %v513
    // Predicated region
    $region26: #{bottleneck_block.8} parent=1 // pred_check
      _
    $region27: #{bottleneck_block.8} parent=1 // pred_check_branch
      %644 = sbr.rel (0) target = $region29
    $region28: #{bottleneck_block.8} parent=1 // pred_region
      %s646 = ssub.s32 4096, 4096
      %647 = vsyncadd [#allocation4], %s646
      %s648 = sshll.u32 [#allocation8], 4
      %s649 = int_to_ptr.vmem [resolvable:$true] %s648
      %654 = dma.vmem_to_hbm [thread:$0]  %s649, 4096, %s3, [#allocation4], 64, 64, 4
    $region29: #{bottleneck_block.8} parent=1 // pred_fallthru
      _
    // Predicated region
    $region30: #{bottleneck_block.8} parent=1 // pred_check
      _
    $region31: #{bottleneck_block.8} parent=1 // pred_check_branch
      %656 = sbr.rel (0) target = $region33
    $region32: #{bottleneck_block.8} parent=1 // pred_region
      %657 = dma.done [#allocation4], 4096
    $region33: #{bottleneck_block.8} parent=1 // pred_fallthru
      _
    %658 = vsyncpa [#allocation3], 1
    %659 = vsyncpa [#allocation6], 1
    %660 = vsyncpa [#allocation4], 1

// kernel: bottleneck_block.7
$region0: #{bottleneck_block.7}
  #allocation0 [shape = 'u32[]', space=smem, size = 0x4, offset = 0x4, fixed_abs, tag = 'smem constant byte address 0x4 - core index']
  #allocation1 [shape = 'u32[144,128]{1,0:T(1,128)}', space=vmem, size = 0x12000, scoped, tag = 'internal scratch']
  %s0 = inlined_call_operand.hbm [shape: bf16[512,4], index: 0, kind: input, shape index: {}]
  %s1 = inlined_call_operand.hbm [shape: bf16[4,4], index: 1, kind: input, shape index: {}]
  %s2 = inlined_call_operand.hbm [shape: f32[512,4], index: 2, kind: output, shape index: {0}]
  %s3 = inlined_call_operand.hbm [shape: f32[1,2,4], index: 3, kind: output, shape index: {1}]
  %4 = xla_tuple %s2, %s3
  %s5 = sld [smem:[#allocation0]]
  $region34: #{bottleneck_block.7} parent=0
    _
  %s7 = ssub.s32 1, %s5
  %s8 = scalar_select 0, %s7, %s5
  $region1: #{bottleneck_block.7} parent=0
    #allocation2 [shape = 'u8[131072]{0}', space=vmem, size = 0x20000, scoped, tag = 'input window, operand 0, single buffered']
    #allocation3 [shape = 's32[1]{0}', space=sflag, size = 0x4, scoped, tag = 'scoped memory for bottleneck_block.7']
    #allocation4 [shape = 's32[1]{0}', space=sflag, size = 0x4, scoped, tag = 'scoped memory for bottleneck_block.7']
    #allocation5 [shape = 'u8[1024]{0}', space=vmem, size = 0x400, scoped, tag = 'input window, operand 1, single buffered']
    #allocation6 [shape = 's32[1]{0}', space=sflag, size = 0x4, scoped, tag = 'scoped memory for bottleneck_block.7']
    #allocation7 [shape = 'u8[262144]{0}', space=vmem, size = 0x40000, scoped, tag = 'output window, operand 0, single buffered']
    #allocation8 [shape = 'u8[1024]{0}', space=vmem, size = 0x400, scoped, tag = 'output window, operand 1, single buffered']
    #allocation9 [shape = 's32[1]{0}', space=sflag, size = 0x4, scoped, tag = 'scoped memory for bottleneck_block.7']
    %9 = vsyncpa [#allocation3], 0
    %10 = vsyncpa [#allocation6], 0
    %11 = vsyncpa [#allocation4], 0
    %12 = vsyncpa [#allocation9], 0
    // Predicated region
    $region2: #{bottleneck_block.7} parent=1 // pred_check
      _
    $region3: #{bottleneck_block.7} parent=1 // pred_check_branch
      %14 = sbr.rel (0) target = $region5
    $region4: #{bottleneck_block.7} parent=1 // pred_region
      %s16 = ssub.s32 4096, 4096
      %17 = vsyncadd [#allocation3], %s16
      %s18 = sshll.u32 [#allocation2], 4
      %s19 = int_to_ptr.vmem [resolvable:$true] %s18
      %24 = dma.hbm_to_vmem [thread:$0]  %s0, 4096, %s19, [#allocation3], 64, 64, 4
    $region5: #{bottleneck_block.7} parent=1 // pred_fallthru
      _
    // Predicated region
    $region6: #{bottleneck_block.7} parent=1 // pred_check
      _
    $region7: #{bottleneck_block.7} parent=1 // pred_check_branch
      %26 = sbr.rel (0) target = $region9
    $region8: #{bottleneck_block.7} parent=1 // pred_region
      %s28 = ssub.s32 32, 32
      %29 = vsyncadd [#allocation6], %s28
      %s31 = sshll.u32 [#allocation5], 4
      %s32 = int_to_ptr.vmem [resolvable:$true] %s31
      %34 = dma.hbm_to_vmem [thread:$0]  %s1, 32, %s32, [#allocation6]
    $region9: #{bottleneck_block.7} parent=1 // pred_fallthru
      _
    // Predicated region
    $region10: #{bottleneck_block.7} parent=1 // pred_check
      _
    $region11: #{bottleneck_block.7} parent=1 // pred_check_branch
      %36 = sbr.rel (0) target = $region13
    $region12: #{bottleneck_block.7} parent=1 // pred_region
      %37 = dma.done [#allocation3], 4096
    $region13: #{bottleneck_block.7} parent=1 // pred_fallthru
      _
    // Predicated region
    $region14: #{bottleneck_block.7} parent=1 // pred_check
      _
    $region15: #{bottleneck_block.7} parent=1 // pred_check_branch
      %39 = sbr.rel (0) target = $region17
    $region16: #{bottleneck_block.7} parent=1 // pred_region
      %40 = dma.done [#allocation6], 32
    $region17: #{bottleneck_block.7} parent=1 // pred_fallthru
      _
    %v42 = vld [vmem:[#allocation2] sm:$0xf]
    %v43 = vld [vmem:[#allocation2 + $0x4] sm:$0xf]
    %v44 = vld [vmem:[#allocation2 + $0x8] sm:$0xf]
    %v45 = vld [vmem:[#allocation2 + $0xc] sm:$0xf]
    %v46 = vld [vmem:[#allocation2 + $0x10] sm:$0xf]
    %v47 = vld [vmem:[#allocation2 + $0x14] sm:$0xf]
    %v48 = vld [vmem:[#allocation2 + $0x18] sm:$0xf]
    %v49 = vld [vmem:[#allocation2 + $0x1c] sm:$0xf]
    %v50 = vld [vmem:[#allocation2 + $0x20] sm:$0xf]
    %v51 = vld [vmem:[#allocation2 + $0x24] sm:$0xf]
    %v52 = vld [vmem:[#allocation2 + $0x28] sm:$0xf]
    %v53 = vld [vmem:[#allocation2 + $0x2c] sm:$0xf]
    %v54 = vld [vmem:[#allocation2 + $0x30] sm:$0xf]
    %v55 = vld [vmem:[#allocation2 + $0x34] sm:$0xf]
    %v56 = vld [vmem:[#allocation2 + $0x38] sm:$0xf]
    %v57 = vld [vmem:[#allocation2 + $0x3c] sm:$0xf]
    %v58 = vld [vmem:[#allocation2 + $0x40] sm:$0xf]
    %v59 = vld [vmem:[#allocation2 + $0x44] sm:$0xf]
    %v60 = vld [vmem:[#allocation2 + $0x48] sm:$0xf]
    %v61 = vld [vmem:[#allocation2 + $0x4c] sm:$0xf]
    %v62 = vld [vmem:[#allocation2 + $0x50] sm:$0xf]
    %v63 = vld [vmem:[#allocation2 + $0x54] sm:$0xf]
    %v64 = vld [vmem:[#allocation2 + $0x58] sm:$0xf]
    %v65 = vld [vmem:[#allocation2 + $0x5c] sm:$0xf]
    %v66 = vld [vmem:[#allocation2 + $0x60] sm:$0xf]
    %v67 = vld [vmem:[#allocation2 + $0x64] sm:$0xf]
    %v68 = vld [vmem:[#allocation2 + $0x68] sm:$0xf]
    %v69 = vld [vmem:[#allocation2 + $0x6c] sm:$0xf]
    %v70 = vld [vmem:[#allocation2 + $0x70] sm:$0xf]
    %v71 = vld [vmem:[#allocation2 + $0x74] sm:$0xf]
    %v72 = vld [vmem:[#allocation2 + $0x78] sm:$0xf]
    %v73 = vld [vmem:[#allocation2 + $0x7c] sm:$0xf]
    %v74 = vld [vmem:[#allocation2 + $0x80] sm:$0xf]
    %v75 = vld [vmem:[#allocation2 + $0x84] sm:$0xf]
    %v76 = vld [vmem:[#allocation2 + $0x88] sm:$0xf]
    %v77 = vld [vmem:[#allocation2 + $0x8c] sm:$0xf]
    %v78 = vld [vmem:[#allocation2 + $0x90] sm:$0xf]
    %v79 = vld [vmem:[#allocation2 + $0x94] sm:$0xf]
    %v80 = vld [vmem:[#allocation2 + $0x98] sm:$0xf]
    %v81 = vld [vmem:[#allocation2 + $0x9c] sm:$0xf]
    %v82 = vld [vmem:[#allocation2 + $0xa0] sm:$0xf]
    %v83 = vld [vmem:[#allocation2 + $0xa4] sm:$0xf]
    %v84 = vld [vmem:[#allocation2 + $0xa8] sm:$0xf]
    %v85 = vld [vmem:[#allocation2 + $0xac] sm:$0xf]
    %v86 = vld [vmem:[#allocation2 + $0xb0] sm:$0xf]
    %v87 = vld [vmem:[#allocation2 + $0xb4] sm:$0xf]
    %v88 = vld [vmem:[#allocation2 + $0xb8] sm:$0xf]
    %v89 = vld [vmem:[#allocation2 + $0xbc] sm:$0xf]
    %v90 = vld [vmem:[#allocation2 + $0xc0] sm:$0xf]
    %v91 = vld [vmem:[#allocation2 + $0xc4] sm:$0xf]
    %v92 = vld [vmem:[#allocation2 + $0xc8] sm:$0xf]
    %v93 = vld [vmem:[#allocation2 + $0xcc] sm:$0xf]
    %v94 = vld [vmem:[#allocation2 + $0xd0] sm:$0xf]
    %v95 = vld [vmem:[#allocation2 + $0xd4] sm:$0xf]
    %v96 = vld [vmem:[#allocation2 + $0xd8] sm:$0xf]
    %v97 = vld [vmem:[#allocation2 + $0xdc] sm:$0xf]
    %v98 = vld [vmem:[#allocation2 + $0xe0] sm:$0xf]
    %v99 = vld [vmem:[#allocation2 + $0xe4] sm:$0xf]
    %v100 = vld [vmem:[#allocation2 + $0xe8] sm:$0xf]
    %v101 = vld [vmem:[#allocation2 + $0xec] sm:$0xf]
    %v102 = vld [vmem:[#allocation2 + $0xf0] sm:$0xf]
    %v103 = vld [vmem:[#allocation2 + $0xf4] sm:$0xf]
    %v104 = vld [vmem:[#allocation2 + $0xf8] sm:$0xf]
    %v105 = vld [vmem:[#allocation2 + $0xfc] sm:$0xf]
    %v106 = vld [vmem:[#allocation5] sm:$0x3]
    %v171 = vunpack.c.l.b16 %v42
    %v172 = vunpack.c.l.b16 %v43
    %v173 = vunpack.c.l.b16 %v44
    %v174 = vunpack.c.l.b16 %v45
    %v175 = vunpack.c.l.b16 %v46
    %v176 = vunpack.c.l.b16 %v47
    %v177 = vunpack.c.l.b16 %v48
    %v178 = vunpack.c.l.b16 %v49
    %v179 = vunpack.c.l.b16 %v50
    %v180 = vunpack.c.l.b16 %v51
    %v181 = vunpack.c.l.b16 %v52
    %v182 = vunpack.c.l.b16 %v53
    %v183 = vunpack.c.l.b16 %v54
    %v184 = vunpack.c.l.b16 %v55
    %v185 = vunpack.c.l.b16 %v56
    %v186 = vunpack.c.l.b16 %v57
    %v187 = vunpack.c.l.b16 %v58
    %v188 = vunpack.c.l.b16 %v59
    %v189 = vunpack.c.l.b16 %v60
    %v190 = vunpack.c.l.b16 %v61
    %v191 = vunpack.c.l.b16 %v62
    %v192 = vunpack.c.l.b16 %v63
    %v193 = vunpack.c.l.b16 %v64
    %v194 = vunpack.c.l.b16 %v65
    %v195 = vunpack.c.l.b16 %v66
    %v196 = vunpack.c.l.b16 %v67
    %v197 = vunpack.c.l.b16 %v68
    %v198 = vunpack.c.l.b16 %v69
    %v199 = vunpack.c.l.b16 %v70
    %v200 = vunpack.c.l.b16 %v71
    %v201 = vunpack.c.l.b16 %v72
    %v202 = vunpack.c.l.b16 %v73
    %v203 = vunpack.c.l.b16 %v74
    %v204 = vunpack.c.l.b16 %v75
    %v205 = vunpack.c.l.b16 %v76
    %v206 = vunpack.c.l.b16 %v77
    %v207 = vunpack.c.l.b16 %v78
    %v208 = vunpack.c.l.b16 %v79
    %v209 = vunpack.c.l.b16 %v80
    %v210 = vunpack.c.l.b16 %v81
    %v211 = vunpack.c.l.b16 %v82
    %v212 = vunpack.c.l.b16 %v83
    %v213 = vunpack.c.l.b16 %v84
    %v214 = vunpack.c.l.b16 %v85
    %v215 = vunpack.c.l.b16 %v86
    %v216 = vunpack.c.l.b16 %v87
    %v217 = vunpack.c.l.b16 %v88
    %v218 = vunpack.c.l.b16 %v89
    %v219 = vunpack.c.l.b16 %v90
    %v220 = vunpack.c.l.b16 %v91
    %v221 = vunpack.c.l.b16 %v92
    %v222 = vunpack.c.l.b16 %v93
    %v223 = vunpack.c.l.b16 %v94
    %v224 = vunpack.c.l.b16 %v95
    %v225 = vunpack.c.l.b16 %v96
    %v226 = vunpack.c.l.b16 %v97
    %v227 = vunpack.c.l.b16 %v98
    %v228 = vunpack.c.l.b16 %v99
    %v229 = vunpack.c.l.b16 %v100
    %v230 = vunpack.c.l.b16 %v101
    %v231 = vunpack.c.l.b16 %v102
    %v232 = vunpack.c.l.b16 %v103
    %v233 = vunpack.c.l.b16 %v104
    %v234 = vunpack.c.l.b16 %v105
    %v235 = vpack.c.b16 %v172, %v171
    %v236 = vpack.c.b16 %v174, %v173
    %v237 = vpack.c.b16 %v176, %v175
    %v238 = vpack.c.b16 %v178, %v177
    %v239 = vpack.c.b16 %v180, %v179
    %v240 = vpack.c.b16 %v182, %v181
    %v241 = vpack.c.b16 %v184, %v183
    %v242 = vpack.c.b16 %v186, %v185
    %v243 = vpack.c.b16 %v188, %v187
    %v244 = vpack.c.b16 %v190, %v189
    %v245 = vpack.c.b16 %v192, %v191
    %v246 = vpack.c.b16 %v194, %v193
    %v247 = vpack.c.b16 %v196, %v195
    %v248 = vpack.c.b16 %v198, %v197
    %v249 = vpack.c.b16 %v200, %v199
    %v250 = vpack.c.b16 %v202, %v201
    %v251 = vpack.c.b16 %v204, %v203
    %v252 = vpack.c.b16 %v206, %v205
    %v253 = vpack.c.b16 %v208, %v207
    %v254 = vpack.c.b16 %v210, %v209
    %v255 = vpack.c.b16 %v212, %v211
    %v256 = vpack.c.b16 %v214, %v213
    %v257 = vpack.c.b16 %v216, %v215
    %v258 = vpack.c.b16 %v218, %v217
    %v259 = vpack.c.b16 %v220, %v219
    %v260 = vpack.c.b16 %v222, %v221
    %v261 = vpack.c.b16 %v224, %v223
    %v262 = vpack.c.b16 %v226, %v225
    %v263 = vpack.c.b16 %v228, %v227
    %v264 = vpack.c.b16 %v230, %v229
    %v265 = vpack.c.b16 %v232, %v231
    %v266 = vpack.c.b16 %v234, %v233
    %vm267 = vcmask 31744
    %v269 = vsel %vm267, %v235, 0
    %v272 = vsel %vm267, %v236, 0
    %v275 = vsel %vm267, %v237, 0
    %v278 = vsel %vm267, %v238, 0
    %v281 = vsel %vm267, %v239, 0
    %v284 = vsel %vm267, %v240, 0
    %v287 = vsel %vm267, %v241, 0
    %v290 = vsel %vm267, %v242, 0
    %v293 = vsel %vm267, %v243, 0
    %v296 = vsel %vm267, %v244, 0
    %v299 = vsel %vm267, %v245, 0
    %v302 = vsel %vm267, %v246, 0
    %v305 = vsel %vm267, %v247, 0
    %v308 = vsel %vm267, %v248, 0
    %v311 = vsel %vm267, %v249, 0
    %v314 = vsel %vm267, %v250, 0
    %v317 = vsel %vm267, %v251, 0
    %v320 = vsel %vm267, %v252, 0
    %v323 = vsel %vm267, %v253, 0
    %v326 = vsel %vm267, %v254, 0
    %v329 = vsel %vm267, %v255, 0
    %v332 = vsel %vm267, %v256, 0
    %v335 = vsel %vm267, %v257, 0
    %v338 = vsel %vm267, %v258, 0
    %v341 = vsel %vm267, %v259, 0
    %v344 = vsel %vm267, %v260, 0
    %v347 = vsel %vm267, %v261, 0
    %v350 = vsel %vm267, %v262, 0
    %v353 = vsel %vm267, %v263, 0
    %v356 = vsel %vm267, %v264, 0
    %v359 = vsel %vm267, %v265, 0
    %v362 = vsel %vm267, %v266, 0
    %vm364 = vcmask 1041408
    %v366 = vsel %vm364, %v106, 0
    %368 = vmatprep.subr.bf16.mxu0 0
    %369 = vmatpush1.bf16.msra.mxu0 %v366
    %370 = vmatprep.subr.bf16.mxu0 0
    %371 = vmatpush1.bf16.msra.mxu0 0
    %372 = vmatprep.subr.bf16.mxu0 0
    %373 = vmatpush1.bf16.msra.mxu0 0
    %374 = vmatprep.subr.bf16.mxu0 0
    %375 = vmatpush1.bf16.msra.mxu0 0
    %376 = vmatprep.subr.bf16.mxu0 0
    %377 = vmatpush1.bf16.msra.mxu0 0
    %378 = vmatprep.subr.bf16.mxu0 0
    %379 = vmatpush1.bf16.msra.mxu0 0
    %380 = vmatprep.subr.bf16.mxu0 0
    %381 = vmatpush1.bf16.msra.mxu0 0
    %382 = vmatprep.subr.bf16.mxu0 0
    %383 = vmatpush1.bf16.msra.mxu0 0
    %384 = vmatprep.subr.bf16.mxu0 0
    %385 = vmatpush1.bf16.msra.mxu0 0
    %386 = vmatprep.subr.bf16.mxu0 0
    %387 = vmatpush1.bf16.msra.mxu0 0
    %388 = vmatprep.subr.bf16.mxu0 0
    %389 = vmatpush1.bf16.msra.mxu0 0
    %390 = vmatprep.subr.bf16.mxu0 0
    %391 = vmatpush1.bf16.msra.mxu0 0
    %392 = vmatprep.subr.bf16.mxu0 0
    %393 = vmatpush1.bf16.msra.mxu0 0
    %394 = vmatprep.subr.bf16.mxu0 0
    %395 = vmatpush1.bf16.msra.mxu0 0
    %396 = vmatprep.subr.bf16.mxu0 0
    %397 = vmatpush1.bf16.msra.mxu0 0
    %398 = vmatprep.subr.bf16.mxu0 0
    %399 = vmatpush1.bf16.msra.mxu0 0
    %400 = vmatprep.mubr.bf16.mxu0 0
    %401 = vmatmul.mubr.bf16.gmra.mrb[0].mxu0 %v269
    %v402 = vpop.f32.mrb[0].mxu0
    %v403 = vadd.f32 0.0, %v402
    %v404 = vpop.f32.mrb[0].mxu0
    %v405 = vpop.f32.mrb[0].mxu0
    %v406 = vadd.f32 0.0, %v405
    %v407 = vpop.f32.mrb[0].mxu0
    %408 = vmatprep.mubr.bf16.mxu0 0
    %409 = vmatmul.mubr.bf16.gmra.mrb[0].mxu0 %v272
    %v410 = vpop.f32.mrb[0].mxu0
    %v411 = vadd.f32 0.0, %v410
    %v412 = vpop.f32.mrb[0].mxu0
    %v413 = vpop.f32.mrb[0].mxu0
    %v414 = vadd.f32 0.0, %v413
    %v415 = vpop.f32.mrb[0].mxu0
    %416 = vmatprep.mubr.bf16.mxu0 0
    %417 = vmatmul.mubr.bf16.gmra.mrb[0].mxu0 %v275
    %v418 = vpop.f32.mrb[0].mxu0
    %v419 = vadd.f32 0.0, %v418
    %v420 = vpop.f32.mrb[0].mxu0
    %v421 = vpop.f32.mrb[0].mxu0
    %v422 = vadd.f32 0.0, %v421
    %v423 = vpop.f32.mrb[0].mxu0
    %424 = vmatprep.mubr.bf16.mxu0 0
    %425 = vmatmul.mubr.bf16.gmra.mrb[0].mxu0 %v278
    %v426 = vpop.f32.mrb[0].mxu0
    %v427 = vadd.f32 0.0, %v426
    %v428 = vpop.f32.mrb[0].mxu0
    %v429 = vpop.f32.mrb[0].mxu0
    %v430 = vadd.f32 0.0, %v429
    %v431 = vpop.f32.mrb[0].mxu0
    %432 = vmatprep.mubr.bf16.mxu0 0
    %433 = vmatmul.mubr.bf16.gmra.mrb[0].mxu0 %v281
    %v434 = vpop.f32.mrb[0].mxu0
    %v435 = vadd.f32 0.0, %v434
    %v436 = vpop.f32.mrb[0].mxu0
    %v437 = vpop.f32.mrb[0].mxu0
    %v438 = vadd.f32 0.0, %v437
    %v439 = vpop.f32.mrb[0].mxu0
    %440 = vmatprep.mubr.bf16.mxu0 0
    %441 = vmatmul.mubr.bf16.gmra.mrb[0].mxu0 %v284
    %v442 = vpop.f32.mrb[0].mxu0
    %v443 = vadd.f32 0.0, %v442
    %v444 = vpop.f32.mrb[0].mxu0
    %v445 = vpop.f32.mrb[0].mxu0
    %v446 = vadd.f32 0.0, %v445
    %v447 = vpop.f32.mrb[0].mxu0
    %448 = vmatprep.mubr.bf16.mxu0 0
    %449 = vmatmul.mubr.bf16.gmra.mrb[0].mxu0 %v287
    %v450 = vpop.f32.mrb[0].mxu0
    %v451 = vadd.f32 0.0, %v450
    %v452 = vpop.f32.mrb[0].mxu0
    %v453 = vpop.f32.mrb[0].mxu0
    %v454 = vadd.f32 0.0, %v453
    %v455 = vpop.f32.mrb[0].mxu0
    %456 = vmatprep.mubr.bf16.mxu0 0
    %457 = vmatmul.mubr.bf16.gmra.mrb[0].mxu0 %v290
    %v458 = vpop.f32.mrb[0].mxu0
    %v459 = vadd.f32 0.0, %v458
    %v460 = vpop.f32.mrb[0].mxu0
    %v461 = vpop.f32.mrb[0].mxu0
    %v462 = vadd.f32 0.0, %v461
    %v463 = vpop.f32.mrb[0].mxu0
    %464 = vmatprep.mubr.bf16.mxu0 0
    %465 = vmatmul.mubr.bf16.gmra.mrb[0].mxu0 %v293
    %v466 = vpop.f32.mrb[0].mxu0
    %v467 = vadd.f32 0.0, %v466
    %v468 = vpop.f32.mrb[0].mxu0
    %v469 = vpop.f32.mrb[0].mxu0
    %v470 = vadd.f32 0.0, %v469
    %v471 = vpop.f32.mrb[0].mxu0
    %472 = vmatprep.mubr.bf16.mxu0 0
    %473 = vmatmul.mubr.bf16.gmra.mrb[0].mxu0 %v296
    %v474 = vpop.f32.mrb[0].mxu0
    %v475 = vadd.f32 0.0, %v474
    %v476 = vpop.f32.mrb[0].mxu0
    %v477 = vpop.f32.mrb[0].mxu0
    %v478 = vadd.f32 0.0, %v477
    %v479 = vpop.f32.mrb[0].mxu0
    %480 = vmatprep.mubr.bf16.mxu0 0
    %481 = vmatmul.mubr.bf16.gmra.mrb[0].mxu0 %v299
    %v482 = vpop.f32.mrb[0].mxu0
    %v483 = vadd.f32 0.0, %v482
    %v484 = vpop.f32.mrb[0].mxu0
    %v485 = vpop.f32.mrb[0].mxu0
    %v486 = vadd.f32 0.0, %v485
    %v487 = vpop.f32.mrb[0].mxu0
    %488 = vmatprep.mubr.bf16.mxu0 0
    %489 = vmatmul.mubr.bf16.gmra.mrb[0].mxu0 %v302
    %v490 = vpop.f32.mrb[0].mxu0
    %v491 = vadd.f32 0.0, %v490
    %v492 = vpop.f32.mrb[0].mxu0
    %v493 = vpop.f32.mrb[0].mxu0
    %v494 = vadd.f32 0.0, %v493
    %v495 = vpop.f32.mrb[0].mxu0
    %496 = vmatprep.mubr.bf16.mxu0 0
    %497 = vmatmul.mubr.bf16.gmra.mrb[0].mxu0 %v305
    %v498 = vpop.f32.mrb[0].mxu0
    %v499 = vadd.f32 0.0, %v498
    %v500 = vpop.f32.mrb[0].mxu0
    %v501 = vpop.f32.mrb[0].mxu0
    %v502 = vadd.f32 0.0, %v501
    %v503 = vpop.f32.mrb[0].mxu0
    %504 = vmatprep.mubr.bf16.mxu0 0
    %505 = vmatmul.mubr.bf16.gmra.mrb[0].mxu0 %v308
    %v506 = vpop.f32.mrb[0].mxu0
    %v507 = vadd.f32 0.0, %v506
    %v508 = vpop.f32.mrb[0].mxu0
    %v509 = vpop.f32.mrb[0].mxu0
    %v510 = vadd.f32 0.0, %v509
    %v511 = vpop.f32.mrb[0].mxu0
    %512 = vmatprep.mubr.bf16.mxu0 0
    %513 = vmatmul.mubr.bf16.gmra.mrb[0].mxu0 %v311
    %v514 = vpop.f32.mrb[0].mxu0
    %v515 = vadd.f32 0.0, %v514
    %v516 = vpop.f32.mrb[0].mxu0
    %v517 = vpop.f32.mrb[0].mxu0
    %v518 = vadd.f32 0.0, %v517
    %v519 = vpop.f32.mrb[0].mxu0
    %520 = vmatprep.mubr.bf16.mxu0 0
    %521 = vmatmul.mubr.bf16.gmra.mrb[0].mxu0 %v314
    %v522 = vpop.f32.mrb[0].mxu0
    %v523 = vadd.f32 0.0, %v522
    %v524 = vpop.f32.mrb[0].mxu0
    %v525 = vpop.f32.mrb[0].mxu0
    %v526 = vadd.f32 0.0, %v525
    %v527 = vpop.f32.mrb[0].mxu0
    %528 = vmatprep.mubr.bf16.mxu0 0
    %529 = vmatmul.mubr.bf16.gmra.mrb[0].mxu0 %v317
    %v530 = vpop.f32.mrb[0].mxu0
    %v531 = vadd.f32 0.0, %v530
    %v532 = vpop.f32.mrb[0].mxu0
    %v533 = vpop.f32.mrb[0].mxu0
    %v534 = vadd.f32 0.0, %v533
    %v535 = vpop.f32.mrb[0].mxu0
    %536 = vmatprep.mubr.bf16.mxu0 0
    %537 = vmatmul.mubr.bf16.gmra.mrb[0].mxu0 %v320
    %v538 = vpop.f32.mrb[0].mxu0
    %v539 = vadd.f32 0.0, %v538
    %v540 = vpop.f32.mrb[0].mxu0
    %v541 = vpop.f32.mrb[0].mxu0
    %v542 = vadd.f32 0.0, %v541
    %v543 = vpop.f32.mrb[0].mxu0
    %544 = vmatprep.mubr.bf16.mxu0 0
    %545 = vmatmul.mubr.bf16.gmra.mrb[0].mxu0 %v323
    %v546 = vpop.f32.mrb[0].mxu0
    %v547 = vadd.f32 0.0, %v546
    %v548 = vpop.f32.mrb[0].mxu0
    %v549 = vpop.f32.mrb[0].mxu0
    %v550 = vadd.f32 0.0, %v549
    %v551 = vpop.f32.mrb[0].mxu0
    %552 = vmatprep.mubr.bf16.mxu0 0
    %553 = vmatmul.mubr.bf16.gmra.mrb[0].mxu0 %v326
    %v554 = vpop.f32.mrb[0].mxu0
    %v555 = vadd.f32 0.0, %v554
    %v556 = vpop.f32.mrb[0].mxu0
    %v557 = vpop.f32.mrb[0].mxu0
    %v558 = vadd.f32 0.0, %v557
    %v559 = vpop.f32.mrb[0].mxu0
    %560 = vmatprep.mubr.bf16.mxu0 0
    %561 = vmatmul.mubr.bf16.gmra.mrb[0].mxu0 %v329
    %v562 = vpop.f32.mrb[0].mxu0
    %v563 = vadd.f32 0.0, %v562
    %v564 = vpop.f32.mrb[0].mxu0
    %v565 = vpop.f32.mrb[0].mxu0
    %v566 = vadd.f32 0.0, %v565
    %v567 = vpop.f32.mrb[0].mxu0
    %568 = vmatprep.mubr.bf16.mxu0 0
    %569 = vmatmul.mubr.bf16.gmra.mrb[0].mxu0 %v332
    %v570 = vpop.f32.mrb[0].mxu0
    %v571 = vadd.f32 0.0, %v570
    %v572 = vpop.f32.mrb[0].mxu0
    %v573 = vpop.f32.mrb[0].mxu0
    %v574 = vadd.f32 0.0, %v573
    %v575 = vpop.f32.mrb[0].mxu0
    %576 = vmatprep.mubr.bf16.mxu0 0
    %577 = vmatmul.mubr.bf16.gmra.mrb[0].mxu0 %v335
    %v578 = vpop.f32.mrb[0].mxu0
    %v579 = vadd.f32 0.0, %v578
    %v580 = vpop.f32.mrb[0].mxu0
    %v581 = vpop.f32.mrb[0].mxu0
    %v582 = vadd.f32 0.0, %v581
    %v583 = vpop.f32.mrb[0].mxu0
    %584 = vmatprep.mubr.bf16.mxu0 0
    %585 = vmatmul.mubr.bf16.gmra.mrb[0].mxu0 %v338
    %v586 = vpop.f32.mrb[0].mxu0
    %v587 = vadd.f32 0.0, %v586
    %v588 = vpop.f32.mrb[0].mxu0
    %v589 = vpop.f32.mrb[0].mxu0
    %v590 = vadd.f32 0.0, %v589
    %v591 = vpop.f32.mrb[0].mxu0
    %592 = vmatprep.mubr.bf16.mxu0 0
    %593 = vmatmul.mubr.bf16.gmra.mrb[0].mxu0 %v341
    %v594 = vpop.f32.mrb[0].mxu0
    %v595 = vadd.f32 0.0, %v594
    %v596 = vpop.f32.mrb[0].mxu0
    %v597 = vpop.f32.mrb[0].mxu0
    %v598 = vadd.f32 0.0, %v597
    %v599 = vpop.f32.mrb[0].mxu0
    %600 = vmatprep.mubr.bf16.mxu0 0
    %601 = vmatmul.mubr.bf16.gmra.mrb[0].mxu0 %v344
    %v602 = vpop.f32.mrb[0].mxu0
    %v603 = vadd.f32 0.0, %v602
    %v604 = vpop.f32.mrb[0].mxu0
    %v605 = vpop.f32.mrb[0].mxu0
    %v606 = vadd.f32 0.0, %v605
    %v607 = vpop.f32.mrb[0].mxu0
    %608 = vmatprep.mubr.bf16.mxu0 0
    %609 = vmatmul.mubr.bf16.gmra.mrb[0].mxu0 %v347
    %v610 = vpop.f32.mrb[0].mxu0
    %v611 = vadd.f32 0.0, %v610
    %v612 = vpop.f32.mrb[0].mxu0
    %v613 = vpop.f32.mrb[0].mxu0
    %v614 = vadd.f32 0.0, %v613
    %v615 = vpop.f32.mrb[0].mxu0
    %616 = vmatprep.mubr.bf16.mxu0 0
    %617 = vmatmul.mubr.bf16.gmra.mrb[0].mxu0 %v350
    %v618 = vpop.f32.mrb[0].mxu0
    %v619 = vadd.f32 0.0, %v618
    %v620 = vpop.f32.mrb[0].mxu0
    %v621 = vpop.f32.mrb[0].mxu0
    %v622 = vadd.f32 0.0, %v621
    %v623 = vpop.f32.mrb[0].mxu0
    %624 = vmatprep.mubr.bf16.mxu0 0
    %625 = vmatmul.mubr.bf16.gmra.mrb[0].mxu0 %v353
    %v626 = vpop.f32.mrb[0].mxu0
    %v627 = vadd.f32 0.0, %v626
    %v628 = vpop.f32.mrb[0].mxu0
    %v629 = vpop.f32.mrb[0].mxu0
    %v630 = vadd.f32 0.0, %v629
    %v631 = vpop.f32.mrb[0].mxu0
    %632 = vmatprep.mubr.bf16.mxu0 0
    %633 = vmatmul.mubr.bf16.gmra.mrb[0].mxu0 %v356
    %v634 = vpop.f32.mrb[0].mxu0
    %v635 = vadd.f32 0.0, %v634
    %v636 = vpop.f32.mrb[0].mxu0
    %v637 = vpop.f32.mrb[0].mxu0
    %v638 = vadd.f32 0.0, %v637
    %v639 = vpop.f32.mrb[0].mxu0
    %640 = vmatprep.mubr.bf16.mxu0 0
    %641 = vmatmul.mubr.bf16.gmra.mrb[0].mxu0 %v359
    %v642 = vpop.f32.mrb[0].mxu0
    %v643 = vadd.f32 0.0, %v642
    %v644 = vpop.f32.mrb[0].mxu0
    %v645 = vpop.f32.mrb[0].mxu0
    %v646 = vadd.f32 0.0, %v645
    %v647 = vpop.f32.mrb[0].mxu0
    %648 = vmatprep.mubr.bf16.mxu0 0
    %649 = vmatmul.mubr.bf16.gmra.mrb[0].mxu0 %v362
    %v650 = vpop.f32.mrb[0].mxu0
    %v651 = vadd.f32 0.0, %v650
    %v652 = vpop.f32.mrb[0].mxu0
    %v653 = vpop.f32.mrb[0].mxu0
    %v654 = vadd.f32 0.0, %v653
    %v655 = vpop.f32.mrb[0].mxu0
    %656 = vdwg.mxu0
    %657 = vst.msk [vmem:[#allocation7] sm:$0xff] %vm267, %v403
    %658 = vst.msk [vmem:[#allocation7 + $0x8] sm:$0xff] %vm267, %v406
    %659 = vst.msk [vmem:[#allocation7 + $0x10] sm:$0xff] %vm267, %v411
    %660 = vst.msk [vmem:[#allocation7 + $0x18] sm:$0xff] %vm267, %v414
    %661 = vst.msk [vmem:[#allocation7 + $0x20] sm:$0xff] %vm267, %v419
    %662 = vst.msk [vmem:[#allocation7 + $0x28] sm:$0xff] %vm267, %v422
    %663 = vst.msk [vmem:[#allocation7 + $0x30] sm:$0xff] %vm267, %v427
    %664 = vst.msk [vmem:[#allocation7 + $0x38] sm:$0xff] %vm267, %v430
    %665 = vst.msk [vmem:[#allocation7 + $0x40] sm:$0xff] %vm267, %v435
    %666 = vst.msk [vmem:[#allocation7 + $0x48] sm:$0xff] %vm267, %v438
    %667 = vst.msk [vmem:[#allocation7 + $0x50] sm:$0xff] %vm267, %v443
    %668 = vst.msk [vmem:[#allocation7 + $0x58] sm:$0xff] %vm267, %v446
    %669 = vst.msk [vmem:[#allocation7 + $0x60] sm:$0xff] %vm267, %v451
    %670 = vst.msk [vmem:[#allocation7 + $0x68] sm:$0xff] %vm267, %v454
    %671 = vst.msk [vmem:[#allocation7 + $0x70] sm:$0xff] %vm267, %v459
    %672 = vst.msk [vmem:[#allocation7 + $0x78] sm:$0xff] %vm267, %v462
    %673 = vst.msk [vmem:[#allocation7 + $0x80] sm:$0xff] %vm267, %v467
    %674 = vst.msk [vmem:[#allocation7 + $0x88] sm:$0xff] %vm267, %v470
    %675 = vst.msk [vmem:[#allocation7 + $0x90] sm:$0xff] %vm267, %v475
    %676 = vst.msk [vmem:[#allocation7 + $0x98] sm:$0xff] %vm267, %v478
    %677 = vst.msk [vmem:[#allocation7 + $0xa0] sm:$0xff] %vm267, %v483
    %678 = vst.msk [vmem:[#allocation7 + $0xa8] sm:$0xff] %vm267, %v486
    %679 = vst.msk [vmem:[#allocation7 + $0xb0] sm:$0xff] %vm267, %v491
    %680 = vst.msk [vmem:[#allocation7 + $0xb8] sm:$0xff] %vm267, %v494
    %681 = vst.msk [vmem:[#allocation7 + $0xc0] sm:$0xff] %vm267, %v499
    %682 = vst.msk [vmem:[#allocation7 + $0xc8] sm:$0xff] %vm267, %v502
    %683 = vst.msk [vmem:[#allocation7 + $0xd0] sm:$0xff] %vm267, %v507
    %684 = vst.msk [vmem:[#allocation7 + $0xd8] sm:$0xff] %vm267, %v510
    %685 = vst.msk [vmem:[#allocation7 + $0xe0] sm:$0xff] %vm267, %v515
    %686 = vst.msk [vmem:[#allocation7 + $0xe8] sm:$0xff] %vm267, %v518
    %687 = vst.msk [vmem:[#allocation7 + $0xf0] sm:$0xff] %vm267, %v523
    %688 = vst.msk [vmem:[#allocation7 + $0xf8] sm:$0xff] %vm267, %v526
    %689 = vst.msk [vmem:[#allocation7 + $0x100] sm:$0xff] %vm267, %v531
    %690 = vst.msk [vmem:[#allocation7 + $0x108] sm:$0xff] %vm267, %v534
    %691 = vst.msk [vmem:[#allocation7 + $0x110] sm:$0xff] %vm267, %v539
    %692 = vst.msk [vmem:[#allocation7 + $0x118] sm:$0xff] %vm267, %v542
    %693 = vst.msk [vmem:[#allocation7 + $0x120] sm:$0xff] %vm267, %v547
    %694 = vst.msk [vmem:[#allocation7 + $0x128] sm:$0xff] %vm267, %v550
    %695 = vst.msk [vmem:[#allocation7 + $0x130] sm:$0xff] %vm267, %v555
    %696 = vst.msk [vmem:[#allocation7 + $0x138] sm:$0xff] %vm267, %v558
    %697 = vst.msk [vmem:[#allocation7 + $0x140] sm:$0xff] %vm267, %v563
    %698 = vst.msk [vmem:[#allocation7 + $0x148] sm:$0xff] %vm267, %v566
    %699 = vst.msk [vmem:[#allocation7 + $0x150] sm:$0xff] %vm267, %v571
    %700 = vst.msk [vmem:[#allocation7 + $0x158] sm:$0xff] %vm267, %v574
    %701 = vst.msk [vmem:[#allocation7 + $0x160] sm:$0xff] %vm267, %v579
    %702 = vst.msk [vmem:[#allocation7 + $0x168] sm:$0xff] %vm267, %v582
    %703 = vst.msk [vmem:[#allocation7 + $0x170] sm:$0xff] %vm267, %v587
    %704 = vst.msk [vmem:[#allocation7 + $0x178] sm:$0xff] %vm267, %v590
    %705 = vst.msk [vmem:[#allocation7 + $0x180] sm:$0xff] %vm267, %v595
    %706 = vst.msk [vmem:[#allocation7 + $0x188] sm:$0xff] %vm267, %v598
    %707 = vst.msk [vmem:[#allocation7 + $0x190] sm:$0xff] %vm267, %v603
    %708 = vst.msk [vmem:[#allocation7 + $0x198] sm:$0xff] %vm267, %v606
    %709 = vst.msk [vmem:[#allocation7 + $0x1a0] sm:$0xff] %vm267, %v611
    %710 = vst.msk [vmem:[#allocation7 + $0x1a8] sm:$0xff] %vm267, %v614
    %711 = vst.msk [vmem:[#allocation7 + $0x1b0] sm:$0xff] %vm267, %v619
    %712 = vst.msk [vmem:[#allocation7 + $0x1b8] sm:$0xff] %vm267, %v622
    %713 = vst.msk [vmem:[#allocation7 + $0x1c0] sm:$0xff] %vm267, %v627
    %714 = vst.msk [vmem:[#allocation7 + $0x1c8] sm:$0xff] %vm267, %v630
    %715 = vst.msk [vmem:[#allocation7 + $0x1d0] sm:$0xff] %vm267, %v635
    %716 = vst.msk [vmem:[#allocation7 + $0x1d8] sm:$0xff] %vm267, %v638
    %717 = vst.msk [vmem:[#allocation7 + $0x1e0] sm:$0xff] %vm267, %v643
    %718 = vst.msk [vmem:[#allocation7 + $0x1e8] sm:$0xff] %vm267, %v646
    %719 = vst.msk [vmem:[#allocation7 + $0x1f0] sm:$0xff] %vm267, %v651
    %720 = vst.msk [vmem:[#allocation7 + $0x1f8] sm:$0xff] %vm267, %v654
    %v721 = vsel %vm267, %v403, 0.0
    %v722 = vsel %vm267, %v406, 0.0
    %v723 = vadd.f32 %v721, %v722
    %v724 = vsel %vm267, %v411, 0.0
    %v725 = vadd.f32 %v723, %v724
    %v726 = vsel %vm267, %v414, 0.0
    %v727 = vadd.f32 %v725, %v726
    %v728 = vsel %vm267, %v419, 0.0
    %v729 = vadd.f32 %v727, %v728
    %v730 = vsel %vm267, %v422, 0.0
    %v731 = vadd.f32 %v729, %v730
    %v732 = vsel %vm267, %v427, 0.0
    %v733 = vadd.f32 %v731, %v732
    %v734 = vsel %vm267, %v430, 0.0
    %v735 = vadd.f32 %v733, %v734
    %v736 = vsel %vm267, %v435, 0.0
    %v737 = vadd.f32 %v735, %v736
    %v738 = vsel %vm267, %v438, 0.0
    %v739 = vadd.f32 %v737, %v738
    %v740 = vsel %vm267, %v443, 0.0
    %v741 = vadd.f32 %v739, %v740
    %v742 = vsel %vm267, %v446, 0.0
    %v743 = vadd.f32 %v741, %v742
    %v744 = vsel %vm267, %v451, 0.0
    %v745 = vadd.f32 %v743, %v744
    %v746 = vsel %vm267, %v454, 0.0
    %v747 = vadd.f32 %v745, %v746
    %v748 = vsel %vm267, %v459, 0.0
    %v749 = vadd.f32 %v747, %v748
    %v750 = vsel %vm267, %v462, 0.0
    %v751 = vadd.f32 %v749, %v750
    %v752 = vsel %vm267, %v467, 0.0
    %v753 = vadd.f32 %v751, %v752
    %v754 = vsel %vm267, %v470, 0.0
    %v755 = vadd.f32 %v753, %v754
    %v756 = vsel %vm267, %v475, 0.0
    %v757 = vadd.f32 %v755, %v756
    %v758 = vsel %vm267, %v478, 0.0
    %v759 = vadd.f32 %v757, %v758
    %v760 = vsel %vm267, %v483, 0.0
    %v761 = vadd.f32 %v759, %v760
    %v762 = vsel %vm267, %v486, 0.0
    %v763 = vadd.f32 %v761, %v762
    %v764 = vsel %vm267, %v491, 0.0
    %v765 = vadd.f32 %v763, %v764
    %v766 = vsel %vm267, %v494, 0.0
    %v767 = vadd.f32 %v765, %v766
    %v768 = vsel %vm267, %v499, 0.0
    %v769 = vadd.f32 %v767, %v768
    %v770 = vsel %vm267, %v502, 0.0
    %v771 = vadd.f32 %v769, %v770
    %v772 = vsel %vm267, %v507, 0.0
    %v773 = vadd.f32 %v771, %v772
    %v774 = vsel %vm267, %v510, 0.0
    %v775 = vadd.f32 %v773, %v774
    %v776 = vsel %vm267, %v515, 0.0
    %v777 = vadd.f32 %v775, %v776
    %v778 = vsel %vm267, %v518, 0.0
    %v779 = vadd.f32 %v777, %v778
    %v780 = vsel %vm267, %v523, 0.0
    %v781 = vadd.f32 %v779, %v780
    %v782 = vsel %vm267, %v526, 0.0
    %v783 = vadd.f32 %v781, %v782
    %v784 = vsel %vm267, %v531, 0.0
    %v785 = vadd.f32 %v783, %v784
    %v786 = vsel %vm267, %v534, 0.0
    %v787 = vadd.f32 %v785, %v786
    %v788 = vsel %vm267, %v539, 0.0
    %v789 = vadd.f32 %v787, %v788
    %v790 = vsel %vm267, %v542, 0.0
    %v791 = vadd.f32 %v789, %v790
    %v792 = vsel %vm267, %v547, 0.0
    %v793 = vadd.f32 %v791, %v792
    %v794 = vsel %vm267, %v550, 0.0
    %v795 = vadd.f32 %v793, %v794
    %v796 = vsel %vm267, %v555, 0.0
    %v797 = vadd.f32 %v795, %v796
    %v798 = vsel %vm267, %v558, 0.0
    %v799 = vadd.f32 %v797, %v798
    %v800 = vsel %vm267, %v563, 0.0
    %v801 = vadd.f32 %v799, %v800
    %v802 = vsel %vm267, %v566, 0.0
    %v803 = vadd.f32 %v801, %v802
    %v804 = vsel %vm267, %v571, 0.0
    %v805 = vadd.f32 %v803, %v804
    %v806 = vsel %vm267, %v574, 0.0
    %v807 = vadd.f32 %v805, %v806
    %v808 = vsel %vm267, %v579, 0.0
    %v809 = vadd.f32 %v807, %v808
    %v810 = vsel %vm267, %v582, 0.0
    %v811 = vadd.f32 %v809, %v810
    %v812 = vsel %vm267, %v587, 0.0
    %v813 = vadd.f32 %v811, %v812
    %v814 = vsel %vm267, %v590, 0.0
    %v815 = vadd.f32 %v813, %v814
    %v816 = vsel %vm267, %v595, 0.0
    %v817 = vadd.f32 %v815, %v816
    %v818 = vsel %vm267, %v598, 0.0
    %v819 = vadd.f32 %v817, %v818
    %v820 = vsel %vm267, %v603, 0.0
    %v821 = vadd.f32 %v819, %v820
    %v822 = vsel %vm267, %v606, 0.0
    %v823 = vadd.f32 %v821, %v822
    %v824 = vsel %vm267, %v611, 0.0
    %v825 = vadd.f32 %v823, %v824
    %v826 = vsel %vm267, %v614, 0.0
    %v827 = vadd.f32 %v825, %v826
    %v828 = vsel %vm267, %v619, 0.0
    %v829 = vadd.f32 %v827, %v828
    %v830 = vsel %vm267, %v622, 0.0
    %v831 = vadd.f32 %v829, %v830
    %v832 = vsel %vm267, %v627, 0.0
    %v833 = vadd.f32 %v831, %v832
    %v834 = vsel %vm267, %v630, 0.0
    %v835 = vadd.f32 %v833, %v834
    %v836 = vsel %vm267, %v635, 0.0
    %v837 = vadd.f32 %v835, %v836
    %v838 = vsel %vm267, %v638, 0.0
    %v839 = vadd.f32 %v837, %v838
    %v840 = vsel %vm267, %v643, 0.0
    %v841 = vadd.f32 %v839, %v840
    %v842 = vsel %vm267, %v646, 0.0
    %v843 = vadd.f32 %v841, %v842
    %v844 = vsel %vm267, %v651, 0.0
    %v845 = vadd.f32 %v843, %v844
    %v846 = vsel %vm267, %v654, 0.0
    %v847 = vadd.f32 %v845, %v846
    %v848 = vrot.slane %v847, 4
    %v849 = vadd.f32 %v847, %v848
    %v850 = vrot.slane %v849, 2
    %v851 = vadd.f32 %v849, %v850
    %v852 = vrot.slane %v851, 1
    %v853 = vadd.f32 %v851, %v852
    %vm854 = vcmask 24576
    %855 = vst.msk [vmem:[#allocation8] sm:$0x1] %vm854, %v853
    %v856 = vmul.f32 %v403, %v403
    %v857 = vmul.f32 %v406, %v406
    %v858 = vmul.f32 %v411, %v411
    %v859 = vmul.f32 %v414, %v414
    %v860 = vmul.f32 %v419, %v419
    %v861 = vmul.f32 %v422, %v422
    %v862 = vmul.f32 %v427, %v427
    %v863 = vmul.f32 %v430, %v430
    %v864 = vmul.f32 %v435, %v435
    %v865 = vmul.f32 %v438, %v438
    %v866 = vmul.f32 %v443, %v443
    %v867 = vmul.f32 %v446, %v446
    %v868 = vmul.f32 %v451, %v451
    %v869 = vmul.f32 %v454, %v454
    %v870 = vmul.f32 %v459, %v459
    %v871 = vmul.f32 %v462, %v462
    %v872 = vmul.f32 %v467, %v467
    %v873 = vmul.f32 %v470, %v470
    %v874 = vmul.f32 %v475, %v475
    %v875 = vmul.f32 %v478, %v478
    %v876 = vmul.f32 %v483, %v483
    %v877 = vmul.f32 %v486, %v486
    %v878 = vmul.f32 %v491, %v491
    %v879 = vmul.f32 %v494, %v494
    %v880 = vmul.f32 %v499, %v499
    %v881 = vmul.f32 %v502, %v502
    %v882 = vmul.f32 %v507, %v507
    %v883 = vmul.f32 %v510, %v510
    %v884 = vmul.f32 %v515, %v515
    %v885 = vmul.f32 %v518, %v518
    %v886 = vmul.f32 %v523, %v523
    %v887 = vmul.f32 %v526, %v526
    %v888 = vmul.f32 %v531, %v531
    %v889 = vmul.f32 %v534, %v534
    %v890 = vmul.f32 %v539, %v539
    %v891 = vmul.f32 %v542, %v542
    %v892 = vmul.f32 %v547, %v547
    %v893 = vmul.f32 %v550, %v550
    %v894 = vmul.f32 %v555, %v555
    %v895 = vmul.f32 %v558, %v558
    %v896 = vmul.f32 %v563, %v563
    %v897 = vmul.f32 %v566, %v566
    %v898 = vmul.f32 %v571, %v571
    %v899 = vmul.f32 %v574, %v574
    %v900 = vmul.f32 %v579, %v579
    %v901 = vmul.f32 %v582, %v582
    %v902 = vmul.f32 %v587, %v587
    %v903 = vmul.f32 %v590, %v590
    %v904 = vmul.f32 %v595, %v595
    %v905 = vmul.f32 %v598, %v598
    %v906 = vmul.f32 %v603, %v603
    %v907 = vmul.f32 %v606, %v606
    %v908 = vmul.f32 %v611, %v611
    %v909 = vmul.f32 %v614, %v614
    %v910 = vmul.f32 %v619, %v619
    %v911 = vmul.f32 %v622, %v622
    %v912 = vmul.f32 %v627, %v627
    %v913 = vmul.f32 %v630, %v630
    %v914 = vmul.f32 %v635, %v635
    %v915 = vmul.f32 %v638, %v638
    %v916 = vmul.f32 %v643, %v643
    %v917 = vmul.f32 %v646, %v646
    %v918 = vmul.f32 %v651, %v651
    %v919 = vmul.f32 %v654, %v654
    %v920 = vsel %vm267, %v856, 0.0
    %v921 = vsel %vm267, %v857, 0.0
    %v922 = vadd.f32 %v920, %v921
    %v923 = vsel %vm267, %v858, 0.0
    %v924 = vadd.f32 %v922, %v923
    %v925 = vsel %vm267, %v859, 0.0
    %v926 = vadd.f32 %v924, %v925
    %v927 = vsel %vm267, %v860, 0.0
    %v928 = vadd.f32 %v926, %v927
    %v929 = vsel %vm267, %v861, 0.0
    %v930 = vadd.f32 %v928, %v929
    %v931 = vsel %vm267, %v862, 0.0
    %v932 = vadd.f32 %v930, %v931
    %v933 = vsel %vm267, %v863, 0.0
    %v934 = vadd.f32 %v932, %v933
    %v935 = vsel %vm267, %v864, 0.0
    %v936 = vadd.f32 %v934, %v935
    %v937 = vsel %vm267, %v865, 0.0
    %v938 = vadd.f32 %v936, %v937
    %v939 = vsel %vm267, %v866, 0.0
    %v940 = vadd.f32 %v938, %v939
    %v941 = vsel %vm267, %v867, 0.0
    %v942 = vadd.f32 %v940, %v941
    %v943 = vsel %vm267, %v868, 0.0
    %v944 = vadd.f32 %v942, %v943
    %v945 = vsel %vm267, %v869, 0.0
    %v946 = vadd.f32 %v944, %v945
    %v947 = vsel %vm267, %v870, 0.0
    %v948 = vadd.f32 %v946, %v947
    %v949 = vsel %vm267, %v871, 0.0
    %v950 = vadd.f32 %v948, %v949
    %v951 = vsel %vm267, %v872, 0.0
    %v952 = vadd.f32 %v950, %v951
    %v953 = vsel %vm267, %v873, 0.0
    %v954 = vadd.f32 %v952, %v953
    %v955 = vsel %vm267, %v874, 0.0
    %v956 = vadd.f32 %v954, %v955
    %v957 = vsel %vm267, %v875, 0.0
    %v958 = vadd.f32 %v956, %v957
    %v959 = vsel %vm267, %v876, 0.0
    %v960 = vadd.f32 %v958, %v959
    %v961 = vsel %vm267, %v877, 0.0
    %v962 = vadd.f32 %v960, %v961
    %v963 = vsel %vm267, %v878, 0.0
    %v964 = vadd.f32 %v962, %v963
    %v965 = vsel %vm267, %v879, 0.0
    %v966 = vadd.f32 %v964, %v965
    %v967 = vsel %vm267, %v880, 0.0
    %v968 = vadd.f32 %v966, %v967
    %v969 = vsel %vm267, %v881, 0.0
    %v970 = vadd.f32 %v968, %v969
    %v971 = vsel %vm267, %v882, 0.0
    %v972 = vadd.f32 %v970, %v971
    %v973 = vsel %vm267, %v883, 0.0
    %v974 = vadd.f32 %v972, %v973
    %v975 = vsel %vm267, %v884, 0.0
    %v976 = vadd.f32 %v974, %v975
    %v977 = vsel %vm267, %v885, 0.0
    %v978 = vadd.f32 %v976, %v977
    %v979 = vsel %vm267, %v886, 0.0
    %v980 = vadd.f32 %v978, %v979
    %v981 = vsel %vm267, %v887, 0.0
    %v982 = vadd.f32 %v980, %v981
    %v983 = vsel %vm267, %v888, 0.0
    %v984 = vadd.f32 %v982, %v983
    %v985 = vsel %vm267, %v889, 0.0
    %v986 = vadd.f32 %v984, %v985
    %v987 = vsel %vm267, %v890, 0.0
    %v988 = vadd.f32 %v986, %v987
    %v989 = vsel %vm267, %v891, 0.0
    %v990 = vadd.f32 %v988, %v989
    %v991 = vsel %vm267, %v892, 0.0
    %v992 = vadd.f32 %v990, %v991
    %v993 = vsel %vm267, %v893, 0.0
    %v994 = vadd.f32 %v992, %v993
    %v995 = vsel %vm267, %v894, 0.0
    %v996 = vadd.f32 %v994, %v995
    %v997 = vsel %vm267, %v895, 0.0
    %v998 = vadd.f32 %v996, %v997
    %v999 = vsel %vm267, %v896, 0.0
    %v1000 = vadd.f32 %v998, %v999
    %v1001 = vsel %vm267, %v897, 0.0
    %v1002 = vadd.f32 %v1000, %v1001
    %v1003 = vsel %vm267, %v898, 0.0
    %v1004 = vadd.f32 %v1002, %v1003
    %v1005 = vsel %vm267, %v899, 0.0
    %v1006 = vadd.f32 %v1004, %v1005
    %v1007 = vsel %vm267, %v900, 0.0
    %v1008 = vadd.f32 %v1006, %v1007
    %v1009 = vsel %vm267, %v901, 0.0
    %v1010 = vadd.f32 %v1008, %v1009
    %v1011 = vsel %vm267, %v902, 0.0
    %v1012 = vadd.f32 %v1010, %v1011
    %v1013 = vsel %vm267, %v903, 0.0
    %v1014 = vadd.f32 %v1012, %v1013
    %v1015 = vsel %vm267, %v904, 0.0
    %v1016 = vadd.f32 %v1014, %v1015
    %v1017 = vsel %vm267, %v905, 0.0
    %v1018 = vadd.f32 %v1016, %v1017
    %v1019 = vsel %vm267, %v906, 0.0
    %v1020 = vadd.f32 %v1018, %v1019
    %v1021 = vsel %vm267, %v907, 0.0
    %v1022 = vadd.f32 %v1020, %v1021
    %v1023 = vsel %vm267, %v908, 0.0
    %v1024 = vadd.f32 %v1022, %v1023
    %v1025 = vsel %vm267, %v909, 0.0
    %v1026 = vadd.f32 %v1024, %v1025
    %v1027 = vsel %vm267, %v910, 0.0
    %v1028 = vadd.f32 %v1026, %v1027
    %v1029 = vsel %vm267, %v911, 0.0
    %v1030 = vadd.f32 %v1028, %v1029
    %v1031 = vsel %vm267, %v912, 0.0
    %v1032 = vadd.f32 %v1030, %v1031
    %v1033 = vsel %vm267, %v913, 0.0
    %v1034 = vadd.f32 %v1032, %v1033
    %v1035 = vsel %vm267, %v914, 0.0
    %v1036 = vadd.f32 %v1034, %v1035
    %v1037 = vsel %vm267, %v915, 0.0
    %v1038 = vadd.f32 %v1036, %v1037
    %v1039 = vsel %vm267, %v916, 0.0
    %v1040 = vadd.f32 %v1038, %v1039
    %v1041 = vsel %vm267, %v917, 0.0
    %v1042 = vadd.f32 %v1040, %v1041
    %v1043 = vsel %vm267, %v918, 0.0
    %v1044 = vadd.f32 %v1042, %v1043
    %v1045 = vsel %vm267, %v919, 0.0
    %v1046 = vadd.f32 %v1044, %v1045
    %v1047 = vrot.slane %v1046, 4
    %v1048 = vadd.f32 %v1046, %v1047
    %v1049 = vrot.slane %v1048, 2
    %v1050 = vadd.f32 %v1048, %v1049
    %v1051 = vrot.slane %v1050, 1
    %v1052 = vadd.f32 %v1050, %v1051
    %1053 = vst.msk [vmem:[#allocation8 + $0x1] sm:$0x1] %vm854, %v1052
    // Predicated region
    $region18: #{bottleneck_block.7} parent=1 // pred_check
      _
    $region19: #{bottleneck_block.7} parent=1 // pred_check_branch
      %1055 = sbr.rel (0) target = $region21
    $region20: #{bottleneck_block.7} parent=1 // pred_region
      %s1057 = ssub.s32 8192, 8192
      %1058 = vsyncadd [#allocation4], %s1057
      %s1059 = sshll.u32 [#allocation7], 4
      %s1060 = int_to_ptr.vmem [resolvable:$true] %s1059
      %1065 = dma.vmem_to_hbm [thread:$0]  %s1060, 8192, %s2, [#allocation4], 128, 128, 8
    $region21: #{bottleneck_block.7} parent=1 // pred_fallthru
      _
    // Predicated region
    $region22: #{bottleneck_block.7} parent=1 // pred_check
      _
    $region23: #{bottleneck_block.7} parent=1 // pred_check_branch
      %1067 = sbr.rel (0) target = $region25
    $region24: #{bottleneck_block.7} parent=1 // pred_region
      %s1069 = ssub.s32 32, 32
      %1070 = vsyncadd [#allocation9], %s1069
      %s1072 = sshll.u32 [#allocation8], 4
      %s1073 = int_to_ptr.vmem [resolvable:$true] %s1072
      %1075 = dma.vmem_to_hbm [thread:$0]  %s1073, 32, %s3, [#allocation9]
    $region25: #{bottleneck_block.7} parent=1 // pred_fallthru
      _
    // Predicated region
    $region26: #{bottleneck_block.7} parent=1 // pred_check
      _
    $region27: #{bottleneck_block.7} parent=1 // pred_check_branch
      %1077 = sbr.rel (0) target = $region29
    $region28: #{bottleneck_block.7} parent=1 // pred_region
      %1078 = dma.done [#allocation4], 8192
    $region29: #{bottleneck_block.7} parent=1 // pred_fallthru
      _
    // Predicated region
    $region30: #{bottleneck_block.7} parent=1 // pred_check
      _
    $region31: #{bottleneck_block.7} parent=1 // pred_check_branch
      %1080 = sbr.rel (0) target = $region33
    $region32: #{bottleneck_block.7} parent=1 // pred_region
      %1081 = dma.done [#allocation9], 32
    $region33: #{bottleneck_block.7} parent=1 // pred_fallthru
      _
    %1082 = vsyncpa [#allocation3], 1
    %1083 = vsyncpa [#allocation6], 1
    %1084 = vsyncpa [#allocation4], 1
    %1085 = vsyncpa [#allocation9], 1

// kernel: bottleneck_block.10
$region0: #{bottleneck_block.10}
  #allocation0 [shape = 'u32[]', space=smem, size = 0x4, offset = 0x4, fixed_abs, tag = 'smem constant byte address 0x4 - core index']
  #allocation1 [shape = 'u32[144,128]{1,0:T(1,128)}', space=vmem, size = 0x12000, scoped, tag = 'internal scratch']
  %s0 = inlined_call_operand.hbm [shape: f32[2,8,9,4], index: 0, kind: input, shape index: {}]
  %s1 = inlined_call_operand.hbm [shape: f32[1,4], index: 1, kind: input, shape index: {}]
  %s2 = inlined_call_operand.hbm [shape: f32[1,4], index: 2, kind: input, shape index: {}]
  %s3 = inlined_call_operand.hbm [shape: bf16[2,8,8,4], index: 3, kind: output, shape index: {}]
  %s4 = sld [smem:[#allocation0]]
  $region57: #{bottleneck_block.10} parent=0
    _
  %s6 = ssub.s32 1, %s4
  %s7 = scalar_select 0, %s6, %s4
  $region1: #{bottleneck_block.10} parent=0
    #allocation2 [shape = 'u8[131072]{0}', space=vmem, size = 0x20000, scoped, tag = 'input window, operand 0']
    #allocation3 [shape = 's32[2]{0}', space=sflag, size = 0x8, scoped, tag = 'scoped memory for bottleneck_block.10']
    #allocation4 [shape = 's32[2]{0}', space=sflag, size = 0x8, scoped, tag = 'scoped memory for bottleneck_block.10']
    #allocation5 [shape = 'u8[512]{0}', space=vmem, size = 0x400, scoped, tag = 'input window, operand 1, single buffered']
    #allocation6 [shape = 's32[1]{0}', space=sflag, size = 0x4, scoped, tag = 'scoped memory for bottleneck_block.10']
    #allocation7 [shape = 'u8[512]{0}', space=vmem, size = 0x400, scoped, tag = 'input window, operand 2, single buffered']
    #allocation8 [shape = 'u8[32768]{0}', space=vmem, size = 0x8000, scoped, tag = 'output window, operand 0']
    %8 = vsyncpa [#allocation3], 0
    %s9 = scalar_lea.sflag [#allocation3], 1
    %10 = vsyncpa %s9, 0
    %11 = vsyncpa [#allocation6], 0
    %12 = vsyncpa [#allocation4], 0
    %s13 = scalar_lea.sflag [#allocation4], 1
    %14 = vsyncpa %s13, 0
    loop: start=0, step=1, limit=4
    $region2: #{bottleneck_block.10} parent=1 // loop_pre_header
      _
    $region3: #{bottleneck_block.10} parent=1 // loop_header
      %s16 = sphi 0, %s20
      %p17 = scmp.ge.s32.totalorder %s16, 4
      %s26 = sphi 0, %s28
      %s29 = sphi 0, %s26
      %s30 = sphi 0, %s29
      %s46 = sphi 0, %s30
      %s50 = sphi 0, %s50
      %s52 = sphi 0, %s50
      %s53 = sphi 0, %s52
      %s67 = sphi 0, %s53
      %s71 = sphi 0, %s71
      %s73 = sphi 0, %s71
      %s74 = sphi 0, %s73
      %s88 = sphi 0, %s74
      %s94 = sphi 0, %s96
      %s97 = sphi 0, %s94
      %s98 = sphi 0, %s97
      %s114 = sphi 0, %s98
    $region4: #{bottleneck_block.10} parent=1 // loop_header_branch
      %19 = sbr.rel (%p17) target = $region8
    $region5: #{bottleneck_block.10} parent=1 // loop_body
      %s21 = ssub.s32 %s16, 1
      %s22 = ssub.s32 %s16, 2
      %s23 = sadd.s32 %s16, 1
      %s24 = ssub.s32 %s16, %s23
      %p25 = scmp.eq.s32.totalorder %s24, 0
      %s27 = sadd.s32 %s26, 1
      %s28 = scalar_select %p25, %s26, %s27
      %p31 = pneg %p25
      %p32 = scmp.eq.s32.totalorder %s16, 1
      %p33 = por %p31, %p32
      %p34 = scmp.ne.s32.totalorder %s26, %s29
      %p35 = scmp.eq.s32.totalorder %s16, 0
      %p36 = por %p34, %p35
      %p37 = scmp.ne.s32.totalorder %s26, %s29
      %p38 = scmp.eq.s32.totalorder %s21, 1
      %p39 = por %p37, %p38
      %p40 = scmp.ne.s32.totalorder %s29, %s30
      %p41 = scmp.eq.s32.totalorder %s21, 0
      %p42 = por %p40, %p41
      %p43 = scmp.ne.s32.totalorder %s29, %s30
      %p44 = scmp.eq.s32.totalorder %s22, 1
      %p45 = por %p43, %p44
      %p47 = scmp.ne.s32.totalorder %s30, %s46
      %p48 = scmp.eq.s32.totalorder %s22, 0
      %p49 = por %p47, %p48
      %s51 = sadd.s32 %s50, 1
      %p54 = scmp.eq.s32.totalorder %s16, 1
      %p55 = scmp.ne.s32.totalorder %s50, %s52
      %p56 = scmp.eq.s32.totalorder %s16, 0
      %p57 = por %p55, %p56
      %p58 = scmp.ne.s32.totalorder %s50, %s52
      %p59 = scmp.eq.s32.totalorder %s21, 1
      %p60 = por %p58, %p59
      %p61 = scmp.ne.s32.totalorder %s52, %s53
      %p62 = scmp.eq.s32.totalorder %s21, 0
      %p63 = por %p61, %p62
      %p64 = scmp.ne.s32.totalorder %s52, %s53
      %p65 = scmp.eq.s32.totalorder %s22, 1
      %p66 = por %p64, %p65
      %p68 = scmp.ne.s32.totalorder %s53, %s67
      %p69 = scmp.eq.s32.totalorder %s22, 0
      %p70 = por %p68, %p69
      %s72 = sadd.s32 %s71, 1
      %p75 = scmp.eq.s32.totalorder %s16, 1
      %p76 = scmp.ne.s32.totalorder %s71, %s73
      %p77 = scmp.eq.s32.totalorder %s16, 0
      %p78 = por %p76, %p77
      %p79 = scmp.ne.s32.totalorder %s71, %s73
      %p80 = scmp.eq.s32.totalorder %s21, 1
      %p81 = por %p79, %p80
      %p82 = scmp.ne.s32.totalorder %s73, %s74
      %p83 = scmp.eq.s32.totalorder %s21, 0
      %p84 = por %p82, %p83
      %p85 = scmp.ne.s32.totalorder %s73, %s74
      %p86 = scmp.eq.s32.totalorder %s22, 1
      %p87 = por %p85, %p86
      %p89 = scmp.ne.s32.totalorder %s74, %s88
      %p90 = scmp.eq.s32.totalorder %s22, 0
      %p91 = por %p89, %p90
      %s92 = ssub.s32 %s16, %s23
      %p93 = scmp.eq.s32.totalorder %s92, 0
      %s95 = sadd.s32 %s94, 1
      %s96 = scalar_select %p93, %s94, %s95
      %p99 = pneg %p93
      %p100 = scmp.eq.s32.totalorder %s16, 1
      %p101 = por %p99, %p100
      %p102 = scmp.ne.s32.totalorder %s94, %s97
      %p103 = scmp.eq.s32.totalorder %s16, 0
      %p104 = por %p102, %p103
      %p105 = scmp.ne.s32.totalorder %s94, %s97
      %p106 = scmp.eq.s32.totalorder %s21, 1
      %p107 = por %p105, %p106
      %p108 = scmp.ne.s32.totalorder %s97, %s98
      %p109 = scmp.eq.s32.totalorder %s21, 0
      %p110 = por %p108, %p109
      %p111 = scmp.ne.s32.totalorder %s97, %s98
      %p112 = scmp.eq.s32.totalorder %s22, 1
      %p113 = por %p111, %p112
      %p115 = scmp.ne.s32.totalorder %s98, %s114
      %p116 = scmp.eq.s32.totalorder %s22, 0
      %p117 = por %p115, %p116
      %p118 = scmp.le.s32.totalorder 1, %s16
      %p119 = scmp.lt.s32.totalorder %s16, 3
      %p120 = pnand %p118, %p119
      %p121 = pneg %p120
      // Predicated region
      $region9: #{bottleneck_block.10} parent=5 // pred_check
        _
      $region10: #{bottleneck_block.10} parent=5 // pred_check_branch
        %123 = sbr.rel (%p120) target = $region12
      $region11: #{bottleneck_block.10} parent=5 // pred_region
        %s124 = ssub.s32 %s16, 1
        // Predicated region
        $region13: #{bottleneck_block.10} parent=11 // pred_check
          %p125 = pneg %p63
        $region14: #{bottleneck_block.10} parent=11 // pred_check_branch
          %127 = sbr.rel (%p125) target = $region16
        $region15: #{bottleneck_block.10} parent=11 // pred_region
          %s129 = ssub.s32 16, 16
          %130 = vsyncadd [#allocation6], %s129
          %s132 = sshll.u32 [#allocation5], 4
          %s133 = int_to_ptr.vmem [resolvable:$true] %s132
          %135 = dma.hbm_to_vmem [thread:$0]  %s1, 16, %s133, [#allocation6]
        $region16: #{bottleneck_block.10} parent=11 // pred_fallthru
          _
        // Predicated region
        $region17: #{bottleneck_block.10} parent=11 // pred_check
          %p136 = pneg %p84
        $region18: #{bottleneck_block.10} parent=11 // pred_check_branch
          %138 = sbr.rel (%p136) target = $region20
        $region19: #{bottleneck_block.10} parent=11 // pred_region
          %s140 = ssub.s32 16, 16
          %141 = vsyncadd [#allocation6], %s140
          %s143 = sshll.u32 [#allocation7], 4
          %s144 = int_to_ptr.vmem [resolvable:$true] %s143
          %146 = dma.hbm_to_vmem [thread:$0]  %s2, 16, %s144, [#allocation6]
        $region20: #{bottleneck_block.10} parent=11 // pred_fallthru
          _
      $region12: #{bottleneck_block.10} parent=5 // pred_fallthru
        _
      %p147 = scmp.lt.s32.totalorder %s16, 2
      // Predicated region
      $region21: #{bottleneck_block.10} parent=5 // pred_check
        %p148 = pneg %p147
      $region22: #{bottleneck_block.10} parent=5 // pred_check_branch
        %150 = sbr.rel (%p148) target = $region24
      $region23: #{bottleneck_block.10} parent=5 // pred_region
        // Predicated region
        $region25: #{bottleneck_block.10} parent=23 // pred_check
          %p151 = pneg %p36
        $region26: #{bottleneck_block.10} parent=23 // pred_check_branch
          %153 = sbr.rel (%p151) target = $region28
        $region27: #{bottleneck_block.10} parent=23 // pred_region
          %s154 = sand.u32 %s26, 1
          %s155 = scalar_lea.sflag [#allocation3], %s154
          %s156 = sand.u32 %s26, 1
          %s157 = smul.addr %s156, 128
          %s158 = scalar_lea.vmem [#allocation2], %s157
          %s160 = ssub.s32 2048, 2048
          %161 = vsyncadd %s155, %s160
          %s162 = smul.addr %s16, 16
          %s163 = smul.addr %s162, 128
          %s164 = scalar_lea.hbm %s0, %s163
          %s165 = sshll.u32 %s158, 4
          %s166 = int_to_ptr.vmem [resolvable:$true] %s165
          %171 = dma.hbm_to_vmem [thread:$0]  %s164, 2048, %s166, %s155, 128, 128, 8
        $region28: #{bottleneck_block.10} parent=23 // pred_fallthru
          _
      $region24: #{bottleneck_block.10} parent=5 // pred_fallthru
        _
      %p172 = scmp.le.s32.totalorder 1, %s16
      %p173 = scmp.lt.s32.totalorder %s16, 3
      %p174 = pnand %p172, %p173
      %p175 = pneg %p174
      // Predicated region
      $region29: #{bottleneck_block.10} parent=5 // pred_check
        _
      $region30: #{bottleneck_block.10} parent=5 // pred_check_branch
        %177 = sbr.rel (%p174) target = $region32
      $region31: #{bottleneck_block.10} parent=5 // pred_region
        %s178 = ssub.s32 %s16, 1
        %s179 = sand.u32 %s29, 1
        %s180 = scalar_lea.sflag [#allocation3], %s179
        %s181 = sand.u32 %s29, 1
        %s182 = smul.addr %s181, 128
        %s183 = scalar_lea.vmem [#allocation2], %s182
        // Predicated region
        $region33: #{bottleneck_block.10} parent=31 // pred_check
          %p184 = pneg %p42
        $region34: #{bottleneck_block.10} parent=31 // pred_check_branch
          %186 = sbr.rel (%p184) target = $region36
        $region35: #{bottleneck_block.10} parent=31 // pred_region
          %187 = dma.done %s180, 2048
        $region36: #{bottleneck_block.10} parent=31 // pred_fallthru
          _
        // Predicated region
        $region37: #{bottleneck_block.10} parent=31 // pred_check
          %p188 = pneg %p63
        $region38: #{bottleneck_block.10} parent=31 // pred_check_branch
          %190 = sbr.rel (%p188) target = $region40
        $region39: #{bottleneck_block.10} parent=31 // pred_region
          %191 = dma.done [#allocation6], 16
        $region40: #{bottleneck_block.10} parent=31 // pred_fallthru
          _
        // Predicated region
        $region41: #{bottleneck_block.10} parent=31 // pred_check
          %p192 = pneg %p84
        $region42: #{bottleneck_block.10} parent=31 // pred_check_branch
          %194 = sbr.rel (%p192) target = $region44
        $region43: #{bottleneck_block.10} parent=31 // pred_region
          %195 = dma.done [#allocation6], 16
        $region44: #{bottleneck_block.10} parent=31 // pred_fallthru
          _
        %s196 = sand.u32 %s29, 1
        %s197 = scalar_lea.sflag [#allocation3], %s196
        %s198 = sand.u32 %s29, 1
        %s199 = smul.addr %s198, 128
        %s200 = scalar_lea.vmem [#allocation2], %s199
        %p201 = pneg %p42
        %p202 = pneg %p39
        %p203 = pneg %p63
        %p204 = pneg %p60
        %p205 = pneg %p84
        %p206 = pneg %p81
        %p207 = pneg %p110
        %p208 = pneg %p107
        %s209 = sand.u32 %s97, 1
        %s210 = scalar_lea.sflag [#allocation4], %s209
        %s211 = sand.u32 %s97, 1
        %s212 = smul.addr %s211, 32
        %s213 = scalar_lea.vmem [#allocation8], %s212
        %v214 = vld [vmem:[%s183] sm:$0xff]
        %v215 = vld [vmem:[%s183 + $0x10] sm:$0xff]
        %v216 = vld [vmem:[%s183 + $0x20] sm:$0xff]
        %v217 = vld [vmem:[%s183 + $0x30] sm:$0xff]
        %v218 = vld [vmem:[%s183 + $0x40] sm:$0xff]
        %v219 = vld [vmem:[%s183 + $0x50] sm:$0xff]
        %v220 = vld [vmem:[%s183 + $0x60] sm:$0xff]
        %v221 = vld [vmem:[%s183 + $0x70] sm:$0xff]
        %v222 = vld [vmem:[#allocation5] sm:$0x1]
        %v224 = vlaneseq
        %v225 = vshrl.u32 %v224, 7
        %v226 = vsub.s32 0, %v225
        %v227 = vrot.slane %v222, %v226
        %v229 = vmul.f32 %v214, %v227
        %v230 = vmul.f32 %v215, %v227
        %v231 = vmul.f32 %v216, %v227
        %v232 = vmul.f32 %v217, %v227
        %v233 = vmul.f32 %v218, %v227
        %v234 = vmul.f32 %v219, %v227
        %v235 = vmul.f32 %v220, %v227
        %v236 = vmul.f32 %v221, %v227
        %v237 = vld [vmem:[#allocation7] sm:$0x1]
        %v239 = vlaneseq
        %v240 = vshrl.u32 %v239, 7
        %v241 = vsub.s32 0, %v240
        %v242 = vrot.slane %v237, %v241
        %v244 = vadd.f32 %v229, %v242
        %v245 = vadd.f32 %v230, %v242
        %v246 = vadd.f32 %v231, %v242
        %v247 = vadd.f32 %v232, %v242
        %v248 = vadd.f32 %v233, %v242
        %v249 = vadd.f32 %v234, %v242
        %v250 = vadd.f32 %v235, %v242
        %v251 = vadd.f32 %v236, %v242
        %v252 = vmax.f32 %v244, 0.0
        %v253 = vmax.f32 %v245, 0.0
        %v254 = vmax.f32 %v246, 0.0
        %v255 = vmax.f32 %v247, 0.0
        %v256 = vmax.f32 %v248, 0.0
        %v257 = vmax.f32 %v249, 0.0
        %v258 = vmax.f32 %v250, 0.0
        %v259 = vmax.f32 %v251, 0.0
        %v260 = vpack.c.bf16 %v252, %v252
        %v261 = vpack.c.bf16 %v253, %v253
        %v262 = vpack.c.bf16 %v254, %v254
        %v263 = vpack.c.bf16 %v255, %v255
        %v264 = vpack.c.bf16 %v256, %v256
        %v265 = vpack.c.bf16 %v257, %v257
        %v266 = vpack.c.bf16 %v258, %v258
        %v267 = vpack.c.bf16 %v259, %v259
        %vm268 = vcmask 27648
        %269 = vst.msk [vmem:[%s213] sm:$0xf] %vm268, %v260
        %270 = vst.msk [vmem:[%s213 + $0x4] sm:$0xf] %vm268, %v261
        %271 = vst.msk [vmem:[%s213 + $0x8] sm:$0xf] %vm268, %v262
        %272 = vst.msk [vmem:[%s213 + $0xc] sm:$0xf] %vm268, %v263
        %273 = vst.msk [vmem:[%s213 + $0x10] sm:$0xf] %vm268, %v264
        %274 = vst.msk [vmem:[%s213 + $0x14] sm:$0xf] %vm268, %v265
        %275 = vst.msk [vmem:[%s213 + $0x18] sm:$0xf] %vm268, %v266
        %276 = vst.msk [vmem:[%s213 + $0x1c] sm:$0xf] %vm268, %v267
        %s277 = sand.u32 %s97, 1
        %s278 = scalar_lea.sflag [#allocation4], %s277
        %s279 = sand.u32 %s97, 1
        %s280 = smul.addr %s279, 32
        %s281 = scalar_lea.vmem [#allocation8], %s280
        // Predicated region
        $region45: #{bottleneck_block.10} parent=31 // pred_check
          %p282 = pneg %p107
        $region46: #{bottleneck_block.10} parent=31 // pred_check_branch
          %284 = sbr.rel (%p282) target = $region48
        $region47: #{bottleneck_block.10} parent=31 // pred_region
          %s286 = ssub.s32 512, 512
          %287 = vsyncadd %s278, %s286
          %s288 = smul.addr %s21, 8
          %s289 = smul.addr %s288, 64
          %s290 = scalar_lea.hbm %s3, %s289
          %s291 = sshll.u32 %s281, 4
          %s292 = int_to_ptr.vmem [resolvable:$true] %s291
          %297 = dma.vmem_to_hbm [thread:$0]  %s292, 512, %s290, %s278, 64, 64, 4
        $region48: #{bottleneck_block.10} parent=31 // pred_fallthru
          _
      $region32: #{bottleneck_block.10} parent=5 // pred_fallthru
        _
      %p298 = scmp.le.s32.totalorder 2, %s16
      // Predicated region
      $region49: #{bottleneck_block.10} parent=5 // pred_check
        %p299 = pneg %p298
      $region50: #{bottleneck_block.10} parent=5 // pred_check_branch
        %301 = sbr.rel (%p299) target = $region52
      $region51: #{bottleneck_block.10} parent=5 // pred_region
        %s302 = ssub.s32 %s16, 2
        // Predicated region
        $region53: #{bottleneck_block.10} parent=51 // pred_check
          %p303 = pneg %p113
        $region54: #{bottleneck_block.10} parent=51 // pred_check_branch
          %305 = sbr.rel (%p303) target = $region56
        $region55: #{bottleneck_block.10} parent=51 // pred_region
          %s306 = sand.u32 %s98, 1
          %s307 = scalar_lea.sflag [#allocation4], %s306
          %s308 = sand.u32 %s98, 1
          %s309 = smul.addr %s308, 32
          %s310 = scalar_lea.vmem [#allocation8], %s309
          %311 = dma.done %s307, 512
        $region56: #{bottleneck_block.10} parent=51 // pred_fallthru
          _
      $region52: #{bottleneck_block.10} parent=5 // pred_fallthru
        _
    $region6: #{bottleneck_block.10} parent=1 // loop_footer
      %s20 = sadd.s32 1, %s16
    $region7: #{bottleneck_block.10} parent=1 // loop_footer_branch
      %15 = sbr.rel target = $region3
    $region8: #{bottleneck_block.10} parent=1 // loop_exit
      _
    %312 = vsyncpa [#allocation3], 1
    %s313 = scalar_lea.sflag [#allocation3], 1
    %314 = vsyncpa %s313, 1
    %315 = vsyncpa [#allocation6], 1
    %316 = vsyncpa [#allocation4], 1
    %s317 = scalar_lea.sflag [#allocation4], 1
    %318 = vsyncpa %s317, 1

// kernel: bottleneck_block.13
$region0: #{bottleneck_block.13}
  #allocation0 [shape = 'u32[]', space=smem, size = 0x4, offset = 0x4, fixed_abs, tag = 'smem constant byte address 0x4 - core index']
  #allocation1 [shape = 'u32[144,128]{1,0:T(1,128)}', space=vmem, size = 0x12000, scoped, tag = 'internal scratch']
  %s0 = inlined_call_operand.hbm [shape: f32[128,16], index: 0, kind: input, shape index: {}]
  %s1 = inlined_call_operand.hbm [shape: f32[1,16], index: 1, kind: input, shape index: {}]
  %s2 = inlined_call_operand.hbm [shape: f32[1,16], index: 2, kind: input, shape index: {}]
  %s3 = inlined_call_operand.hbm [shape: f32[128,16], index: 3, kind: input, shape index: {}]
  %s4 = inlined_call_operand.hbm [shape: f32[1,16], index: 4, kind: input, shape index: {}]
  %s5 = inlined_call_operand.hbm [shape: f32[1,16], index: 5, kind: input, shape index: {}]
  %s6 = inlined_call_operand.hbm [shape: f32[128,16], index: 6, kind: output, shape index: {}]
  %s7 = sld [smem:[#allocation0]]
  $region58: #{bottleneck_block.13} parent=0
    _
  %s9 = ssub.s32 1, %s7
  %s10 = scalar_select 0, %s9, %s7
  $region1: #{bottleneck_block.13} parent=0
    #allocation2 [shape = 'u8[65536]{0}', space=vmem, size = 0x10000, scoped, tag = 'input window, operand 0, single buffered']
    #allocation3 [shape = 's32[1]{0}', space=sflag, size = 0x4, scoped, tag = 'scoped memory for bottleneck_block.13']
    #allocation4 [shape = 's32[1]{0}', space=sflag, size = 0x4, scoped, tag = 'scoped memory for bottleneck_block.13']
    #allocation5 [shape = 'u8[512]{0}', space=vmem, size = 0x400, scoped, tag = 'input window, operand 1, single buffered']
    #allocation6 [shape = 's32[1]{0}', space=sflag, size = 0x4, scoped, tag = 'scoped memory for bottleneck_block.13']
    #allocation7 [shape = 'u8[512]{0}', space=vmem, size = 0x400, scoped, tag = 'input window, operand 2, single buffered']
    #allocation8 [shape = 'u8[65536]{0}', space=vmem, size = 0x10000, scoped, tag = 'input window, operand 3, single buffered']
    #allocation9 [shape = 's32[1]{0}', space=sflag, size = 0x4, scoped, tag = 'scoped memory for bottleneck_block.13']
    #allocation10 [shape = 'u8[512]{0}', space=vmem, size = 0x400, scoped, tag = 'input window, operand 4, single buffered']
    #allocation11 [shape = 'u8[512]{0}', space=vmem, size = 0x400, scoped, tag = 'input window, operand 5, single buffered']
    #allocation12 [shape = 's32[1]{0}', space=sflag, size = 0x4, scoped, tag = 'scoped memory for bottleneck_block.13']
    #allocation13 [shape = 'u8[65536]{0}', space=vmem, size = 0x10000, scoped, tag = 'output window, operand 0, single buffered']
    %11 = vsyncpa [#allocation3], 0
    %12 = vsyncpa [#allocation6], 0
    %13 = vsyncpa [#allocation9], 0
    %14 = vsyncpa [#allocation12], 0
    %15 = vsyncpa [#allocation4], 0
    // Predicated region
    $region2: #{bottleneck_block.13} parent=1 // pred_check
      _
    $region3: #{bottleneck_block.13} parent=1 // pred_check_branch
      %17 = sbr.rel (0) target = $region5
    $region4: #{bottleneck_block.13} parent=1 // pred_region
      %s19 = ssub.s32 2048, 2048
      %20 = vsyncadd [#allocation3], %s19
      %s21 = sshll.u32 [#allocation2], 4
      %s22 = int_to_ptr.vmem [resolvable:$true] %s21
      %27 = dma.hbm_to_vmem [thread:$0]  %s0, 2048, %s22, [#allocation3], 128, 128, 8
    $region5: #{bottleneck_block.13} parent=1 // pred_fallthru
      _
    // Predicated region
    $region6: #{bottleneck_block.13} parent=1 // pred_check
      _
    $region7: #{bottleneck_block.13} parent=1 // pred_check_branch
      %29 = sbr.rel (0) target = $region9
    $region8: #{bottleneck_block.13} parent=1 // pred_region
      %s31 = ssub.s32 16, 16
      %32 = vsyncadd [#allocation6], %s31
      %s34 = sshll.u32 [#allocation5], 4
      %s35 = int_to_ptr.vmem [resolvable:$true] %s34
      %37 = dma.hbm_to_vmem [thread:$0]  %s1, 16, %s35, [#allocation6]
    $region9: #{bottleneck_block.13} parent=1 // pred_fallthru
      _
    // Predicated region
    $region10: #{bottleneck_block.13} parent=1 // pred_check
      _
    $region11: #{bottleneck_block.13} parent=1 // pred_check_branch
      %39 = sbr.rel (0) target = $region13
    $region12: #{bottleneck_block.13} parent=1 // pred_region
      %s41 = ssub.s32 16, 16
      %42 = vsyncadd [#allocation6], %s41
      %s44 = sshll.u32 [#allocation7], 4
      %s45 = int_to_ptr.vmem [resolvable:$true] %s44
      %47 = dma.hbm_to_vmem [thread:$0]  %s2, 16, %s45, [#allocation6]
    $region13: #{bottleneck_block.13} parent=1 // pred_fallthru
      _
    // Predicated region
    $region14: #{bottleneck_block.13} parent=1 // pred_check
      _
    $region15: #{bottleneck_block.13} parent=1 // pred_check_branch
      %49 = sbr.rel (0) target = $region17
    $region16: #{bottleneck_block.13} parent=1 // pred_region
      %s51 = ssub.s32 2048, 2048
      %52 = vsyncadd [#allocation9], %s51
      %s53 = sshll.u32 [#allocation8], 4
      %s54 = int_to_ptr.vmem [resolvable:$true] %s53
      %59 = dma.hbm_to_vmem [thread:$0]  %s3, 2048, %s54, [#allocation9], 128, 128, 8
    $region17: #{bottleneck_block.13} parent=1 // pred_fallthru
      _
    // Predicated region
    $region18: #{bottleneck_block.13} parent=1 // pred_check
      _
    $region19: #{bottleneck_block.13} parent=1 // pred_check_branch
      %61 = sbr.rel (0) target = $region21
    $region20: #{bottleneck_block.13} parent=1 // pred_region
      %s63 = ssub.s32 16, 16
      %64 = vsyncadd [#allocation9], %s63
      %s66 = sshll.u32 [#allocation10], 4
      %s67 = int_to_ptr.vmem [resolvable:$true] %s66
      %69 = dma.hbm_to_vmem [thread:$0]  %s4, 16, %s67, [#allocation9]
    $region21: #{bottleneck_block.13} parent=1 // pred_fallthru
      _
    // Predicated region
    $region22: #{bottleneck_block.13} parent=1 // pred_check
      _
    $region23: #{bottleneck_block.13} parent=1 // pred_check_branch
      %71 = sbr.rel (0) target = $region25
    $region24: #{bottleneck_block.13} parent=1 // pred_region
      %s73 = ssub.s32 16, 16
      %74 = vsyncadd [#allocation12], %s73
      %s76 = sshll.u32 [#allocation11], 4
      %s77 = int_to_ptr.vmem [resolvable:$true] %s76
      %79 = dma.hbm_to_vmem [thread:$0]  %s5, 16, %s77, [#allocation12]
    $region25: #{bottleneck_block.13} parent=1 // pred_fallthru
      _
    // Predicated region
    $region26: #{bottleneck_block.13} parent=1 // pred_check
      _
    $region27: #{bottleneck_block.13} parent=1 // pred_check_branch
      %81 = sbr.rel (0) target = $region29
    $region28: #{bottleneck_block.13} parent=1 // pred_region
      %82 = dma.done [#allocation3], 2048
    $region29: #{bottleneck_block.13} parent=1 // pred_fallthru
      _
    // Predicated region
    $region30: #{bottleneck_block.13} parent=1 // pred_check
      _
    $region31: #{bottleneck_block.13} parent=1 // pred_check_branch
      %84 = sbr.rel (0) target = $region33
    $region32: #{bottleneck_block.13} parent=1 // pred_region
      %85 = dma.done [#allocation6], 16
    $region33: #{bottleneck_block.13} parent=1 // pred_fallthru
      _
    // Predicated region
    $region34: #{bottleneck_block.13} parent=1 // pred_check
      _
    $region35: #{bottleneck_block.13} parent=1 // pred_check_branch
      %87 = sbr.rel (0) target = $region37
    $region36: #{bottleneck_block.13} parent=1 // pred_region
      %88 = dma.done [#allocation6], 16
    $region37: #{bottleneck_block.13} parent=1 // pred_fallthru
      _
    // Predicated region
    $region38: #{bottleneck_block.13} parent=1 // pred_check
      _
    $region39: #{bottleneck_block.13} parent=1 // pred_check_branch
      %90 = sbr.rel (0) target = $region41
    $region40: #{bottleneck_block.13} parent=1 // pred_region
      %91 = dma.done [#allocation9], 2048
    $region41: #{bottleneck_block.13} parent=1 // pred_fallthru
      _
    // Predicated region
    $region42: #{bottleneck_block.13} parent=1 // pred_check
      _
    $region43: #{bottleneck_block.13} parent=1 // pred_check_branch
      %93 = sbr.rel (0) target = $region45
    $region44: #{bottleneck_block.13} parent=1 // pred_region
      %94 = dma.done [#allocation9], 16
    $region45: #{bottleneck_block.13} parent=1 // pred_fallthru
      _
    // Predicated region
    $region46: #{bottleneck_block.13} parent=1 // pred_check
      _
    $region47: #{bottleneck_block.13} parent=1 // pred_check_branch
      %96 = sbr.rel (0) target = $region49
    $region48: #{bottleneck_block.13} parent=1 // pred_region
      %97 = dma.done [#allocation12], 16
    $region49: #{bottleneck_block.13} parent=1 // pred_fallthru
      _
    %v98 = vld [vmem:[#allocation2] sm:$0xff]
    %v99 = vld [vmem:[#allocation2 + $0x8] sm:$0xff]
    %v100 = vld [vmem:[#allocation2 + $0x10] sm:$0xff]
    %v101 = vld [vmem:[#allocation2 + $0x18] sm:$0xff]
    %v102 = vld [vmem:[#allocation2 + $0x20] sm:$0xff]
    %v103 = vld [vmem:[#allocation2 + $0x28] sm:$0xff]
    %v104 = vld [vmem:[#allocation2 + $0x30] sm:$0xff]
    %v105 = vld [vmem:[#allocation2 + $0x38] sm:$0xff]
    %v106 = vld [vmem:[#allocation2 + $0x40] sm:$0xff]
    %v107 = vld [vmem:[#allocation2 + $0x48] sm:$0xff]
    %v108 = vld [vmem:[#allocation2 + $0x50] sm:$0xff]
    %v109 = vld [vmem:[#allocation2 + $0x58] sm:$0xff]
    %v110 = vld [vmem:[#allocation2 + $0x60] sm:$0xff]
    %v111 = vld [vmem:[#allocation2 + $0x68] sm:$0xff]
    %v112 = vld [vmem:[#allocation2 + $0x70] sm:$0xff]
    %v113 = vld [vmem:[#allocation2 + $0x78] sm:$0xff]
    %v114 = vld [vmem:[#allocation5] sm:$0x1]
    %v116 = vlaneseq
    %v117 = vshrl.u32 %v116, 7
    %v118 = vsub.s32 0, %v117
    %v119 = vrot.slane %v114, %v118
    %v121 = vmul.f32 %v98, %v119
    %v122 = vmul.f32 %v99, %v119
    %v123 = vmul.f32 %v100, %v119
    %v124 = vmul.f32 %v101, %v119
    %v125 = vmul.f32 %v102, %v119
    %v126 = vmul.f32 %v103, %v119
    %v127 = vmul.f32 %v104, %v119
    %v128 = vmul.f32 %v105, %v119
    %v129 = vmul.f32 %v106, %v119
    %v130 = vmul.f32 %v107, %v119
    %v131 = vmul.f32 %v108, %v119
    %v132 = vmul.f32 %v109, %v119
    %v133 = vmul.f32 %v110, %v119
    %v134 = vmul.f32 %v111, %v119
    %v135 = vmul.f32 %v112, %v119
    %v136 = vmul.f32 %v113, %v119
    %v137 = vld [vmem:[#allocation7] sm:$0x1]
    %v139 = vlaneseq
    %v140 = vshrl.u32 %v139, 7
    %v141 = vsub.s32 0, %v140
    %v142 = vrot.slane %v137, %v141
    %v144 = vadd.f32 %v121, %v142
    %v145 = vadd.f32 %v122, %v142
    %v146 = vadd.f32 %v123, %v142
    %v147 = vadd.f32 %v124, %v142
    %v148 = vadd.f32 %v125, %v142
    %v149 = vadd.f32 %v126, %v142
    %v150 = vadd.f32 %v127, %v142
    %v151 = vadd.f32 %v128, %v142
    %v152 = vadd.f32 %v129, %v142
    %v153 = vadd.f32 %v130, %v142
    %v154 = vadd.f32 %v131, %v142
    %v155 = vadd.f32 %v132, %v142
    %v156 = vadd.f32 %v133, %v142
    %v157 = vadd.f32 %v134, %v142
    %v158 = vadd.f32 %v135, %v142
    %v159 = vadd.f32 %v136, %v142
    %v160 = vmax.f32 %v144, 0.0
    %v161 = vmax.f32 %v145, 0.0
    %v162 = vmax.f32 %v146, 0.0
    %v163 = vmax.f32 %v147, 0.0
    %v164 = vmax.f32 %v148, 0.0
    %v165 = vmax.f32 %v149, 0.0
    %v166 = vmax.f32 %v150, 0.0
    %v167 = vmax.f32 %v151, 0.0
    %v168 = vmax.f32 %v152, 0.0
    %v169 = vmax.f32 %v153, 0.0
    %v170 = vmax.f32 %v154, 0.0
    %v171 = vmax.f32 %v155, 0.0
    %v172 = vmax.f32 %v156, 0.0
    %v173 = vmax.f32 %v157, 0.0
    %v174 = vmax.f32 %v158, 0.0
    %v175 = vmax.f32 %v159, 0.0
    %v176 = vld [vmem:[#allocation8] sm:$0xff]
    %v177 = vld [vmem:[#allocation8 + $0x8] sm:$0xff]
    %v178 = vld [vmem:[#allocation8 + $0x10] sm:$0xff]
    %v179 = vld [vmem:[#allocation8 + $0x18] sm:$0xff]
    %v180 = vld [vmem:[#allocation8 + $0x20] sm:$0xff]
    %v181 = vld [vmem:[#allocation8 + $0x28] sm:$0xff]
    %v182 = vld [vmem:[#allocation8 + $0x30] sm:$0xff]
    %v183 = vld [vmem:[#allocation8 + $0x38] sm:$0xff]
    %v184 = vld [vmem:[#allocation8 + $0x40] sm:$0xff]
    %v185 = vld [vmem:[#allocation8 + $0x48] sm:$0xff]
    %v186 = vld [vmem:[#allocation8 + $0x50] sm:$0xff]
    %v187 = vld [vmem:[#allocation8 + $0x58] sm:$0xff]
    %v188 = vld [vmem:[#allocation8 + $0x60] sm:$0xff]
    %v189 = vld [vmem:[#allocation8 + $0x68] sm:$0xff]
    %v190 = vld [vmem:[#allocation8 + $0x70] sm:$0xff]
    %v191 = vld [vmem:[#allocation8 + $0x78] sm:$0xff]
    %v192 = vld [vmem:[#allocation10] sm:$0x1]
    %v194 = vlaneseq
    %v195 = vshrl.u32 %v194, 7
    %v196 = vsub.s32 0, %v195
    %v197 = vrot.slane %v192, %v196
    %v199 = vmul.f32 %v176, %v197
    %v200 = vmul.f32 %v177, %v197
    %v201 = vmul.f32 %v178, %v197
    %v202 = vmul.f32 %v179, %v197
    %v203 = vmul.f32 %v180, %v197
    %v204 = vmul.f32 %v181, %v197
    %v205 = vmul.f32 %v182, %v197
    %v206 = vmul.f32 %v183, %v197
    %v207 = vmul.f32 %v184, %v197
    %v208 = vmul.f32 %v185, %v197
    %v209 = vmul.f32 %v186, %v197
    %v210 = vmul.f32 %v187, %v197
    %v211 = vmul.f32 %v188, %v197
    %v212 = vmul.f32 %v189, %v197
    %v213 = vmul.f32 %v190, %v197
    %v214 = vmul.f32 %v191, %v197
    %v215 = vld [vmem:[#allocation11] sm:$0x1]
    %v217 = vlaneseq
    %v218 = vshrl.u32 %v217, 7
    %v219 = vsub.s32 0, %v218
    %v220 = vrot.slane %v215, %v219
    %v222 = vadd.f32 %v199, %v220
    %v223 = vadd.f32 %v200, %v220
    %v224 = vadd.f32 %v201, %v220
    %v225 = vadd.f32 %v202, %v220
    %v226 = vadd.f32 %v203, %v220
    %v227 = vadd.f32 %v204, %v220
    %v228 = vadd.f32 %v205, %v220
    %v229 = vadd.f32 %v206, %v220
    %v230 = vadd.f32 %v207, %v220
    %v231 = vadd.f32 %v208, %v220
    %v232 = vadd.f32 %v209, %v220
    %v233 = vadd.f32 %v210, %v220
    %v234 = vadd.f32 %v211, %v220
    %v235 = vadd.f32 %v212, %v220
    %v236 = vadd.f32 %v213, %v220
    %v237 = vadd.f32 %v214, %v220
    %v238 = vadd.f32 %v160, %v222
    %v239 = vadd.f32 %v161, %v223
    %v240 = vadd.f32 %v162, %v224
    %v241 = vadd.f32 %v163, %v225
    %v242 = vadd.f32 %v164, %v226
    %v243 = vadd.f32 %v165, %v227
    %v244 = vadd.f32 %v166, %v228
    %v245 = vadd.f32 %v167, %v229
    %v246 = vadd.f32 %v168, %v230
    %v247 = vadd.f32 %v169, %v231
    %v248 = vadd.f32 %v170, %v232
    %v249 = vadd.f32 %v171, %v233
    %v250 = vadd.f32 %v172, %v234
    %v251 = vadd.f32 %v173, %v235
    %v252 = vadd.f32 %v174, %v236
    %v253 = vadd.f32 %v175, %v237
    %v254 = vmax.f32 %v238, 0.0
    %v255 = vmax.f32 %v239, 0.0
    %v256 = vmax.f32 %v240, 0.0
    %v257 = vmax.f32 %v241, 0.0
    %v258 = vmax.f32 %v242, 0.0
    %v259 = vmax.f32 %v243, 0.0
    %v260 = vmax.f32 %v244, 0.0
    %v261 = vmax.f32 %v245, 0.0
    %v262 = vmax.f32 %v246, 0.0
    %v263 = vmax.f32 %v247, 0.0
    %v264 = vmax.f32 %v248, 0.0
    %v265 = vmax.f32 %v249, 0.0
    %v266 = vmax.f32 %v250, 0.0
    %v267 = vmax.f32 %v251, 0.0
    %v268 = vmax.f32 %v252, 0.0
    %v269 = vmax.f32 %v253, 0.0
    %vm270 = vcmask 130048
    %271 = vst.msk [vmem:[#allocation13] sm:$0xff] %vm270, %v254
    %272 = vst.msk [vmem:[#allocation13 + $0x8] sm:$0xff] %vm270, %v255
    %273 = vst.msk [vmem:[#allocation13 + $0x10] sm:$0xff] %vm270, %v256
    %274 = vst.msk [vmem:[#allocation13 + $0x18] sm:$0xff] %vm270, %v257
    %275 = vst.msk [vmem:[#allocation13 + $0x20] sm:$0xff] %vm270, %v258
    %276 = vst.msk [vmem:[#allocation13 + $0x28] sm:$0xff] %vm270, %v259
    %277 = vst.msk [vmem:[#allocation13 + $0x30] sm:$0xff] %vm270, %v260
    %278 = vst.msk [vmem:[#allocation13 + $0x38] sm:$0xff] %vm270, %v261
    %279 = vst.msk [vmem:[#allocation13 + $0x40] sm:$0xff] %vm270, %v262
    %280 = vst.msk [vmem:[#allocation13 + $0x48] sm:$0xff] %vm270, %v263
    %281 = vst.msk [vmem:[#allocation13 + $0x50] sm:$0xff] %vm270, %v264
    %282 = vst.msk [vmem:[#allocation13 + $0x58] sm:$0xff] %vm270, %v265
    %283 = vst.msk [vmem:[#allocation13 + $0x60] sm:$0xff] %vm270, %v266
    %284 = vst.msk [vmem:[#allocation13 + $0x68] sm:$0xff] %vm270, %v267
    %285 = vst.msk [vmem:[#allocation13 + $0x70] sm:$0xff] %vm270, %v268
    %286 = vst.msk [vmem:[#allocation13 + $0x78] sm:$0xff] %vm270, %v269
    // Predicated region
    $region50: #{bottleneck_block.13} parent=1 // pred_check
      _
    $region51: #{bottleneck_block.13} parent=1 // pred_check_branch
      %288 = sbr.rel (0) target = $region53
    $region52: #{bottleneck_block.13} parent=1 // pred_region
      %s290 = ssub.s32 2048, 2048
      %291 = vsyncadd [#allocation4], %s290
      %s292 = sshll.u32 [#allocation13], 4
      %s293 = int_to_ptr.vmem [resolvable:$true] %s292
      %298 = dma.vmem_to_hbm [thread:$0]  %s293, 2048, %s6, [#allocation4], 128, 128, 8
    $region53: #{bottleneck_block.13} parent=1 // pred_fallthru
      _
    // Predicated region
    $region54: #{bottleneck_block.13} parent=1 // pred_check
      _
    $region55: #{bottleneck_block.13} parent=1 // pred_check_branch
      %300 = sbr.rel (0) target = $region57
    $region56: #{bottleneck_block.13} parent=1 // pred_region
      %301 = dma.done [#allocation4], 2048
    $region57: #{bottleneck_block.13} parent=1 // pred_fallthru
      _
    %302 = vsyncpa [#allocation3], 1
    %303 = vsyncpa [#allocation6], 1
    %304 = vsyncpa [#allocation9], 1
    %305 = vsyncpa [#allocation12], 1
    %306 = vsyncpa [#allocation4], 1

// kernel: bottleneck_block.12
$region0: #{bottleneck_block.12}
  #allocation0 [shape = 'u32[]', space=smem, size = 0x4, offset = 0x4, fixed_abs, tag = 'smem constant byte address 0x4 - core index']
  #allocation1 [shape = 'u32[144,128]{1,0:T(1,128)}', space=vmem, size = 0x12000, scoped, tag = 'internal scratch']
  %s0 = inlined_call_operand.hbm [shape: bf16[128,4], index: 0, kind: input, shape index: {}]
  %s1 = inlined_call_operand.hbm [shape: bf16[4,16], index: 1, kind: input, shape index: {}]
  %s2 = inlined_call_operand.hbm [shape: f32[128,16], index: 2, kind: output, shape index: {0}]
  %s3 = inlined_call_operand.hbm [shape: f32[1,2,16], index: 3, kind: output, shape index: {1}]
  %4 = xla_tuple %s2, %s3
  %s5 = sld [smem:[#allocation0]]
  $region34: #{bottleneck_block.12} parent=0
    _
  %s7 = ssub.s32 1, %s5
  %s8 = scalar_select 0, %s7, %s5
  $region1: #{bottleneck_block.12} parent=0
    #allocation2 [shape = 'u8[32768]{0}', space=vmem, size = 0x8000, scoped, tag = 'input window, operand 0, single buffered']
    #allocation3 [shape = 's32[1]{0}', space=sflag, size = 0x4, scoped, tag = 'scoped memory for bottleneck_block.12']
    #allocation4 [shape = 's32[1]{0}', space=sflag, size = 0x4, scoped, tag = 'scoped memory for bottleneck_block.12']
    #allocation5 [shape = 'u8[1024]{0}', space=vmem, size = 0x400, scoped, tag = 'input window, operand 1, single buffered']
    #allocation6 [shape = 's32[1]{0}', space=sflag, size = 0x4, scoped, tag = 'scoped memory for bottleneck_block.12']
    #allocation7 [shape = 'u8[65536]{0}', space=vmem, size = 0x10000, scoped, tag = 'output window, operand 0, single buffered']
    #allocation8 [shape = 'u8[1024]{0}', space=vmem, size = 0x400, scoped, tag = 'output window, operand 1, single buffered']
    #allocation9 [shape = 's32[1]{0}', space=sflag, size = 0x4, scoped, tag = 'scoped memory for bottleneck_block.12']
    %9 = vsyncpa [#allocation3], 0
    %10 = vsyncpa [#allocation6], 0
    %11 = vsyncpa [#allocation4], 0
    %12 = vsyncpa [#allocation9], 0
    // Predicated region
    $region2: #{bottleneck_block.12} parent=1 // pred_check
      _
    $region3: #{bottleneck_block.12} parent=1 // pred_check_branch
      %14 = sbr.rel (0) target = $region5
    $region4: #{bottleneck_block.12} parent=1 // pred_region
      %s16 = ssub.s32 1024, 1024
      %17 = vsyncadd [#allocation3], %s16
      %s18 = sshll.u32 [#allocation2], 4
      %s19 = int_to_ptr.vmem [resolvable:$true] %s18
      %24 = dma.hbm_to_vmem [thread:$0]  %s0, 1024, %s19, [#allocation3], 64, 64, 4
    $region5: #{bottleneck_block.12} parent=1 // pred_fallthru
      _
    // Predicated region
    $region6: #{bottleneck_block.12} parent=1 // pred_check
      _
    $region7: #{bottleneck_block.12} parent=1 // pred_check_branch
      %26 = sbr.rel (0) target = $region9
    $region8: #{bottleneck_block.12} parent=1 // pred_region
      %s28 = ssub.s32 32, 32
      %29 = vsyncadd [#allocation6], %s28
      %s31 = sshll.u32 [#allocation5], 4
      %s32 = int_to_ptr.vmem [resolvable:$true] %s31
      %34 = dma.hbm_to_vmem [thread:$0]  %s1, 32, %s32, [#allocation6]
    $region9: #{bottleneck_block.12} parent=1 // pred_fallthru
      _
    // Predicated region
    $region10: #{bottleneck_block.12} parent=1 // pred_check
      _
    $region11: #{bottleneck_block.12} parent=1 // pred_check_branch
      %36 = sbr.rel (0) target = $region13
    $region12: #{bottleneck_block.12} parent=1 // pred_region
      %37 = dma.done [#allocation3], 1024
    $region13: #{bottleneck_block.12} parent=1 // pred_fallthru
      _
    // Predicated region
    $region14: #{bottleneck_block.12} parent=1 // pred_check
      _
    $region15: #{bottleneck_block.12} parent=1 // pred_check_branch
      %39 = sbr.rel (0) target = $region17
    $region16: #{bottleneck_block.12} parent=1 // pred_region
      %40 = dma.done [#allocation6], 32
    $region17: #{bottleneck_block.12} parent=1 // pred_fallthru
      _
    %v42 = vld [vmem:[#allocation2] sm:$0xf]
    %v43 = vld [vmem:[#allocation2 + $0x4] sm:$0xf]
    %v44 = vld [vmem:[#allocation2 + $0x8] sm:$0xf]
    %v45 = vld [vmem:[#allocation2 + $0xc] sm:$0xf]
    %v46 = vld [vmem:[#allocation2 + $0x10] sm:$0xf]
    %v47 = vld [vmem:[#allocation2 + $0x14] sm:$0xf]
    %v48 = vld [vmem:[#allocation2 + $0x18] sm:$0xf]
    %v49 = vld [vmem:[#allocation2 + $0x1c] sm:$0xf]
    %v50 = vld [vmem:[#allocation2 + $0x20] sm:$0xf]
    %v51 = vld [vmem:[#allocation2 + $0x24] sm:$0xf]
    %v52 = vld [vmem:[#allocation2 + $0x28] sm:$0xf]
    %v53 = vld [vmem:[#allocation2 + $0x2c] sm:$0xf]
    %v54 = vld [vmem:[#allocation2 + $0x30] sm:$0xf]
    %v55 = vld [vmem:[#allocation2 + $0x34] sm:$0xf]
    %v56 = vld [vmem:[#allocation2 + $0x38] sm:$0xf]
    %v57 = vld [vmem:[#allocation2 + $0x3c] sm:$0xf]
    %v58 = vld [vmem:[#allocation5] sm:$0x3]
    %v75 = vunpack.c.l.b16 %v42
    %v76 = vunpack.c.l.b16 %v43
    %v77 = vunpack.c.l.b16 %v44
    %v78 = vunpack.c.l.b16 %v45
    %v79 = vunpack.c.l.b16 %v46
    %v80 = vunpack.c.l.b16 %v47
    %v81 = vunpack.c.l.b16 %v48
    %v82 = vunpack.c.l.b16 %v49
    %v83 = vunpack.c.l.b16 %v50
    %v84 = vunpack.c.l.b16 %v51
    %v85 = vunpack.c.l.b16 %v52
    %v86 = vunpack.c.l.b16 %v53
    %v87 = vunpack.c.l.b16 %v54
    %v88 = vunpack.c.l.b16 %v55
    %v89 = vunpack.c.l.b16 %v56
    %v90 = vunpack.c.l.b16 %v57
    %v91 = vpack.c.b16 %v76, %v75
    %v92 = vpack.c.b16 %v78, %v77
    %v93 = vpack.c.b16 %v80, %v79
    %v94 = vpack.c.b16 %v82, %v81
    %v95 = vpack.c.b16 %v84, %v83
    %v96 = vpack.c.b16 %v86, %v85
    %v97 = vpack.c.b16 %v88, %v87
    %v98 = vpack.c.b16 %v90, %v89
    %vm99 = vcmask 31744
    %v101 = vsel %vm99, %v91, 0
    %v104 = vsel %vm99, %v92, 0
    %v107 = vsel %vm99, %v93, 0
    %v110 = vsel %vm99, %v94, 0
    %v113 = vsel %vm99, %v95, 0
    %v116 = vsel %vm99, %v96, 0
    %v119 = vsel %vm99, %v97, 0
    %v122 = vsel %vm99, %v98, 0
    %vm124 = vcmask 1041408
    %v126 = vsel %vm124, %v58, 0
    %128 = vmatprep.subr.bf16.mxu0 0
    %129 = vmatpush1.bf16.msra.mxu0 %v126
    %130 = vmatprep.subr.bf16.mxu0 0
    %131 = vmatpush1.bf16.msra.mxu0 0
    %132 = vmatprep.subr.bf16.mxu0 0
    %133 = vmatpush1.bf16.msra.mxu0 0
    %134 = vmatprep.subr.bf16.mxu0 0
    %135 = vmatpush1.bf16.msra.mxu0 0
    %136 = vmatprep.subr.bf16.mxu0 0
    %137 = vmatpush1.bf16.msra.mxu0 0
    %138 = vmatprep.subr.bf16.mxu0 0
    %139 = vmatpush1.bf16.msra.mxu0 0
    %140 = vmatprep.subr.bf16.mxu0 0
    %141 = vmatpush1.bf16.msra.mxu0 0
    %142 = vmatprep.subr.bf16.mxu0 0
    %143 = vmatpush1.bf16.msra.mxu0 0
    %144 = vmatprep.subr.bf16.mxu0 0
    %145 = vmatpush1.bf16.msra.mxu0 0
    %146 = vmatprep.subr.bf16.mxu0 0
    %147 = vmatpush1.bf16.msra.mxu0 0
    %148 = vmatprep.subr.bf16.mxu0 0
    %149 = vmatpush1.bf16.msra.mxu0 0
    %150 = vmatprep.subr.bf16.mxu0 0
    %151 = vmatpush1.bf16.msra.mxu0 0
    %152 = vmatprep.subr.bf16.mxu0 0
    %153 = vmatpush1.bf16.msra.mxu0 0
    %154 = vmatprep.subr.bf16.mxu0 0
    %155 = vmatpush1.bf16.msra.mxu0 0
    %156 = vmatprep.subr.bf16.mxu0 0
    %157 = vmatpush1.bf16.msra.mxu0 0
    %158 = vmatprep.subr.bf16.mxu0 0
    %159 = vmatpush1.bf16.msra.mxu0 0
    %160 = vmatprep.mubr.bf16.mxu0 0
    %161 = vmatmul.mubr.bf16.gmra.mrb[0].mxu0 %v101
    %v162 = vpop.f32.mrb[0].mxu0
    %v163 = vadd.f32 0.0, %v162
    %v164 = vpop.f32.mrb[0].mxu0
    %v165 = vpop.f32.mrb[0].mxu0
    %v166 = vadd.f32 0.0, %v165
    %v167 = vpop.f32.mrb[0].mxu0
    %168 = vmatprep.mubr.bf16.mxu0 0
    %169 = vmatmul.mubr.bf16.gmra.mrb[0].mxu0 %v104
    %v170 = vpop.f32.mrb[0].mxu0
    %v171 = vadd.f32 0.0, %v170
    %v172 = vpop.f32.mrb[0].mxu0
    %v173 = vpop.f32.mrb[0].mxu0
    %v174 = vadd.f32 0.0, %v173
    %v175 = vpop.f32.mrb[0].mxu0
    %176 = vmatprep.mubr.bf16.mxu0 0
    %177 = vmatmul.mubr.bf16.gmra.mrb[0].mxu0 %v107
    %v178 = vpop.f32.mrb[0].mxu0
    %v179 = vadd.f32 0.0, %v178
    %v180 = vpop.f32.mrb[0].mxu0
    %v181 = vpop.f32.mrb[0].mxu0
    %v182 = vadd.f32 0.0, %v181
    %v183 = vpop.f32.mrb[0].mxu0
    %184 = vmatprep.mubr.bf16.mxu0 0
    %185 = vmatmul.mubr.bf16.gmra.mrb[0].mxu0 %v110
    %v186 = vpop.f32.mrb[0].mxu0
    %v187 = vadd.f32 0.0, %v186
    %v188 = vpop.f32.mrb[0].mxu0
    %v189 = vpop.f32.mrb[0].mxu0
    %v190 = vadd.f32 0.0, %v189
    %v191 = vpop.f32.mrb[0].mxu0
    %192 = vmatprep.mubr.bf16.mxu0 0
    %193 = vmatmul.mubr.bf16.gmra.mrb[0].mxu0 %v113
    %v194 = vpop.f32.mrb[0].mxu0
    %v195 = vadd.f32 0.0, %v194
    %v196 = vpop.f32.mrb[0].mxu0
    %v197 = vpop.f32.mrb[0].mxu0
    %v198 = vadd.f32 0.0, %v197
    %v199 = vpop.f32.mrb[0].mxu0
    %200 = vmatprep.mubr.bf16.mxu0 0
    %201 = vmatmul.mubr.bf16.gmra.mrb[0].mxu0 %v116
    %v202 = vpop.f32.mrb[0].mxu0
    %v203 = vadd.f32 0.0, %v202
    %v204 = vpop.f32.mrb[0].mxu0
    %v205 = vpop.f32.mrb[0].mxu0
    %v206 = vadd.f32 0.0, %v205
    %v207 = vpop.f32.mrb[0].mxu0
    %208 = vmatprep.mubr.bf16.mxu0 0
    %209 = vmatmul.mubr.bf16.gmra.mrb[0].mxu0 %v119
    %v210 = vpop.f32.mrb[0].mxu0
    %v211 = vadd.f32 0.0, %v210
    %v212 = vpop.f32.mrb[0].mxu0
    %v213 = vpop.f32.mrb[0].mxu0
    %v214 = vadd.f32 0.0, %v213
    %v215 = vpop.f32.mrb[0].mxu0
    %216 = vmatprep.mubr.bf16.mxu0 0
    %217 = vmatmul.mubr.bf16.gmra.mrb[0].mxu0 %v122
    %v218 = vpop.f32.mrb[0].mxu0
    %v219 = vadd.f32 0.0, %v218
    %v220 = vpop.f32.mrb[0].mxu0
    %v221 = vpop.f32.mrb[0].mxu0
    %v222 = vadd.f32 0.0, %v221
    %v223 = vpop.f32.mrb[0].mxu0
    %224 = vdwg.mxu0
    %vm225 = vcmask 130048
    %226 = vst.msk [vmem:[#allocation7] sm:$0xff] %vm225, %v163
    %227 = vst.msk [vmem:[#allocation7 + $0x8] sm:$0xff] %vm225, %v166
    %228 = vst.msk [vmem:[#allocation7 + $0x10] sm:$0xff] %vm225, %v171
    %229 = vst.msk [vmem:[#allocation7 + $0x18] sm:$0xff] %vm225, %v174
    %230 = vst.msk [vmem:[#allocation7 + $0x20] sm:$0xff] %vm225, %v179
    %231 = vst.msk [vmem:[#allocation7 + $0x28] sm:$0xff] %vm225, %v182
    %232 = vst.msk [vmem:[#allocation7 + $0x30] sm:$0xff] %vm225, %v187
    %233 = vst.msk [vmem:[#allocation7 + $0x38] sm:$0xff] %vm225, %v190
    %234 = vst.msk [vmem:[#allocation7 + $0x40] sm:$0xff] %vm225, %v195
    %235 = vst.msk [vmem:[#allocation7 + $0x48] sm:$0xff] %vm225, %v198
    %236 = vst.msk [vmem:[#allocation7 + $0x50] sm:$0xff] %vm225, %v203
    %237 = vst.msk [vmem:[#allocation7 + $0x58] sm:$0xff] %vm225, %v206
    %238 = vst.msk [vmem:[#allocation7 + $0x60] sm:$0xff] %vm225, %v211
    %239 = vst.msk [vmem:[#allocation7 + $0x68] sm:$0xff] %vm225, %v214
    %240 = vst.msk [vmem:[#allocation7 + $0x70] sm:$0xff] %vm225, %v219
    %241 = vst.msk [vmem:[#allocation7 + $0x78] sm:$0xff] %vm225, %v222
    %v242 = vsel %vm225, %v163, 0.0
    %v243 = vsel %vm225, %v166, 0.0
    %v244 = vadd.f32 %v242, %v243
    %v245 = vsel %vm225, %v171, 0.0
    %v246 = vadd.f32 %v244, %v245
    %v247 = vsel %vm225, %v174, 0.0
    %v248 = vadd.f32 %v246, %v247
    %v249 = vsel %vm225, %v179, 0.0
    %v250 = vadd.f32 %v248, %v249
    %v251 = vsel %vm225, %v182, 0.0
    %v252 = vadd.f32 %v250, %v251
    %v253 = vsel %vm225, %v187, 0.0
    %v254 = vadd.f32 %v252, %v253
    %v255 = vsel %vm225, %v190, 0.0
    %v256 = vadd.f32 %v254, %v255
    %v257 = vsel %vm225, %v195, 0.0
    %v258 = vadd.f32 %v256, %v257
    %v259 = vsel %vm225, %v198, 0.0
    %v260 = vadd.f32 %v258, %v259
    %v261 = vsel %vm225, %v203, 0.0
    %v262 = vadd.f32 %v260, %v261
    %v263 = vsel %vm225, %v206, 0.0
    %v264 = vadd.f32 %v262, %v263
    %v265 = vsel %vm225, %v211, 0.0
    %v266 = vadd.f32 %v264, %v265
    %v267 = vsel %vm225, %v214, 0.0
    %v268 = vadd.f32 %v266, %v267
    %v269 = vsel %vm225, %v219, 0.0
    %v270 = vadd.f32 %v268, %v269
    %v271 = vsel %vm225, %v222, 0.0
    %v272 = vadd.f32 %v270, %v271
    %v273 = vrot.slane %v272, 4
    %v274 = vadd.f32 %v272, %v273
    %v275 = vrot.slane %v274, 2
    %v276 = vadd.f32 %v274, %v275
    %v277 = vrot.slane %v276, 1
    %v278 = vadd.f32 %v276, %v277
    %vm279 = vcmask 122880
    %280 = vst.msk [vmem:[#allocation8] sm:$0x1] %vm279, %v278
    %v281 = vmul.f32 %v163, %v163
    %v282 = vmul.f32 %v166, %v166
    %v283 = vmul.f32 %v171, %v171
    %v284 = vmul.f32 %v174, %v174
    %v285 = vmul.f32 %v179, %v179
    %v286 = vmul.f32 %v182, %v182
    %v287 = vmul.f32 %v187, %v187
    %v288 = vmul.f32 %v190, %v190
    %v289 = vmul.f32 %v195, %v195
    %v290 = vmul.f32 %v198, %v198
    %v291 = vmul.f32 %v203, %v203
    %v292 = vmul.f32 %v206, %v206
    %v293 = vmul.f32 %v211, %v211
    %v294 = vmul.f32 %v214, %v214
    %v295 = vmul.f32 %v219, %v219
    %v296 = vmul.f32 %v222, %v222
    %v297 = vsel %vm225, %v281, 0.0
    %v298 = vsel %vm225, %v282, 0.0
    %v299 = vadd.f32 %v297, %v298
    %v300 = vsel %vm225, %v283, 0.0
    %v301 = vadd.f32 %v299, %v300
    %v302 = vsel %vm225, %v284, 0.0
    %v303 = vadd.f32 %v301, %v302
    %v304 = vsel %vm225, %v285, 0.0
    %v305 = vadd.f32 %v303, %v304
    %v306 = vsel %vm225, %v286, 0.0
    %v307 = vadd.f32 %v305, %v306
    %v308 = vsel %vm225, %v287, 0.0
    %v309 = vadd.f32 %v307, %v308
    %v310 = vsel %vm225, %v288, 0.0
    %v311 = vadd.f32 %v309, %v310
    %v312 = vsel %vm225, %v289, 0.0
    %v313 = vadd.f32 %v311, %v312
    %v314 = vsel %vm225, %v290, 0.0
    %v315 = vadd.f32 %v313, %v314
    %v316 = vsel %vm225, %v291, 0.0
    %v317 = vadd.f32 %v315, %v316
    %v318 = vsel %vm225, %v292, 0.0
    %v319 = vadd.f32 %v317, %v318
    %v320 = vsel %vm225, %v293, 0.0
    %v321 = vadd.f32 %v319, %v320
    %v322 = vsel %vm225, %v294, 0.0
    %v323 = vadd.f32 %v321, %v322
    %v324 = vsel %vm225, %v295, 0.0
    %v325 = vadd.f32 %v323, %v324
    %v326 = vsel %vm225, %v296, 0.0
    %v327 = vadd.f32 %v325, %v326
    %v328 = vrot.slane %v327, 4
    %v329 = vadd.f32 %v327, %v328
    %v330 = vrot.slane %v329, 2
    %v331 = vadd.f32 %v329, %v330
    %v332 = vrot.slane %v331, 1
    %v333 = vadd.f32 %v331, %v332
    %334 = vst.msk [vmem:[#allocation8 + $0x1] sm:$0x1] %vm279, %v333
    // Predicated region
    $region18: #{bottleneck_block.12} parent=1 // pred_check
      _
    $region19: #{bottleneck_block.12} parent=1 // pred_check_branch
      %336 = sbr.rel (0) target = $region21
    $region20: #{bottleneck_block.12} parent=1 // pred_region
      %s338 = ssub.s32 2048, 2048
      %339 = vsyncadd [#allocation4], %s338
      %s340 = sshll.u32 [#allocation7], 4
      %s341 = int_to_ptr.vmem [resolvable:$true] %s340
      %346 = dma.vmem_to_hbm [thread:$0]  %s341, 2048, %s2, [#allocation4], 128, 128, 8
    $region21: #{bottleneck_block.12} parent=1 // pred_fallthru
      _
    // Predicated region
    $region22: #{bottleneck_block.12} parent=1 // pred_check
      _
    $region23: #{bottleneck_block.12} parent=1 // pred_check_branch
      %348 = sbr.rel (0) target = $region25
    $region24: #{bottleneck_block.12} parent=1 // pred_region
      %s350 = ssub.s32 32, 32
      %351 = vsyncadd [#allocation9], %s350
      %s353 = sshll.u32 [#allocation8], 4
      %s354 = int_to_ptr.vmem [resolvable:$true] %s353
      %356 = dma.vmem_to_hbm [thread:$0]  %s354, 32, %s3, [#allocation9]
    $region25: #{bottleneck_block.12} parent=1 // pred_fallthru
      _
    // Predicated region
    $region26: #{bottleneck_block.12} parent=1 // pred_check
      _
    $region27: #{bottleneck_block.12} parent=1 // pred_check_branch
      %358 = sbr.rel (0) target = $region29
    $region28: #{bottleneck_block.12} parent=1 // pred_region
      %359 = dma.done [#allocation4], 2048
    $region29: #{bottleneck_block.12} parent=1 // pred_fallthru
      _
    // Predicated region
    $region30: #{bottleneck_block.12} parent=1 // pred_check
      _
    $region31: #{bottleneck_block.12} parent=1 // pred_check_branch
      %361 = sbr.rel (0) target = $region33
    $region32: #{bottleneck_block.12} parent=1 // pred_region
      %362 = dma.done [#allocation9], 32
    $region33: #{bottleneck_block.12} parent=1 // pred_fallthru
      _
    %363 = vsyncpa [#allocation3], 1
    %364 = vsyncpa [#allocation6], 1
    %365 = vsyncpa [#allocation4], 1
    %366 = vsyncpa [#allocation9], 1

// kernel: bottleneck_block.9
$region0: #{bottleneck_block.9}
  #allocation0 [shape = 'u32[]', space=smem, size = 0x4, offset = 0x4, fixed_abs, tag = 'smem constant byte address 0x4 - core index']
  #allocation1 [shape = 'u32[144,128]{1,0:T(1,128)}', space=vmem, size = 0x12000, scoped, tag = 'internal scratch']
  %s0 = inlined_call_operand.hbm [shape: bf16[2,90,4], index: 0, kind: input, shape index: {}]
  %s1 = inlined_call_operand.hbm [shape: bf16[2,90,4], index: 1, kind: input, shape index: {}]
  %s2 = inlined_call_operand.hbm [shape: bf16[2,90,4], index: 2, kind: input, shape index: {}]
  %s3 = inlined_call_operand.hbm [shape: bf16[2,90,4], index: 3, kind: input, shape index: {}]
  %s4 = inlined_call_operand.hbm [shape: bf16[3,3,4,4], index: 4, kind: input, shape index: {}]
  %s5 = inlined_call_operand.hbm [shape: f32[72,1], index: 5, kind: input, shape index: {}]
  %s6 = inlined_call_operand.hbm [shape: f32[2,72,4], index: 6, kind: output, shape index: {0}]
  %s7 = inlined_call_operand.hbm [shape: f32[2,2,4], index: 7, kind: output, shape index: {1}]
  %8 = xla_tuple %s6, %s7
  %s9 = sld [smem:[#allocation0]]
  $region89: #{bottleneck_block.9} parent=0
    _
  %s11 = ssub.s32 1, %s9
  %s12 = scalar_select 0, %s11, %s9
  $region1: #{bottleneck_block.9} parent=0
    #allocation2 [shape = 'u8[49152]{0}', space=vmem, size = 0xc000, scoped, tag = 'input window, operand 0']
    #allocation3 [shape = 's32[2]{0}', space=sflag, size = 0x8, scoped, tag = 'scoped memory for bottleneck_block.9']
    #allocation4 [shape = 's32[2]{0}', space=sflag, size = 0x8, scoped, tag = 'scoped memory for bottleneck_block.9']
    #allocation5 [shape = 'u8[49152]{0}', space=vmem, size = 0xc000, scoped, tag = 'input window, operand 1']
    #allocation6 [shape = 's32[2]{0}', space=sflag, size = 0x8, scoped, tag = 'scoped memory for bottleneck_block.9']
    #allocation7 [shape = 'u8[49152]{0}', space=vmem, size = 0xc000, scoped, tag = 'input window, operand 2']
    #allocation8 [shape = 'u8[49152]{0}', space=vmem, size = 0xc000, scoped, tag = 'input window, operand 3']
    #allocation9 [shape = 's32[2]{0}', space=sflag, size = 0x8, scoped, tag = 'scoped memory for bottleneck_block.9']
    #allocation10 [shape = 'u8[9216]{0}', space=vmem, size = 0x2400, scoped, tag = 'input window, operand 4, single buffered']
    #allocation11 [shape = 'u8[36864]{0}', space=vmem, size = 0x9000, scoped, tag = 'input window, operand 5, single buffered']
    #allocation12 [shape = 's32[1]{0}', space=sflag, size = 0x4, scoped, tag = 'scoped memory for bottleneck_block.9']
    #allocation13 [shape = 'u8[73728]{0}', space=vmem, size = 0x12000, scoped, tag = 'output window, operand 0']
    #allocation14 [shape = 'u8[2048]{0}', space=vmem, size = 0x800, scoped, tag = 'output window, operand 1']
    #allocation15 [shape = 's32[2]{0}', space=sflag, size = 0x8, scoped, tag = 'scoped memory for bottleneck_block.9']
    %13 = vsyncpa [#allocation3], 0
    %s14 = scalar_lea.sflag [#allocation3], 1
    %15 = vsyncpa %s14, 0
    %16 = vsyncpa [#allocation6], 0
    %s17 = scalar_lea.sflag [#allocation6], 1
    %18 = vsyncpa %s17, 0
    %19 = vsyncpa [#allocation9], 0
    %s20 = scalar_lea.sflag [#allocation9], 1
    %21 = vsyncpa %s20, 0
    %22 = vsyncpa [#allocation12], 0
    %23 = vsyncpa [#allocation4], 0
    %s24 = scalar_lea.sflag [#allocation4], 1
    %25 = vsyncpa %s24, 0
    %26 = vsyncpa [#allocation15], 0
    %s27 = scalar_lea.sflag [#allocation15], 1
    %28 = vsyncpa %s27, 0
    loop: start=0, step=1, limit=4
    $region2: #{bottleneck_block.9} parent=1 // loop_pre_header
      _
    $region3: #{bottleneck_block.9} parent=1 // loop_header
      %s30 = sphi 0, %s34
      %p31 = scmp.ge.s32.totalorder %s30, 4
      %s40 = sphi 0, %s42
      %s43 = sphi 0, %s40
      %s44 = sphi 0, %s43
      %s60 = sphi 0, %s44
      %s66 = sphi 0, %s68
      %s69 = sphi 0, %s66
      %s70 = sphi 0, %s69
      %s86 = sphi 0, %s70
      %s92 = sphi 0, %s94
      %s95 = sphi 0, %s92
      %s96 = sphi 0, %s95
      %s112 = sphi 0, %s96
      %s118 = sphi 0, %s120
      %s121 = sphi 0, %s118
      %s122 = sphi 0, %s121
      %s138 = sphi 0, %s122
      %s142 = sphi 0, %s142
      %s144 = sphi 0, %s142
      %s145 = sphi 0, %s144
      %s159 = sphi 0, %s145
      %s163 = sphi 0, %s163
      %s165 = sphi 0, %s163
      %s166 = sphi 0, %s165
      %s180 = sphi 0, %s166
      %s186 = sphi 0, %s188
      %s189 = sphi 0, %s186
      %s190 = sphi 0, %s189
      %s206 = sphi 0, %s190
      %s212 = sphi 0, %s214
      %s215 = sphi 0, %s212
      %s216 = sphi 0, %s215
      %s232 = sphi 0, %s216
    $region4: #{bottleneck_block.9} parent=1 // loop_header_branch
      %33 = sbr.rel (%p31) target = $region8
    $region5: #{bottleneck_block.9} parent=1 // loop_body
      %s35 = ssub.s32 %s30, 1
      %s36 = ssub.s32 %s30, 2
      %s37 = sadd.s32 %s30, 1
      %s38 = ssub.s32 %s30, %s37
      %p39 = scmp.eq.s32.totalorder %s38, 0
      %s41 = sadd.s32 %s40, 1
      %s42 = scalar_select %p39, %s40, %s41
      %p45 = pneg %p39
      %p46 = scmp.eq.s32.totalorder %s30, 1
      %p47 = por %p45, %p46
      %p48 = scmp.ne.s32.totalorder %s40, %s43
      %p49 = scmp.eq.s32.totalorder %s30, 0
      %p50 = por %p48, %p49
      %p51 = scmp.ne.s32.totalorder %s40, %s43
      %p52 = scmp.eq.s32.totalorder %s35, 1
      %p53 = por %p51, %p52
      %p54 = scmp.ne.s32.totalorder %s43, %s44
      %p55 = scmp.eq.s32.totalorder %s35, 0
      %p56 = por %p54, %p55
      %p57 = scmp.ne.s32.totalorder %s43, %s44
      %p58 = scmp.eq.s32.totalorder %s36, 1
      %p59 = por %p57, %p58
      %p61 = scmp.ne.s32.totalorder %s44, %s60
      %p62 = scmp.eq.s32.totalorder %s36, 0
      %p63 = por %p61, %p62
      %s64 = ssub.s32 %s30, %s37
      %p65 = scmp.eq.s32.totalorder %s64, 0
      %s67 = sadd.s32 %s66, 1
      %s68 = scalar_select %p65, %s66, %s67
      %p71 = pneg %p65
      %p72 = scmp.eq.s32.totalorder %s30, 1
      %p73 = por %p71, %p72
      %p74 = scmp.ne.s32.totalorder %s66, %s69
      %p75 = scmp.eq.s32.totalorder %s30, 0
      %p76 = por %p74, %p75
      %p77 = scmp.ne.s32.totalorder %s66, %s69
      %p78 = scmp.eq.s32.totalorder %s35, 1
      %p79 = por %p77, %p78
      %p80 = scmp.ne.s32.totalorder %s69, %s70
      %p81 = scmp.eq.s32.totalorder %s35, 0
      %p82 = por %p80, %p81
      %p83 = scmp.ne.s32.totalorder %s69, %s70
      %p84 = scmp.eq.s32.totalorder %s36, 1
      %p85 = por %p83, %p84
      %p87 = scmp.ne.s32.totalorder %s70, %s86
      %p88 = scmp.eq.s32.totalorder %s36, 0
      %p89 = por %p87, %p88
      %s90 = ssub.s32 %s30, %s37
      %p91 = scmp.eq.s32.totalorder %s90, 0
      %s93 = sadd.s32 %s92, 1
      %s94 = scalar_select %p91, %s92, %s93
      %p97 = pneg %p91
      %p98 = scmp.eq.s32.totalorder %s30, 1
      %p99 = por %p97, %p98
      %p100 = scmp.ne.s32.totalorder %s92, %s95
      %p101 = scmp.eq.s32.totalorder %s30, 0
      %p102 = por %p100, %p101
      %p103 = scmp.ne.s32.totalorder %s92, %s95
      %p104 = scmp.eq.s32.totalorder %s35, 1
      %p105 = por %p103, %p104
      %p106 = scmp.ne.s32.totalorder %s95, %s96
      %p107 = scmp.eq.s32.totalorder %s35, 0
      %p108 = por %p106, %p107
      %p109 = scmp.ne.s32.totalorder %s95, %s96
      %p110 = scmp.eq.s32.totalorder %s36, 1
      %p111 = por %p109, %p110
      %p113 = scmp.ne.s32.totalorder %s96, %s112
      %p114 = scmp.eq.s32.totalorder %s36, 0
      %p115 = por %p113, %p114
      %s116 = ssub.s32 %s30, %s37
      %p117 = scmp.eq.s32.totalorder %s116, 0
      %s119 = sadd.s32 %s118, 1
      %s120 = scalar_select %p117, %s118, %s119
      %p123 = pneg %p117
      %p124 = scmp.eq.s32.totalorder %s30, 1
      %p125 = por %p123, %p124
      %p126 = scmp.ne.s32.totalorder %s118, %s121
      %p127 = scmp.eq.s32.totalorder %s30, 0
      %p128 = por %p126, %p127
      %p129 = scmp.ne.s32.totalorder %s118, %s121
      %p130 = scmp.eq.s32.totalorder %s35, 1
      %p131 = por %p129, %p130
      %p132 = scmp.ne.s32.totalorder %s121, %s122
      %p133 = scmp.eq.s32.totalorder %s35, 0
      %p134 = por %p132, %p133
      %p135 = scmp.ne.s32.totalorder %s121, %s122
      %p136 = scmp.eq.s32.totalorder %s36, 1
      %p137 = por %p135, %p136
      %p139 = scmp.ne.s32.totalorder %s122, %s138
      %p140 = scmp.eq.s32.totalorder %s36, 0
      %p141 = por %p139, %p140
      %s143 = sadd.s32 %s142, 1
      %p146 = scmp.eq.s32.totalorder %s30, 1
      %p147 = scmp.ne.s32.totalorder %s142, %s144
      %p148 = scmp.eq.s32.totalorder %s30, 0
      %p149 = por %p147, %p148
      %p150 = scmp.ne.s32.totalorder %s142, %s144
      %p151 = scmp.eq.s32.totalorder %s35, 1
      %p152 = por %p150, %p151
      %p153 = scmp.ne.s32.totalorder %s144, %s145
      %p154 = scmp.eq.s32.totalorder %s35, 0
      %p155 = por %p153, %p154
      %p156 = scmp.ne.s32.totalorder %s144, %s145
      %p157 = scmp.eq.s32.totalorder %s36, 1
      %p158 = por %p156, %p157
      %p160 = scmp.ne.s32.totalorder %s145, %s159
      %p161 = scmp.eq.s32.totalorder %s36, 0
      %p162 = por %p160, %p161
      %s164 = sadd.s32 %s163, 1
      %p167 = scmp.eq.s32.totalorder %s30, 1
      %p168 = scmp.ne.s32.totalorder %s163, %s165
      %p169 = scmp.eq.s32.totalorder %s30, 0
      %p170 = por %p168, %p169
      %p171 = scmp.ne.s32.totalorder %s163, %s165
      %p172 = scmp.eq.s32.totalorder %s35, 1
      %p173 = por %p171, %p172
      %p174 = scmp.ne.s32.totalorder %s165, %s166
      %p175 = scmp.eq.s32.totalorder %s35, 0
      %p176 = por %p174, %p175
      %p177 = scmp.ne.s32.totalorder %s165, %s166
      %p178 = scmp.eq.s32.totalorder %s36, 1
      %p179 = por %p177, %p178
      %p181 = scmp.ne.s32.totalorder %s166, %s180
      %p182 = scmp.eq.s32.totalorder %s36, 0
      %p183 = por %p181, %p182
      %s184 = ssub.s32 %s30, %s37
      %p185 = scmp.eq.s32.totalorder %s184, 0
      %s187 = sadd.s32 %s186, 1
      %s188 = scalar_select %p185, %s186, %s187
      %p191 = pneg %p185
      %p192 = scmp.eq.s32.totalorder %s30, 1
      %p193 = por %p191, %p192
      %p194 = scmp.ne.s32.totalorder %s186, %s189
      %p195 = scmp.eq.s32.totalorder %s30, 0
      %p196 = por %p194, %p195
      %p197 = scmp.ne.s32.totalorder %s186, %s189
      %p198 = scmp.eq.s32.totalorder %s35, 1
      %p199 = por %p197, %p198
      %p200 = scmp.ne.s32.totalorder %s189, %s190
      %p201 = scmp.eq.s32.totalorder %s35, 0
      %p202 = por %p200, %p201
      %p203 = scmp.ne.s32.totalorder %s189, %s190
      %p204 = scmp.eq.s32.totalorder %s36, 1
      %p205 = por %p203, %p204
      %p207 = scmp.ne.s32.totalorder %s190, %s206
      %p208 = scmp.eq.s32.totalorder %s36, 0
      %p209 = por %p207, %p208
      %s210 = ssub.s32 %s30, %s37
      %p211 = scmp.eq.s32.totalorder %s210, 0
      %s213 = sadd.s32 %s212, 1
      %s214 = scalar_select %p211, %s212, %s213
      %p217 = pneg %p211
      %p218 = scmp.eq.s32.totalorder %s30, 1
      %p219 = por %p217, %p218
      %p220 = scmp.ne.s32.totalorder %s212, %s215
      %p221 = scmp.eq.s32.totalorder %s30, 0
      %p222 = por %p220, %p221
      %p223 = scmp.ne.s32.totalorder %s212, %s215
      %p224 = scmp.eq.s32.totalorder %s35, 1
      %p225 = por %p223, %p224
      %p226 = scmp.ne.s32.totalorder %s215, %s216
      %p227 = scmp.eq.s32.totalorder %s35, 0
      %p228 = por %p226, %p227
      %p229 = scmp.ne.s32.totalorder %s215, %s216
      %p230 = scmp.eq.s32.totalorder %s36, 1
      %p231 = por %p229, %p230
      %p233 = scmp.ne.s32.totalorder %s216, %s232
      %p234 = scmp.eq.s32.totalorder %s36, 0
      %p235 = por %p233, %p234
      %p236 = scmp.le.s32.totalorder 1, %s30
      %p237 = scmp.lt.s32.totalorder %s30, 3
      %p238 = pnand %p236, %p237
      %p239 = pneg %p238
      // Predicated region
      $region9: #{bottleneck_block.9} parent=5 // pred_check
        _
      $region10: #{bottleneck_block.9} parent=5 // pred_check_branch
        %241 = sbr.rel (%p238) target = $region12
      $region11: #{bottleneck_block.9} parent=5 // pred_region
        %s242 = ssub.s32 %s30, 1
        // Predicated region
        $region13: #{bottleneck_block.9} parent=11 // pred_check
          %p243 = pneg %p155
        $region14: #{bottleneck_block.9} parent=11 // pred_check_branch
          %245 = sbr.rel (%p243) target = $region16
        $region15: #{bottleneck_block.9} parent=11 // pred_region
          %s247 = ssub.s32 288, 288
          %248 = vsyncadd [#allocation9], %s247
          %s249 = sshll.u32 [#allocation10], 4
          %s250 = int_to_ptr.vmem [resolvable:$true] %s249
          %255 = dma.hbm_to_vmem [thread:$0]  %s4, 288, %s250, [#allocation9], 32, 32, 2
        $region16: #{bottleneck_block.9} parent=11 // pred_fallthru
          _
        // Predicated region
        $region17: #{bottleneck_block.9} parent=11 // pred_check
          %p256 = pneg %p176
        $region18: #{bottleneck_block.9} parent=11 // pred_check_branch
          %258 = sbr.rel (%p256) target = $region20
        $region19: #{bottleneck_block.9} parent=11 // pred_region
          %s260 = ssub.s32 1152, 1152
          %261 = vsyncadd [#allocation12], %s260
          %s262 = sshll.u32 [#allocation11], 4
          %s263 = int_to_ptr.vmem [resolvable:$true] %s262
          %268 = dma.hbm_to_vmem [thread:$0]  %s5, 1152, %s263, [#allocation12], 128, 128, 8
        $region20: #{bottleneck_block.9} parent=11 // pred_fallthru
          _
      $region12: #{bottleneck_block.9} parent=5 // pred_fallthru
        _
      %p269 = scmp.lt.s32.totalorder %s30, 2
      // Predicated region
      $region21: #{bottleneck_block.9} parent=5 // pred_check
        %p270 = pneg %p269
      $region22: #{bottleneck_block.9} parent=5 // pred_check_branch
        %272 = sbr.rel (%p270) target = $region24
      $region23: #{bottleneck_block.9} parent=5 // pred_region
        // Predicated region
        $region25: #{bottleneck_block.9} parent=23 // pred_check
          %p273 = pneg %p50
        $region26: #{bottleneck_block.9} parent=23 // pred_check_branch
          %275 = sbr.rel (%p273) target = $region28
        $region27: #{bottleneck_block.9} parent=23 // pred_region
          %s276 = sand.u32 %s40, 1
          %s277 = scalar_lea.sflag [#allocation3], %s276
          %s278 = sand.u32 %s40, 1
          %s279 = smul.addr %s278, 48
          %s280 = scalar_lea.vmem [#allocation2], %s279
          %s282 = ssub.s32 768, 768
          %283 = vsyncadd %s277, %s282
          %s284 = smul.addr %s30, 12
          %s285 = smul.addr %s284, 64
          %s286 = scalar_lea.hbm %s0, %s285
          %s287 = sshll.u32 %s280, 4
          %s288 = int_to_ptr.vmem [resolvable:$true] %s287
          %293 = dma.hbm_to_vmem [thread:$0]  %s286, 768, %s288, %s277, 64, 64, 4
        $region28: #{bottleneck_block.9} parent=23 // pred_fallthru
          _
        // Predicated region
        $region29: #{bottleneck_block.9} parent=23 // pred_check
          %p294 = pneg %p76
        $region30: #{bottleneck_block.9} parent=23 // pred_check_branch
          %296 = sbr.rel (%p294) target = $region32
        $region31: #{bottleneck_block.9} parent=23 // pred_region
          %s297 = sand.u32 %s30, 1
          %s298 = scalar_lea.sflag [#allocation6], %s297
          %s299 = sand.u32 %s66, 1
          %s300 = smul.addr %s299, 48
          %s301 = scalar_lea.vmem [#allocation5], %s300
          %s303 = ssub.s32 768, 768
          %304 = vsyncadd %s298, %s303
          %s305 = smul.addr %s30, 12
          %s306 = smul.addr %s305, 64
          %s307 = scalar_lea.hbm %s1, %s306
          %s308 = sshll.u32 %s301, 4
          %s309 = int_to_ptr.vmem [resolvable:$true] %s308
          %314 = dma.hbm_to_vmem [thread:$0]  %s307, 768, %s309, %s298, 64, 64, 4
        $region32: #{bottleneck_block.9} parent=23 // pred_fallthru
          _
        // Predicated region
        $region33: #{bottleneck_block.9} parent=23 // pred_check
          %p315 = pneg %p102
        $region34: #{bottleneck_block.9} parent=23 // pred_check_branch
          %317 = sbr.rel (%p315) target = $region36
        $region35: #{bottleneck_block.9} parent=23 // pred_region
          %s318 = sand.u32 %s30, 1
          %s319 = scalar_lea.sflag [#allocation6], %s318
          %s320 = sand.u32 %s92, 1
          %s321 = smul.addr %s320, 48
          %s322 = scalar_lea.vmem [#allocation7], %s321
          %s324 = ssub.s32 768, 768
          %325 = vsyncadd %s319, %s324
          %s326 = smul.addr %s30, 12
          %s327 = smul.addr %s326, 64
          %s328 = scalar_lea.hbm %s2, %s327
          %s329 = sshll.u32 %s322, 4
          %s330 = int_to_ptr.vmem [resolvable:$true] %s329
          %335 = dma.hbm_to_vmem [thread:$0]  %s328, 768, %s330, %s319, 64, 64, 4
        $region36: #{bottleneck_block.9} parent=23 // pred_fallthru
          _
        // Predicated region
        $region37: #{bottleneck_block.9} parent=23 // pred_check
          %p336 = pneg %p128
        $region38: #{bottleneck_block.9} parent=23 // pred_check_branch
          %338 = sbr.rel (%p336) target = $region40
        $region39: #{bottleneck_block.9} parent=23 // pred_region
          %s339 = sand.u32 %s30, 1
          %s340 = scalar_lea.sflag [#allocation9], %s339
          %s341 = sand.u32 %s118, 1
          %s342 = smul.addr %s341, 48
          %s343 = scalar_lea.vmem [#allocation8], %s342
          %s345 = ssub.s32 768, 768
          %346 = vsyncadd %s340, %s345
          %s347 = smul.addr %s30, 12
          %s348 = smul.addr %s347, 64
          %s349 = scalar_lea.hbm %s3, %s348
          %s350 = sshll.u32 %s343, 4
          %s351 = int_to_ptr.vmem [resolvable:$true] %s350
          %356 = dma.hbm_to_vmem [thread:$0]  %s349, 768, %s351, %s340, 64, 64, 4
        $region40: #{bottleneck_block.9} parent=23 // pred_fallthru
          _
      $region24: #{bottleneck_block.9} parent=5 // pred_fallthru
        _
      %p357 = scmp.le.s32.totalorder 1, %s30
      %p358 = scmp.lt.s32.totalorder %s30, 3
      %p359 = pnand %p357, %p358
      %p360 = pneg %p359
      // Predicated region
      $region41: #{bottleneck_block.9} parent=5 // pred_check
        _
      $region42: #{bottleneck_block.9} parent=5 // pred_check_branch
        %362 = sbr.rel (%p359) target = $region44
      $region43: #{bottleneck_block.9} parent=5 // pred_region
        %s363 = ssub.s32 %s30, 1
        %s364 = sand.u32 %s43, 1
        %s365 = scalar_lea.sflag [#allocation3], %s364
        %s366 = sand.u32 %s43, 1
        %s367 = smul.addr %s366, 48
        %s368 = scalar_lea.vmem [#allocation2], %s367
        // Predicated region
        $region45: #{bottleneck_block.9} parent=43 // pred_check
          %p369 = pneg %p56
        $region46: #{bottleneck_block.9} parent=43 // pred_check_branch
          %371 = sbr.rel (%p369) target = $region48
        $region47: #{bottleneck_block.9} parent=43 // pred_region
          %372 = dma.done %s365, 768
        $region48: #{bottleneck_block.9} parent=43 // pred_fallthru
          _
        %s373 = sand.u32 %s35, 1
        %s374 = scalar_lea.sflag [#allocation6], %s373
        %s375 = sand.u32 %s69, 1
        %s376 = smul.addr %s375, 48
        %s377 = scalar_lea.vmem [#allocation5], %s376
        // Predicated region
        $region49: #{bottleneck_block.9} parent=43 // pred_check
          %p378 = pneg %p82
        $region50: #{bottleneck_block.9} parent=43 // pred_check_branch
          %380 = sbr.rel (%p378) target = $region52
        $region51: #{bottleneck_block.9} parent=43 // pred_region
          %381 = dma.done %s374, 768
        $region52: #{bottleneck_block.9} parent=43 // pred_fallthru
          _
        %s382 = sand.u32 %s35, 1
        %s383 = scalar_lea.sflag [#allocation6], %s382
        %s384 = sand.u32 %s95, 1
        %s385 = smul.addr %s384, 48
        %s386 = scalar_lea.vmem [#allocation7], %s385
        // Predicated region
        $region53: #{bottleneck_block.9} parent=43 // pred_check
          %p387 = pneg %p108
        $region54: #{bottleneck_block.9} parent=43 // pred_check_branch
          %389 = sbr.rel (%p387) target = $region56
        $region55: #{bottleneck_block.9} parent=43 // pred_region
          %390 = dma.done %s383, 768
        $region56: #{bottleneck_block.9} parent=43 // pred_fallthru
          _
        %s391 = sand.u32 %s35, 1
        %s392 = scalar_lea.sflag [#allocation9], %s391
        %s393 = sand.u32 %s121, 1
        %s394 = smul.addr %s393, 48
        %s395 = scalar_lea.vmem [#allocation8], %s394
        // Predicated region
        $region57: #{bottleneck_block.9} parent=43 // pred_check
          %p396 = pneg %p134
        $region58: #{bottleneck_block.9} parent=43 // pred_check_branch
          %398 = sbr.rel (%p396) target = $region60
        $region59: #{bottleneck_block.9} parent=43 // pred_region
          %399 = dma.done %s392, 768
        $region60: #{bottleneck_block.9} parent=43 // pred_fallthru
          _
        // Predicated region
        $region61: #{bottleneck_block.9} parent=43 // pred_check
          %p400 = pneg %p155
        $region62: #{bottleneck_block.9} parent=43 // pred_check_branch
          %402 = sbr.rel (%p400) target = $region64
        $region63: #{bottleneck_block.9} parent=43 // pred_region
          %403 = dma.done [#allocation9], 288
        $region64: #{bottleneck_block.9} parent=43 // pred_fallthru
          _
        // Predicated region
        $region65: #{bottleneck_block.9} parent=43 // pred_check
          %p404 = pneg %p176
        $region66: #{bottleneck_block.9} parent=43 // pred_check_branch
          %406 = sbr.rel (%p404) target = $region68
        $region67: #{bottleneck_block.9} parent=43 // pred_region
          %407 = dma.done [#allocation12], 1152
        $region68: #{bottleneck_block.9} parent=43 // pred_fallthru
          _
        %s408 = sand.u32 %s43, 1
        %s409 = scalar_lea.sflag [#allocation3], %s408
        %s410 = sand.u32 %s43, 1
        %s411 = smul.addr %s410, 48
        %s412 = scalar_lea.vmem [#allocation2], %s411
        %p413 = pneg %p56
        %p414 = pneg %p53
        %s415 = sand.u32 %s35, 1
        %s416 = scalar_lea.sflag [#allocation6], %s415
        %s417 = sand.u32 %s69, 1
        %s418 = smul.addr %s417, 48
        %s419 = scalar_lea.vmem [#allocation5], %s418
        %p420 = pneg %p82
        %p421 = pneg %p79
        %s422 = sand.u32 %s35, 1
        %s423 = scalar_lea.sflag [#allocation6], %s422
        %s424 = sand.u32 %s95, 1
        %s425 = smul.addr %s424, 48
        %s426 = scalar_lea.vmem [#allocation7], %s425
        %p427 = pneg %p108
        %p428 = pneg %p105
        %s429 = sand.u32 %s35, 1
        %s430 = scalar_lea.sflag [#allocation9], %s429
        %s431 = sand.u32 %s121, 1
        %s432 = smul.addr %s431, 48
        %s433 = scalar_lea.vmem [#allocation8], %s432
        %p434 = pneg %p134
        %p435 = pneg %p131
        %p436 = pneg %p155
        %p437 = pneg %p152
        %p438 = pneg %p176
        %p439 = pneg %p173
        %p440 = pneg %p202
        %p441 = pneg %p199
        %s442 = sand.u32 %s189, 1
        %s443 = scalar_lea.sflag [#allocation4], %s442
        %s444 = sand.u32 %s189, 1
        %s445 = smul.addr %s444, 72
        %s446 = scalar_lea.vmem [#allocation13], %s445
        %p447 = pneg %p228
        %p448 = pneg %p225
        %s449 = sand.u32 %s215, 1
        %s450 = scalar_lea.sflag [#allocation15], %s449
        %s451 = sand.u32 %s215, 1
        %s452 = smul.addr %s451, 2
        %s453 = scalar_lea.vmem [#allocation14], %s452
        %v455 = vld [vmem:[#allocation10] sm:$0x3]
        %s456 = scalar_lea.vmem [#allocation10], 2
        %v457 = vld [vmem:[%s456] sm:$0x3]
        %s458 = scalar_lea.vmem [#allocation10], 4
        %v459 = vld [vmem:[%s458] sm:$0x3]
        %s460 = scalar_lea.vmem [#allocation10], 6
        %v461 = vld [vmem:[%s460] sm:$0x3]
        %s462 = scalar_lea.vmem [#allocation10], 8
        %v463 = vld [vmem:[%s462] sm:$0x3]
        %s464 = scalar_lea.vmem [#allocation10], 10
        %v465 = vld [vmem:[%s464] sm:$0x3]
        %s466 = scalar_lea.vmem [#allocation10], 12
        %v467 = vld [vmem:[%s466] sm:$0x3]
        %s468 = scalar_lea.vmem [#allocation10], 14
        %v469 = vld [vmem:[%s468] sm:$0x3]
        %s470 = scalar_lea.vmem [#allocation10], 16
        %v471 = vld [vmem:[%s470] sm:$0x3]
        %v472 = vld [vmem:[%s368] sm:$0xf]
        %v473 = vld [vmem:[%s368 + $0x4] sm:$0xf]
        %v474 = vld [vmem:[%s368 + $0x8] sm:$0xf]
        %v475 = vld [vmem:[%s368 + $0xc] sm:$0xf]
        %v476 = vld [vmem:[%s368 + $0x10] sm:$0xf]
        %v477 = vld [vmem:[%s368 + $0x14] sm:$0xf]
        %v478 = vld [vmem:[%s368 + $0x18] sm:$0xf]
        %v479 = vld [vmem:[%s368 + $0x1c] sm:$0xf]
        %v480 = vld [vmem:[%s368 + $0x20] sm:$0xf]
        %v481 = vld [vmem:[%s377] sm:$0xf]
        %v482 = vld [vmem:[%s377 + $0x4] sm:$0xf]
        %v483 = vld [vmem:[%s377 + $0x8] sm:$0xf]
        %v484 = vld [vmem:[%s377 + $0xc] sm:$0xf]
        %v485 = vld [vmem:[%s377 + $0x10] sm:$0xf]
        %v486 = vld [vmem:[%s377 + $0x14] sm:$0xf]
        %v487 = vld [vmem:[%s377 + $0x18] sm:$0xf]
        %v488 = vld [vmem:[%s377 + $0x1c] sm:$0xf]
        %v489 = vld [vmem:[%s377 + $0x20] sm:$0xf]
        %v499 = vunpack.c.l.b16 %v481
        %v500 = vunpack.c.l.b16 %v482
        %v501 = vunpack.c.l.b16 %v483
        %v502 = vunpack.c.l.b16 %v484
        %v503 = vunpack.c.l.b16 %v485
        %v504 = vunpack.c.l.b16 %v486
        %v505 = vunpack.c.l.b16 %v487
        %v506 = vunpack.c.l.b16 %v488
        %v507 = vunpack.c.l.b16 %v489
        %v508 = vpack.c.b16 %v500, %v499
        %v509 = vpack.c.b16 %v502, %v501
        %v510 = vpack.c.b16 %v504, %v503
        %v511 = vpack.c.b16 %v506, %v505
        %v512 = vpack.c.b16 %v507, %v507
        %vm513 = vcmask 31744
        %v515 = vsel %vm513, %v508, 0
        %v518 = vsel %vm513, %v509, 0
        %v521 = vsel %vm513, %v510, 0
        %v524 = vsel %vm513, %v511, 0
        %v527 = vsel %vm513, %v512, 0
        %vm529 = vcmask 1041408
        %v531 = vsel %vm529, %v457, 0
        %533 = vmatprep.subr.bf16.mxu0 0
        %534 = vmatpush1.bf16.msra.mxu0 %v531
        %535 = vmatprep.subr.bf16.mxu0 0
        %536 = vmatpush1.bf16.msra.mxu0 0
        %537 = vmatprep.subr.bf16.mxu0 0
        %538 = vmatpush1.bf16.msra.mxu0 0
        %539 = vmatprep.subr.bf16.mxu0 0
        %540 = vmatpush1.bf16.msra.mxu0 0
        %541 = vmatprep.subr.bf16.mxu0 0
        %542 = vmatpush1.bf16.msra.mxu0 0
        %543 = vmatprep.subr.bf16.mxu0 0
        %544 = vmatpush1.bf16.msra.mxu0 0
        %545 = vmatprep.subr.bf16.mxu0 0
        %546 = vmatpush1.bf16.msra.mxu0 0
        %547 = vmatprep.subr.bf16.mxu0 0
        %548 = vmatpush1.bf16.msra.mxu0 0
        %549 = vmatprep.subr.bf16.mxu0 0
        %550 = vmatpush1.bf16.msra.mxu0 0
        %551 = vmatprep.subr.bf16.mxu0 0
        %552 = vmatpush1.bf16.msra.mxu0 0
        %553 = vmatprep.subr.bf16.mxu0 0
        %554 = vmatpush1.bf16.msra.mxu0 0
        %555 = vmatprep.subr.bf16.mxu0 0
        %556 = vmatpush1.bf16.msra.mxu0 0
        %557 = vmatprep.subr.bf16.mxu0 0
        %558 = vmatpush1.bf16.msra.mxu0 0
        %559 = vmatprep.subr.bf16.mxu0 0
        %560 = vmatpush1.bf16.msra.mxu0 0
        %561 = vmatprep.subr.bf16.mxu0 0
        %562 = vmatpush1.bf16.msra.mxu0 0
        %563 = vmatprep.subr.bf16.mxu0 0
        %564 = vmatpush1.bf16.msra.mxu0 0
        %565 = vmatprep.mubr.bf16.mxu0 0
        %566 = vmatmul.mubr.bf16.gmra.mrb[0].mxu0 %v515
        %v567 = vpop.f32.mrb[0].mxu0
        %v568 = vadd.f32 0.0, %v567
        %v569 = vpop.f32.mrb[0].mxu0
        %v570 = vpop.f32.mrb[0].mxu0
        %v571 = vadd.f32 0.0, %v570
        %v572 = vpop.f32.mrb[0].mxu0
        %573 = vmatprep.mubr.bf16.mxu0 0
        %574 = vmatmul.mubr.bf16.gmra.mrb[0].mxu0 %v518
        %v575 = vpop.f32.mrb[0].mxu0
        %v576 = vadd.f32 0.0, %v575
        %v577 = vpop.f32.mrb[0].mxu0
        %v578 = vpop.f32.mrb[0].mxu0
        %v579 = vadd.f32 0.0, %v578
        %v580 = vpop.f32.mrb[0].mxu0
        %581 = vmatprep.mubr.bf16.mxu0 0
        %582 = vmatmul.mubr.bf16.gmra.mrb[0].mxu0 %v521
        %v583 = vpop.f32.mrb[0].mxu0
        %v584 = vadd.f32 0.0, %v583
        %v585 = vpop.f32.mrb[0].mxu0
        %v586 = vpop.f32.mrb[0].mxu0
        %v587 = vadd.f32 0.0, %v586
        %v588 = vpop.f32.mrb[0].mxu0
        %589 = vmatprep.mubr.bf16.mxu0 0
        %590 = vmatmul.mubr.bf16.gmra.mrb[0].mxu0 %v524
        %v591 = vpop.f32.mrb[0].mxu0
        %v592 = vadd.f32 0.0, %v591
        %v593 = vpop.f32.mrb[0].mxu0
        %v594 = vpop.f32.mrb[0].mxu0
        %v595 = vadd.f32 0.0, %v594
        %v596 = vpop.f32.mrb[0].mxu0
        %597 = vmatprep.mubr.bf16.mxu0 0
        %598 = vmatmul.mubr.bf16.gmra.mrb[0].mxu0 %v527
        %v599 = vpop.f32.mrb[0].mxu0
        %v600 = vadd.f32 0.0, %v599
        %v601 = vpop.f32.mrb[0].mxu0
        %v602 = vpop.f32.mrb[0].mxu0
        %v603 = vpop.f32.mrb[0].mxu0
        %604 = vdwg.mxu0
        %v614 = vunpack.c.l.b16 %v472
        %v615 = vunpack.c.l.b16 %v473
        %v616 = vunpack.c.l.b16 %v474
        %v617 = vunpack.c.l.b16 %v475
        %v618 = vunpack.c.l.b16 %v476
        %v619 = vunpack.c.l.b16 %v477
        %v620 = vunpack.c.l.b16 %v478
        %v621 = vunpack.c.l.b16 %v479
        %v622 = vunpack.c.l.b16 %v480
        %v623 = vpack.c.b16 %v615, %v614
        %v624 = vpack.c.b16 %v617, %v616
        %v625 = vpack.c.b16 %v619, %v618
        %v626 = vpack.c.b16 %v621, %v620
        %v627 = vpack.c.b16 %v622, %v622
        %v629 = vsel %vm513, %v623, 0
        %v632 = vsel %vm513, %v624, 0
        %v635 = vsel %vm513, %v625, 0
        %v638 = vsel %vm513, %v626, 0
        %v641 = vsel %vm513, %v627, 0
        %v644 = vsel %vm529, %v455, 0
        %646 = vmatprep.subr.bf16.mxu0 0
        %647 = vmatpush1.bf16.msra.mxu0 %v644
        %648 = vmatprep.subr.bf16.mxu0 0
        %649 = vmatpush1.bf16.msra.mxu0 0
        %650 = vmatprep.subr.bf16.mxu0 0
        %651 = vmatpush1.bf16.msra.mxu0 0
        %652 = vmatprep.subr.bf16.mxu0 0
        %653 = vmatpush1.bf16.msra.mxu0 0
        %654 = vmatprep.subr.bf16.mxu0 0
        %655 = vmatpush1.bf16.msra.mxu0 0
        %656 = vmatprep.subr.bf16.mxu0 0
        %657 = vmatpush1.bf16.msra.mxu0 0
        %658 = vmatprep.subr.bf16.mxu0 0
        %659 = vmatpush1.bf16.msra.mxu0 0
        %660 = vmatprep.subr.bf16.mxu0 0
        %661 = vmatpush1.bf16.msra.mxu0 0
        %662 = vmatprep.subr.bf16.mxu0 0
        %663 = vmatpush1.bf16.msra.mxu0 0
        %664 = vmatprep.subr.bf16.mxu0 0
        %665 = vmatpush1.bf16.msra.mxu0 0
        %666 = vmatprep.subr.bf16.mxu0 0
        %667 = vmatpush1.bf16.msra.mxu0 0
        %668 = vmatprep.subr.bf16.mxu0 0
        %669 = vmatpush1.bf16.msra.mxu0 0
        %670 = vmatprep.subr.bf16.mxu0 0
        %671 = vmatpush1.bf16.msra.mxu0 0
        %672 = vmatprep.subr.bf16.mxu0 0
        %673 = vmatpush1.bf16.msra.mxu0 0
        %674 = vmatprep.subr.bf16.mxu0 0
        %675 = vmatpush1.bf16.msra.mxu0 0
        %676 = vmatprep.subr.bf16.mxu0 0
        %677 = vmatpush1.bf16.msra.mxu0 0
        %678 = vmatprep.mubr.bf16.mxu0 0
        %679 = vmatmul.mubr.bf16.gmra.mrb[0].mxu0 %v629
        %v680 = vpop.f32.mrb[0].mxu0
        %v681 = vadd.f32 %v568, %v680
        %v682 = vpop.f32.mrb[0].mxu0
        %v683 = vpop.f32.mrb[0].mxu0
        %v684 = vadd.f32 %v571, %v683
        %v685 = vpop.f32.mrb[0].mxu0
        %686 = vmatprep.mubr.bf16.mxu0 0
        %687 = vmatmul.mubr.bf16.gmra.mrb[0].mxu0 %v632
        %v688 = vpop.f32.mrb[0].mxu0
        %v689 = vadd.f32 %v576, %v688
        %v690 = vpop.f32.mrb[0].mxu0
        %v691 = vpop.f32.mrb[0].mxu0
        %v692 = vadd.f32 %v579, %v691
        %v693 = vpop.f32.mrb[0].mxu0
        %694 = vmatprep.mubr.bf16.mxu0 0
        %695 = vmatmul.mubr.bf16.gmra.mrb[0].mxu0 %v635
        %v696 = vpop.f32.mrb[0].mxu0
        %v697 = vadd.f32 %v584, %v696
        %v698 = vpop.f32.mrb[0].mxu0
        %v699 = vpop.f32.mrb[0].mxu0
        %v700 = vadd.f32 %v587, %v699
        %v701 = vpop.f32.mrb[0].mxu0
        %702 = vmatprep.mubr.bf16.mxu0 0
        %703 = vmatmul.mubr.bf16.gmra.mrb[0].mxu0 %v638
        %v704 = vpop.f32.mrb[0].mxu0
        %v705 = vadd.f32 %v592, %v704
        %v706 = vpop.f32.mrb[0].mxu0
        %v707 = vpop.f32.mrb[0].mxu0
        %v708 = vadd.f32 %v595, %v707
        %v709 = vpop.f32.mrb[0].mxu0
        %710 = vmatprep.mubr.bf16.mxu0 0
        %711 = vmatmul.mubr.bf16.gmra.mrb[0].mxu0 %v641
        %v712 = vpop.f32.mrb[0].mxu0
        %v713 = vadd.f32 %v600, %v712
        %v714 = vpop.f32.mrb[0].mxu0
        %v715 = vpop.f32.mrb[0].mxu0
        %v716 = vpop.f32.mrb[0].mxu0
        %717 = vdwg.mxu0
        %v718 = vld [vmem:[%s368] sm:$0xf]
        %v719 = vld [vmem:[%s368 + $0x4] sm:$0xf]
        %v720 = vld [vmem:[%s368 + $0x8] sm:$0xf]
        %v721 = vld [vmem:[%s368 + $0xc] sm:$0xf]
        %v722 = vld [vmem:[%s368 + $0x10] sm:$0xf]
        %v723 = vld [vmem:[%s368 + $0x14] sm:$0xf]
        %v724 = vld [vmem:[%s368 + $0x18] sm:$0xf]
        %v725 = vld [vmem:[%s368 + $0x1c] sm:$0xf]
        %v726 = vld [vmem:[%s368 + $0x20] sm:$0xf]
        %v727 = vld [vmem:[%s368 + $0x24] sm:$0x1]
        %v738 = vunpack.c.l.b16 %v718
        %v739 = vunpack.c.l.b16 %v719
        %v740 = vunpack.c.l.b16 %v720
        %v741 = vunpack.c.l.b16 %v721
        %v742 = vunpack.c.l.b16 %v722
        %v743 = vunpack.c.l.b16 %v723
        %v744 = vunpack.c.l.b16 %v724
        %v745 = vunpack.c.l.b16 %v725
        %v746 = vunpack.c.l.b16 %v726
        %v747 = vunpack.c.l.b16 %v727
        %v748 = vpack.c.b16 %v739, %v738
        %v749 = vpack.c.b16 %v741, %v740
        %v750 = vpack.c.b16 %v743, %v742
        %v751 = vpack.c.b16 %v745, %v744
        %v752 = vpack.c.b16 %v747, %v746
        %vm753 = vsmask.f32 7424
        %v755 = vshrl.u32 %v748, 16
        %v757 = vshll.u32 %v748, 16
        %v759 = vrot.slane %v757, 1
        %v760 = vor.u32 %v755, %v759
        %v762 = vshll.u32 %v749, 16
        %v764 = vrot.slane %v762, 1
        %v765 = vsel %vm753, %v760, %v764
        %v766 = vshrl.u32 %v749, 16
        %v768 = vor.u32 %v766, %v764
        %v770 = vshll.u32 %v750, 16
        %v772 = vrot.slane %v770, 1
        %v773 = vsel %vm753, %v768, %v772
        %v774 = vshrl.u32 %v750, 16
        %v776 = vor.u32 %v774, %v772
        %v778 = vshll.u32 %v751, 16
        %v780 = vrot.slane %v778, 1
        %v781 = vsel %vm753, %v776, %v780
        %v782 = vshrl.u32 %v751, 16
        %v784 = vor.u32 %v782, %v780
        %v786 = vshll.u32 %v752, 16
        %v788 = vrot.slane %v786, 1
        %v789 = vsel %vm753, %v784, %v788
        %v790 = vshrl.u32 %v752, 16
        %v792 = vor.u32 %v790, %v788
        %v794 = vsel %vm513, %v765, 0
        %v797 = vsel %vm513, %v773, 0
        %v800 = vsel %vm513, %v781, 0
        %v803 = vsel %vm513, %v789, 0
        %v806 = vsel %vm513, %v792, 0
        %v809 = vsel %vm529, %v459, 0
        %811 = vmatprep.subr.bf16.mxu0 0
        %812 = vmatpush1.bf16.msra.mxu0 %v809
        %813 = vmatprep.subr.bf16.mxu0 0
        %814 = vmatpush1.bf16.msra.mxu0 0
        %815 = vmatprep.subr.bf16.mxu0 0
        %816 = vmatpush1.bf16.msra.mxu0 0
        %817 = vmatprep.subr.bf16.mxu0 0
        %818 = vmatpush1.bf16.msra.mxu0 0
        %819 = vmatprep.subr.bf16.mxu0 0
        %820 = vmatpush1.bf16.msra.mxu0 0
        %821 = vmatprep.subr.bf16.mxu0 0
        %822 = vmatpush1.bf16.msra.mxu0 0
        %823 = vmatprep.subr.bf16.mxu0 0
        %824 = vmatpush1.bf16.msra.mxu0 0
        %825 = vmatprep.subr.bf16.mxu0 0
        %826 = vmatpush1.bf16.msra.mxu0 0
        %827 = vmatprep.subr.bf16.mxu0 0
        %828 = vmatpush1.bf16.msra.mxu0 0
        %829 = vmatprep.subr.bf16.mxu0 0
        %830 = vmatpush1.bf16.msra.mxu0 0
        %831 = vmatprep.subr.bf16.mxu0 0
        %832 = vmatpush1.bf16.msra.mxu0 0
        %833 = vmatprep.subr.bf16.mxu0 0
        %834 = vmatpush1.bf16.msra.mxu0 0
        %835 = vmatprep.subr.bf16.mxu0 0
        %836 = vmatpush1.bf16.msra.mxu0 0
        %837 = vmatprep.subr.bf16.mxu0 0
        %838 = vmatpush1.bf16.msra.mxu0 0
        %839 = vmatprep.subr.bf16.mxu0 0
        %840 = vmatpush1.bf16.msra.mxu0 0
        %841 = vmatprep.subr.bf16.mxu0 0
        %842 = vmatpush1.bf16.msra.mxu0 0
        %843 = vmatprep.mubr.bf16.mxu0 0
        %844 = vmatmul.mubr.bf16.gmra.mrb[0].mxu0 %v794
        %v845 = vpop.f32.mrb[0].mxu0
        %v846 = vadd.f32 0.0, %v845
        %v847 = vpop.f32.mrb[0].mxu0
        %v848 = vpop.f32.mrb[0].mxu0
        %v849 = vadd.f32 0.0, %v848
        %v850 = vpop.f32.mrb[0].mxu0
        %851 = vmatprep.mubr.bf16.mxu0 0
        %852 = vmatmul.mubr.bf16.gmra.mrb[0].mxu0 %v797
        %v853 = vpop.f32.mrb[0].mxu0
        %v854 = vadd.f32 0.0, %v853
        %v855 = vpop.f32.mrb[0].mxu0
        %v856 = vpop.f32.mrb[0].mxu0
        %v857 = vadd.f32 0.0, %v856
        %v858 = vpop.f32.mrb[0].mxu0
        %859 = vmatprep.mubr.bf16.mxu0 0
        %860 = vmatmul.mubr.bf16.gmra.mrb[0].mxu0 %v800
        %v861 = vpop.f32.mrb[0].mxu0
        %v862 = vadd.f32 0.0, %v861
        %v863 = vpop.f32.mrb[0].mxu0
        %v864 = vpop.f32.mrb[0].mxu0
        %v865 = vadd.f32 0.0, %v864
        %v866 = vpop.f32.mrb[0].mxu0
        %867 = vmatprep.mubr.bf16.mxu0 0
        %868 = vmatmul.mubr.bf16.gmra.mrb[0].mxu0 %v803
        %v869 = vpop.f32.mrb[0].mxu0
        %v870 = vadd.f32 0.0, %v869
        %v871 = vpop.f32.mrb[0].mxu0
        %v872 = vpop.f32.mrb[0].mxu0
        %v873 = vadd.f32 0.0, %v872
        %v874 = vpop.f32.mrb[0].mxu0
        %875 = vmatprep.mubr.bf16.mxu0 0
        %876 = vmatmul.mubr.bf16.gmra.mrb[0].mxu0 %v806
        %v877 = vpop.f32.mrb[0].mxu0
        %v878 = vadd.f32 0.0, %v877
        %v879 = vpop.f32.mrb[0].mxu0
        %v880 = vpop.f32.mrb[0].mxu0
        %v881 = vpop.f32.mrb[0].mxu0
        %882 = vdwg.mxu0
        %v883 = vadd.f32 %v681, %v846
        %v884 = vadd.f32 %v684, %v849
        %v885 = vadd.f32 %v689, %v854
        %v886 = vadd.f32 %v692, %v857
        %v887 = vadd.f32 %v697, %v862
        %v888 = vadd.f32 %v700, %v865
        %v889 = vadd.f32 %v705, %v870
        %v890 = vadd.f32 %v708, %v873
        %v891 = vadd.f32 %v713, %v878
        %v892 = vld [vmem:[%s386] sm:$0xf]
        %v893 = vld [vmem:[%s386 + $0x4] sm:$0xf]
        %v894 = vld [vmem:[%s386 + $0x8] sm:$0xf]
        %v895 = vld [vmem:[%s386 + $0xc] sm:$0xf]
        %v896 = vld [vmem:[%s386 + $0x10] sm:$0xf]
        %v897 = vld [vmem:[%s386 + $0x14] sm:$0xf]
        %v898 = vld [vmem:[%s386 + $0x18] sm:$0xf]
        %v899 = vld [vmem:[%s386 + $0x1c] sm:$0xf]
        %v900 = vld [vmem:[%s386 + $0x20] sm:$0xf]
        %v910 = vunpack.c.l.b16 %v892
        %v911 = vunpack.c.l.b16 %v893
        %v912 = vunpack.c.l.b16 %v894
        %v913 = vunpack.c.l.b16 %v895
        %v914 = vunpack.c.l.b16 %v896
        %v915 = vunpack.c.l.b16 %v897
        %v916 = vunpack.c.l.b16 %v898
        %v917 = vunpack.c.l.b16 %v899
        %v918 = vunpack.c.l.b16 %v900
        %v919 = vpack.c.b16 %v911, %v910
        %v920 = vpack.c.b16 %v913, %v912
        %v921 = vpack.c.b16 %v915, %v914
        %v922 = vpack.c.b16 %v917, %v916
        %v923 = vpack.c.b16 %v918, %v918
        %v925 = vsel %vm513, %v919, 0
        %v928 = vsel %vm513, %v920, 0
        %v931 = vsel %vm513, %v921, 0
        %v934 = vsel %vm513, %v922, 0
        %v937 = vsel %vm513, %v923, 0
        %v940 = vsel %vm529, %v461, 0
        %942 = vmatprep.subr.bf16.mxu0 0
        %943 = vmatpush1.bf16.msra.mxu0 %v940
        %944 = vmatprep.subr.bf16.mxu0 0
        %945 = vmatpush1.bf16.msra.mxu0 0
        %946 = vmatprep.subr.bf16.mxu0 0
        %947 = vmatpush1.bf16.msra.mxu0 0
        %948 = vmatprep.subr.bf16.mxu0 0
        %949 = vmatpush1.bf16.msra.mxu0 0
        %950 = vmatprep.subr.bf16.mxu0 0
        %951 = vmatpush1.bf16.msra.mxu0 0
        %952 = vmatprep.subr.bf16.mxu0 0
        %953 = vmatpush1.bf16.msra.mxu0 0
        %954 = vmatprep.subr.bf16.mxu0 0
        %955 = vmatpush1.bf16.msra.mxu0 0
        %956 = vmatprep.subr.bf16.mxu0 0
        %957 = vmatpush1.bf16.msra.mxu0 0
        %958 = vmatprep.subr.bf16.mxu0 0
        %959 = vmatpush1.bf16.msra.mxu0 0
        %960 = vmatprep.subr.bf16.mxu0 0
        %961 = vmatpush1.bf16.msra.mxu0 0
        %962 = vmatprep.subr.bf16.mxu0 0
        %963 = vmatpush1.bf16.msra.mxu0 0
        %964 = vmatprep.subr.bf16.mxu0 0
        %965 = vmatpush1.bf16.msra.mxu0 0
        %966 = vmatprep.subr.bf16.mxu0 0
        %967 = vmatpush1.bf16.msra.mxu0 0
        %968 = vmatprep.subr.bf16.mxu0 0
        %969 = vmatpush1.bf16.msra.mxu0 0
        %970 = vmatprep.subr.bf16.mxu0 0
        %971 = vmatpush1.bf16.msra.mxu0 0
        %972 = vmatprep.subr.bf16.mxu0 0
        %973 = vmatpush1.bf16.msra.mxu0 0
        %974 = vmatprep.mubr.bf16.mxu0 0
        %975 = vmatmul.mubr.bf16.gmra.mrb[0].mxu0 %v925
        %v976 = vpop.f32.mrb[0].mxu0
        %v977 = vadd.f32 0.0, %v976
        %v978 = vpop.f32.mrb[0].mxu0
        %v979 = vpop.f32.mrb[0].mxu0
        %v980 = vadd.f32 0.0, %v979
        %v981 = vpop.f32.mrb[0].mxu0
        %982 = vmatprep.mubr.bf16.mxu0 0
        %983 = vmatmul.mubr.bf16.gmra.mrb[0].mxu0 %v928
        %v984 = vpop.f32.mrb[0].mxu0
        %v985 = vadd.f32 0.0, %v984
        %v986 = vpop.f32.mrb[0].mxu0
        %v987 = vpop.f32.mrb[0].mxu0
        %v988 = vadd.f32 0.0, %v987
        %v989 = vpop.f32.mrb[0].mxu0
        %990 = vmatprep.mubr.bf16.mxu0 0
        %991 = vmatmul.mubr.bf16.gmra.mrb[0].mxu0 %v931
        %v992 = vpop.f32.mrb[0].mxu0
        %v993 = vadd.f32 0.0, %v992
        %v994 = vpop.f32.mrb[0].mxu0
        %v995 = vpop.f32.mrb[0].mxu0
        %v996 = vadd.f32 0.0, %v995
        %v997 = vpop.f32.mrb[0].mxu0
        %998 = vmatprep.mubr.bf16.mxu0 0
        %999 = vmatmul.mubr.bf16.gmra.mrb[0].mxu0 %v934
        %v1000 = vpop.f32.mrb[0].mxu0
        %v1001 = vadd.f32 0.0, %v1000
        %v1002 = vpop.f32.mrb[0].mxu0
        %v1003 = vpop.f32.mrb[0].mxu0
        %v1004 = vadd.f32 0.0, %v1003
        %v1005 = vpop.f32.mrb[0].mxu0
        %1006 = vmatprep.mubr.bf16.mxu0 0
        %1007 = vmatmul.mubr.bf16.gmra.mrb[0].mxu0 %v937
        %v1008 = vpop.f32.mrb[0].mxu0
        %v1009 = vadd.f32 0.0, %v1008
        %v1010 = vpop.f32.mrb[0].mxu0
        %v1011 = vpop.f32.mrb[0].mxu0
        %v1012 = vpop.f32.mrb[0].mxu0
        %1013 = vdwg.mxu0
        %v1014 = vadd.f32 %v883, %v977
        %v1015 = vadd.f32 %v884, %v980
        %v1016 = vadd.f32 %v885, %v985
        %v1017 = vadd.f32 %v886, %v988
        %v1018 = vadd.f32 %v887, %v993
        %v1019 = vadd.f32 %v888, %v996
        %v1020 = vadd.f32 %v889, %v1001
        %v1021 = vadd.f32 %v890, %v1004
        %v1022 = vadd.f32 %v891, %v1009
        %v1023 = vld [vmem:[%s395] sm:$0xf]
        %v1024 = vld [vmem:[%s395 + $0x4] sm:$0xf]
        %v1025 = vld [vmem:[%s395 + $0x8] sm:$0xf]
        %v1026 = vld [vmem:[%s395 + $0xc] sm:$0xf]
        %v1027 = vld [vmem:[%s395 + $0x10] sm:$0xf]
        %v1028 = vld [vmem:[%s395 + $0x14] sm:$0xf]
        %v1029 = vld [vmem:[%s395 + $0x18] sm:$0xf]
        %v1030 = vld [vmem:[%s395 + $0x1c] sm:$0xf]
        %v1031 = vld [vmem:[%s395 + $0x20] sm:$0xf]
        %v1041 = vunpack.c.l.b16 %v1023
        %v1042 = vunpack.c.l.b16 %v1024
        %v1043 = vunpack.c.l.b16 %v1025
        %v1044 = vunpack.c.l.b16 %v1026
        %v1045 = vunpack.c.l.b16 %v1027
        %v1046 = vunpack.c.l.b16 %v1028
        %v1047 = vunpack.c.l.b16 %v1029
        %v1048 = vunpack.c.l.b16 %v1030
        %v1049 = vunpack.c.l.b16 %v1031
        %v1050 = vpack.c.b16 %v1042, %v1041
        %v1051 = vpack.c.b16 %v1044, %v1043
        %v1052 = vpack.c.b16 %v1046, %v1045
        %v1053 = vpack.c.b16 %v1048, %v1047
        %v1054 = vpack.c.b16 %v1049, %v1049
        %v1056 = vsel %vm513, %v1050, 0
        %v1059 = vsel %vm513, %v1051, 0
        %v1062 = vsel %vm513, %v1052, 0
        %v1065 = vsel %vm513, %v1053, 0
        %v1068 = vsel %vm513, %v1054, 0
        %v1071 = vsel %vm529, %v463, 0
        %1073 = vmatprep.subr.bf16.mxu0 0
        %1074 = vmatpush1.bf16.msra.mxu0 %v1071
        %1075 = vmatprep.subr.bf16.mxu0 0
        %1076 = vmatpush1.bf16.msra.mxu0 0
        %1077 = vmatprep.subr.bf16.mxu0 0
        %1078 = vmatpush1.bf16.msra.mxu0 0
        %1079 = vmatprep.subr.bf16.mxu0 0
        %1080 = vmatpush1.bf16.msra.mxu0 0
        %1081 = vmatprep.subr.bf16.mxu0 0
        %1082 = vmatpush1.bf16.msra.mxu0 0
        %1083 = vmatprep.subr.bf16.mxu0 0
        %1084 = vmatpush1.bf16.msra.mxu0 0
        %1085 = vmatprep.subr.bf16.mxu0 0
        %1086 = vmatpush1.bf16.msra.mxu0 0
        %1087 = vmatprep.subr.bf16.mxu0 0
        %1088 = vmatpush1.bf16.msra.mxu0 0
        %1089 = vmatprep.subr.bf16.mxu0 0
        %1090 = vmatpush1.bf16.msra.mxu0 0
        %1091 = vmatprep.subr.bf16.mxu0 0
        %1092 = vmatpush1.bf16.msra.mxu0 0
        %1093 = vmatprep.subr.bf16.mxu0 0
        %1094 = vmatpush1.bf16.msra.mxu0 0
        %1095 = vmatprep.subr.bf16.mxu0 0
        %1096 = vmatpush1.bf16.msra.mxu0 0
        %1097 = vmatprep.subr.bf16.mxu0 0
        %1098 = vmatpush1.bf16.msra.mxu0 0
        %1099 = vmatprep.subr.bf16.mxu0 0
        %1100 = vmatpush1.bf16.msra.mxu0 0
        %1101 = vmatprep.subr.bf16.mxu0 0
        %1102 = vmatpush1.bf16.msra.mxu0 0
        %1103 = vmatprep.subr.bf16.mxu0 0
        %1104 = vmatpush1.bf16.msra.mxu0 0
        %1105 = vmatprep.mubr.bf16.mxu0 0
        %1106 = vmatmul.mubr.bf16.gmra.mrb[0].mxu0 %v1056
        %v1107 = vpop.f32.mrb[0].mxu0
        %v1108 = vadd.f32 0.0, %v1107
        %v1109 = vpop.f32.mrb[0].mxu0
        %v1110 = vpop.f32.mrb[0].mxu0
        %v1111 = vadd.f32 0.0, %v1110
        %v1112 = vpop.f32.mrb[0].mxu0
        %1113 = vmatprep.mubr.bf16.mxu0 0
        %1114 = vmatmul.mubr.bf16.gmra.mrb[0].mxu0 %v1059
        %v1115 = vpop.f32.mrb[0].mxu0
        %v1116 = vadd.f32 0.0, %v1115
        %v1117 = vpop.f32.mrb[0].mxu0
        %v1118 = vpop.f32.mrb[0].mxu0
        %v1119 = vadd.f32 0.0, %v1118
        %v1120 = vpop.f32.mrb[0].mxu0
        %1121 = vmatprep.mubr.bf16.mxu0 0
        %1122 = vmatmul.mubr.bf16.gmra.mrb[0].mxu0 %v1062
        %v1123 = vpop.f32.mrb[0].mxu0
        %v1124 = vadd.f32 0.0, %v1123
        %v1125 = vpop.f32.mrb[0].mxu0
        %v1126 = vpop.f32.mrb[0].mxu0
        %v1127 = vadd.f32 0.0, %v1126
        %v1128 = vpop.f32.mrb[0].mxu0
        %1129 = vmatprep.mubr.bf16.mxu0 0
        %1130 = vmatmul.mubr.bf16.gmra.mrb[0].mxu0 %v1065
        %v1131 = vpop.f32.mrb[0].mxu0
        %v1132 = vadd.f32 0.0, %v1131
        %v1133 = vpop.f32.mrb[0].mxu0
        %v1134 = vpop.f32.mrb[0].mxu0
        %v1135 = vadd.f32 0.0, %v1134
        %v1136 = vpop.f32.mrb[0].mxu0
        %1137 = vmatprep.mubr.bf16.mxu0 0
        %1138 = vmatmul.mubr.bf16.gmra.mrb[0].mxu0 %v1068
        %v1139 = vpop.f32.mrb[0].mxu0
        %v1140 = vadd.f32 0.0, %v1139
        %v1141 = vpop.f32.mrb[0].mxu0
        %v1142 = vpop.f32.mrb[0].mxu0
        %v1143 = vpop.f32.mrb[0].mxu0
        %1144 = vdwg.mxu0
        %v1145 = vadd.f32 %v1014, %v1108
        %v1146 = vadd.f32 %v1015, %v1111
        %v1147 = vadd.f32 %v1016, %v1116
        %v1148 = vadd.f32 %v1017, %v1119
        %v1149 = vadd.f32 %v1018, %v1124
        %v1150 = vadd.f32 %v1019, %v1127
        %v1151 = vadd.f32 %v1020, %v1132
        %v1152 = vadd.f32 %v1021, %v1135
        %v1153 = vadd.f32 %v1022, %v1140
        %v1154 = vld [vmem:[%s386] sm:$0xf]
        %v1155 = vld [vmem:[%s386 + $0x4] sm:$0xf]
        %v1156 = vld [vmem:[%s386 + $0x8] sm:$0xf]
        %v1157 = vld [vmem:[%s386 + $0xc] sm:$0xf]
        %v1158 = vld [vmem:[%s386 + $0x10] sm:$0xf]
        %v1159 = vld [vmem:[%s386 + $0x14] sm:$0xf]
        %v1160 = vld [vmem:[%s386 + $0x18] sm:$0xf]
        %v1161 = vld [vmem:[%s386 + $0x1c] sm:$0xf]
        %v1162 = vld [vmem:[%s386 + $0x20] sm:$0xf]
        %v1163 = vld [vmem:[%s386 + $0x24] sm:$0x1]
        %v1174 = vunpack.c.l.b16 %v1154
        %v1175 = vunpack.c.l.b16 %v1155
        %v1176 = vunpack.c.l.b16 %v1156
        %v1177 = vunpack.c.l.b16 %v1157
        %v1178 = vunpack.c.l.b16 %v1158
        %v1179 = vunpack.c.l.b16 %v1159
        %v1180 = vunpack.c.l.b16 %v1160
        %v1181 = vunpack.c.l.b16 %v1161
        %v1182 = vunpack.c.l.b16 %v1162
        %v1183 = vunpack.c.l.b16 %v1163
        %v1184 = vpack.c.b16 %v1175, %v1174
        %v1185 = vpack.c.b16 %v1177, %v1176
        %v1186 = vpack.c.b16 %v1179, %v1178
        %v1187 = vpack.c.b16 %v1181, %v1180
        %v1188 = vpack.c.b16 %v1183, %v1182
        %v1190 = vshrl.u32 %v1184, 16
        %v1192 = vshll.u32 %v1184, 16
        %v1194 = vrot.slane %v1192, 1
        %v1195 = vor.u32 %v1190, %v1194
        %v1197 = vshll.u32 %v1185, 16
        %v1199 = vrot.slane %v1197, 1
        %v1200 = vsel %vm753, %v1195, %v1199
        %v1201 = vshrl.u32 %v1185, 16
        %v1203 = vor.u32 %v1201, %v1199
        %v1205 = vshll.u32 %v1186, 16
        %v1207 = vrot.slane %v1205, 1
        %v1208 = vsel %vm753, %v1203, %v1207
        %v1209 = vshrl.u32 %v1186, 16
        %v1211 = vor.u32 %v1209, %v1207
        %v1213 = vshll.u32 %v1187, 16
        %v1215 = vrot.slane %v1213, 1
        %v1216 = vsel %vm753, %v1211, %v1215
        %v1217 = vshrl.u32 %v1187, 16
        %v1219 = vor.u32 %v1217, %v1215
        %v1221 = vshll.u32 %v1188, 16
        %v1223 = vrot.slane %v1221, 1
        %v1224 = vsel %vm753, %v1219, %v1223
        %v1225 = vshrl.u32 %v1188, 16
        %v1227 = vor.u32 %v1225, %v1223
        %v1229 = vsel %vm513, %v1200, 0
        %v1232 = vsel %vm513, %v1208, 0
        %v1235 = vsel %vm513, %v1216, 0
        %v1238 = vsel %vm513, %v1224, 0
        %v1241 = vsel %vm513, %v1227, 0
        %v1244 = vsel %vm529, %v465, 0
        %1246 = vmatprep.subr.bf16.mxu0 0
        %1247 = vmatpush1.bf16.msra.mxu0 %v1244
        %1248 = vmatprep.subr.bf16.mxu0 0
        %1249 = vmatpush1.bf16.msra.mxu0 0
        %1250 = vmatprep.subr.bf16.mxu0 0
        %1251 = vmatpush1.bf16.msra.mxu0 0
        %1252 = vmatprep.subr.bf16.mxu0 0
        %1253 = vmatpush1.bf16.msra.mxu0 0
        %1254 = vmatprep.subr.bf16.mxu0 0
        %1255 = vmatpush1.bf16.msra.mxu0 0
        %1256 = vmatprep.subr.bf16.mxu0 0
        %1257 = vmatpush1.bf16.msra.mxu0 0
        %1258 = vmatprep.subr.bf16.mxu0 0
        %1259 = vmatpush1.bf16.msra.mxu0 0
        %1260 = vmatprep.subr.bf16.mxu0 0
        %1261 = vmatpush1.bf16.msra.mxu0 0
        %1262 = vmatprep.subr.bf16.mxu0 0
        %1263 = vmatpush1.bf16.msra.mxu0 0
        %1264 = vmatprep.subr.bf16.mxu0 0
        %1265 = vmatpush1.bf16.msra.mxu0 0
        %1266 = vmatprep.subr.bf16.mxu0 0
        %1267 = vmatpush1.bf16.msra.mxu0 0
        %1268 = vmatprep.subr.bf16.mxu0 0
        %1269 = vmatpush1.bf16.msra.mxu0 0
        %1270 = vmatprep.subr.bf16.mxu0 0
        %1271 = vmatpush1.bf16.msra.mxu0 0
        %1272 = vmatprep.subr.bf16.mxu0 0
        %1273 = vmatpush1.bf16.msra.mxu0 0
        %1274 = vmatprep.subr.bf16.mxu0 0
        %1275 = vmatpush1.bf16.msra.mxu0 0
        %1276 = vmatprep.subr.bf16.mxu0 0
        %1277 = vmatpush1.bf16.msra.mxu0 0
        %1278 = vmatprep.mubr.bf16.mxu0 0
        %1279 = vmatmul.mubr.bf16.gmra.mrb[0].mxu0 %v1229
        %v1280 = vpop.f32.mrb[0].mxu0
        %v1281 = vadd.f32 0.0, %v1280
        %v1282 = vpop.f32.mrb[0].mxu0
        %v1283 = vpop.f32.mrb[0].mxu0
        %v1284 = vadd.f32 0.0, %v1283
        %v1285 = vpop.f32.mrb[0].mxu0
        %1286 = vmatprep.mubr.bf16.mxu0 0
        %1287 = vmatmul.mubr.bf16.gmra.mrb[0].mxu0 %v1232
        %v1288 = vpop.f32.mrb[0].mxu0
        %v1289 = vadd.f32 0.0, %v1288
        %v1290 = vpop.f32.mrb[0].mxu0
        %v1291 = vpop.f32.mrb[0].mxu0
        %v1292 = vadd.f32 0.0, %v1291
        %v1293 = vpop.f32.mrb[0].mxu0
        %1294 = vmatprep.mubr.bf16.mxu0 0
        %1295 = vmatmul.mubr.bf16.gmra.mrb[0].mxu0 %v1235
        %v1296 = vpop.f32.mrb[0].mxu0
        %v1297 = vadd.f32 0.0, %v1296
        %v1298 = vpop.f32.mrb[0].mxu0
        %v1299 = vpop.f32.mrb[0].mxu0
        %v1300 = vadd.f32 0.0, %v1299
        %v1301 = vpop.f32.mrb[0].mxu0
        %1302 = vmatprep.mubr.bf16.mxu0 0
        %1303 = vmatmul.mubr.bf16.gmra.mrb[0].mxu0 %v1238
        %v1304 = vpop.f32.mrb[0].mxu0
        %v1305 = vadd.f32 0.0, %v1304
        %v1306 = vpop.f32.mrb[0].mxu0
        %v1307 = vpop.f32.mrb[0].mxu0
        %v1308 = vadd.f32 0.0, %v1307
        %v1309 = vpop.f32.mrb[0].mxu0
        %1310 = vmatprep.mubr.bf16.mxu0 0
        %1311 = vmatmul.mubr.bf16.gmra.mrb[0].mxu0 %v1241
        %v1312 = vpop.f32.mrb[0].mxu0
        %v1313 = vadd.f32 0.0, %v1312
        %v1314 = vpop.f32.mrb[0].mxu0
        %v1315 = vpop.f32.mrb[0].mxu0
        %v1316 = vpop.f32.mrb[0].mxu0
        %1317 = vdwg.mxu0
        %v1318 = vadd.f32 %v1145, %v1281
        %v1319 = vadd.f32 %v1146, %v1284
        %v1320 = vadd.f32 %v1147, %v1289
        %v1321 = vadd.f32 %v1148, %v1292
        %v1322 = vadd.f32 %v1149, %v1297
        %v1323 = vadd.f32 %v1150, %v1300
        %v1324 = vadd.f32 %v1151, %v1305
        %v1325 = vadd.f32 %v1152, %v1308
        %v1326 = vadd.f32 %v1153, %v1313
        %v1327 = vld [vmem:[%s368 + $0x4] sm:$0xf]
        %v1328 = vld [vmem:[%s368 + $0x8] sm:$0xf]
        %v1329 = vld [vmem:[%s368 + $0xc] sm:$0xf]
        %v1330 = vld [vmem:[%s368 + $0x10] sm:$0xf]
        %v1331 = vld [vmem:[%s368 + $0x14] sm:$0xf]
        %v1332 = vld [vmem:[%s368 + $0x18] sm:$0xf]
        %v1333 = vld [vmem:[%s368 + $0x1c] sm:$0xf]
        %v1334 = vld [vmem:[%s368 + $0x20] sm:$0xf]
        %v1335 = vld [vmem:[%s368 + $0x24] sm:$0xf]
        %v1336 = vld [vmem:[%s368 + $0x28] sm:$0x1]
        %v1347 = vunpack.c.l.b16 %v1327
        %v1348 = vunpack.c.l.b16 %v1328
        %v1349 = vunpack.c.l.b16 %v1329
        %v1350 = vunpack.c.l.b16 %v1330
        %v1351 = vunpack.c.l.b16 %v1331
        %v1352 = vunpack.c.l.b16 %v1332
        %v1353 = vunpack.c.l.b16 %v1333
        %v1354 = vunpack.c.l.b16 %v1334
        %v1355 = vunpack.c.l.b16 %v1335
        %v1356 = vunpack.c.l.b16 %v1336
        %v1357 = vpack.c.b16 %v1348, %v1347
        %v1358 = vpack.c.b16 %v1350, %v1349
        %v1359 = vpack.c.b16 %v1352, %v1351
        %v1360 = vpack.c.b16 %v1354, %v1353
        %v1361 = vpack.c.b16 %v1356, %v1355
        %v1363 = vshrl.u32 %v1357, 16
        %v1365 = vshll.u32 %v1357, 16
        %v1367 = vrot.slane %v1365, 1
        %v1368 = vor.u32 %v1363, %v1367
        %v1370 = vshll.u32 %v1358, 16
        %v1372 = vrot.slane %v1370, 1
        %v1373 = vsel %vm753, %v1368, %v1372
        %v1374 = vshrl.u32 %v1358, 16
        %v1376 = vor.u32 %v1374, %v1372
        %v1378 = vshll.u32 %v1359, 16
        %v1380 = vrot.slane %v1378, 1
        %v1381 = vsel %vm753, %v1376, %v1380
        %v1382 = vshrl.u32 %v1359, 16
        %v1384 = vor.u32 %v1382, %v1380
        %v1386 = vshll.u32 %v1360, 16
        %v1388 = vrot.slane %v1386, 1
        %v1389 = vsel %vm753, %v1384, %v1388
        %v1390 = vshrl.u32 %v1360, 16
        %v1392 = vor.u32 %v1390, %v1388
        %v1394 = vshll.u32 %v1361, 16
        %v1396 = vrot.slane %v1394, 1
        %v1397 = vsel %vm753, %v1392, %v1396
        %v1398 = vshrl.u32 %v1361, 16
        %v1400 = vor.u32 %v1398, %v1396
        %v1402 = vsel %vm513, %v1373, 0
        %v1405 = vsel %vm513, %v1381, 0
        %v1408 = vsel %vm513, %v1389, 0
        %v1411 = vsel %vm513, %v1397, 0
        %v1414 = vsel %vm513, %v1400, 0
        %v1417 = vsel %vm529, %v467, 0
        %1419 = vmatprep.subr.bf16.mxu0 0
        %1420 = vmatpush1.bf16.msra.mxu0 %v1417
        %1421 = vmatprep.subr.bf16.mxu0 0
        %1422 = vmatpush1.bf16.msra.mxu0 0
        %1423 = vmatprep.subr.bf16.mxu0 0
        %1424 = vmatpush1.bf16.msra.mxu0 0
        %1425 = vmatprep.subr.bf16.mxu0 0
        %1426 = vmatpush1.bf16.msra.mxu0 0
        %1427 = vmatprep.subr.bf16.mxu0 0
        %1428 = vmatpush1.bf16.msra.mxu0 0
        %1429 = vmatprep.subr.bf16.mxu0 0
        %1430 = vmatpush1.bf16.msra.mxu0 0
        %1431 = vmatprep.subr.bf16.mxu0 0
        %1432 = vmatpush1.bf16.msra.mxu0 0
        %1433 = vmatprep.subr.bf16.mxu0 0
        %1434 = vmatpush1.bf16.msra.mxu0 0
        %1435 = vmatprep.subr.bf16.mxu0 0
        %1436 = vmatpush1.bf16.msra.mxu0 0
        %1437 = vmatprep.subr.bf16.mxu0 0
        %1438 = vmatpush1.bf16.msra.mxu0 0
        %1439 = vmatprep.subr.bf16.mxu0 0
        %1440 = vmatpush1.bf16.msra.mxu0 0
        %1441 = vmatprep.subr.bf16.mxu0 0
        %1442 = vmatpush1.bf16.msra.mxu0 0
        %1443 = vmatprep.subr.bf16.mxu0 0
        %1444 = vmatpush1.bf16.msra.mxu0 0
        %1445 = vmatprep.subr.bf16.mxu0 0
        %1446 = vmatpush1.bf16.msra.mxu0 0
        %1447 = vmatprep.subr.bf16.mxu0 0
        %1448 = vmatpush1.bf16.msra.mxu0 0
        %1449 = vmatprep.subr.bf16.mxu0 0
        %1450 = vmatpush1.bf16.msra.mxu0 0
        %1451 = vmatprep.mubr.bf16.mxu0 0
        %1452 = vmatmul.mubr.bf16.gmra.mrb[0].mxu0 %v1402
        %v1453 = vpop.f32.mrb[0].mxu0
        %v1454 = vadd.f32 0.0, %v1453
        %v1455 = vpop.f32.mrb[0].mxu0
        %v1456 = vpop.f32.mrb[0].mxu0
        %v1457 = vadd.f32 0.0, %v1456
        %v1458 = vpop.f32.mrb[0].mxu0
        %1459 = vmatprep.mubr.bf16.mxu0 0
        %1460 = vmatmul.mubr.bf16.gmra.mrb[0].mxu0 %v1405
        %v1461 = vpop.f32.mrb[0].mxu0
        %v1462 = vadd.f32 0.0, %v1461
        %v1463 = vpop.f32.mrb[0].mxu0
        %v1464 = vpop.f32.mrb[0].mxu0
        %v1465 = vadd.f32 0.0, %v1464
        %v1466 = vpop.f32.mrb[0].mxu0
        %1467 = vmatprep.mubr.bf16.mxu0 0
        %1468 = vmatmul.mubr.bf16.gmra.mrb[0].mxu0 %v1408
        %v1469 = vpop.f32.mrb[0].mxu0
        %v1470 = vadd.f32 0.0, %v1469
        %v1471 = vpop.f32.mrb[0].mxu0
        %v1472 = vpop.f32.mrb[0].mxu0
        %v1473 = vadd.f32 0.0, %v1472
        %v1474 = vpop.f32.mrb[0].mxu0
        %1475 = vmatprep.mubr.bf16.mxu0 0
        %1476 = vmatmul.mubr.bf16.gmra.mrb[0].mxu0 %v1411
        %v1477 = vpop.f32.mrb[0].mxu0
        %v1478 = vadd.f32 0.0, %v1477
        %v1479 = vpop.f32.mrb[0].mxu0
        %v1480 = vpop.f32.mrb[0].mxu0
        %v1481 = vadd.f32 0.0, %v1480
        %v1482 = vpop.f32.mrb[0].mxu0
        %1483 = vmatprep.mubr.bf16.mxu0 0
        %1484 = vmatmul.mubr.bf16.gmra.mrb[0].mxu0 %v1414
        %v1485 = vpop.f32.mrb[0].mxu0
        %v1486 = vadd.f32 0.0, %v1485
        %v1487 = vpop.f32.mrb[0].mxu0
        %v1488 = vpop.f32.mrb[0].mxu0
        %v1489 = vpop.f32.mrb[0].mxu0
        %1490 = vdwg.mxu0
        %v1491 = vadd.f32 %v1318, %v1454
        %v1492 = vadd.f32 %v1319, %v1457
        %v1493 = vadd.f32 %v1320, %v1462
        %v1494 = vadd.f32 %v1321, %v1465
        %v1495 = vadd.f32 %v1322, %v1470
        %v1496 = vadd.f32 %v1323, %v1473
        %v1497 = vadd.f32 %v1324, %v1478
        %v1498 = vadd.f32 %v1325, %v1481
        %v1499 = vadd.f32 %v1326, %v1486
        %v1500 = vld [vmem:[%s377 + $0x4] sm:$0xf]
        %v1501 = vld [vmem:[%s377 + $0x8] sm:$0xf]
        %v1502 = vld [vmem:[%s377 + $0xc] sm:$0xf]
        %v1503 = vld [vmem:[%s377 + $0x10] sm:$0xf]
        %v1504 = vld [vmem:[%s377 + $0x14] sm:$0xf]
        %v1505 = vld [vmem:[%s377 + $0x18] sm:$0xf]
        %v1506 = vld [vmem:[%s377 + $0x1c] sm:$0xf]
        %v1507 = vld [vmem:[%s377 + $0x20] sm:$0xf]
        %v1508 = vld [vmem:[%s377 + $0x24] sm:$0xf]
        %v1509 = vld [vmem:[%s377 + $0x28] sm:$0x1]
        %v1520 = vunpack.c.l.b16 %v1500
        %v1521 = vunpack.c.l.b16 %v1501
        %v1522 = vunpack.c.l.b16 %v1502
        %v1523 = vunpack.c.l.b16 %v1503
        %v1524 = vunpack.c.l.b16 %v1504
        %v1525 = vunpack.c.l.b16 %v1505
        %v1526 = vunpack.c.l.b16 %v1506
        %v1527 = vunpack.c.l.b16 %v1507
        %v1528 = vunpack.c.l.b16 %v1508
        %v1529 = vunpack.c.l.b16 %v1509
        %v1530 = vpack.c.b16 %v1521, %v1520
        %v1531 = vpack.c.b16 %v1523, %v1522
        %v1532 = vpack.c.b16 %v1525, %v1524
        %v1533 = vpack.c.b16 %v1527, %v1526
        %v1534 = vpack.c.b16 %v1529, %v1528
        %v1536 = vshrl.u32 %v1530, 16
        %v1538 = vshll.u32 %v1530, 16
        %v1540 = vrot.slane %v1538, 1
        %v1541 = vor.u32 %v1536, %v1540
        %v1543 = vshll.u32 %v1531, 16
        %v1545 = vrot.slane %v1543, 1
        %v1546 = vsel %vm753, %v1541, %v1545
        %v1547 = vshrl.u32 %v1531, 16
        %v1549 = vor.u32 %v1547, %v1545
        %v1551 = vshll.u32 %v1532, 16
        %v1553 = vrot.slane %v1551, 1
        %v1554 = vsel %vm753, %v1549, %v1553
        %v1555 = vshrl.u32 %v1532, 16
        %v1557 = vor.u32 %v1555, %v1553
        %v1559 = vshll.u32 %v1533, 16
        %v1561 = vrot.slane %v1559, 1
        %v1562 = vsel %vm753, %v1557, %v1561
        %v1563 = vshrl.u32 %v1533, 16
        %v1565 = vor.u32 %v1563, %v1561
        %v1567 = vshll.u32 %v1534, 16
        %v1569 = vrot.slane %v1567, 1
        %v1570 = vsel %vm753, %v1565, %v1569
        %v1571 = vshrl.u32 %v1534, 16
        %v1573 = vor.u32 %v1571, %v1569
        %v1575 = vsel %vm513, %v1546, 0
        %v1578 = vsel %vm513, %v1554, 0
        %v1581 = vsel %vm513, %v1562, 0
        %v1584 = vsel %vm513, %v1570, 0
        %v1587 = vsel %vm513, %v1573, 0
        %v1590 = vsel %vm529, %v469, 0
        %1592 = vmatprep.subr.bf16.mxu0 0
        %1593 = vmatpush1.bf16.msra.mxu0 %v1590
        %1594 = vmatprep.subr.bf16.mxu0 0
        %1595 = vmatpush1.bf16.msra.mxu0 0
        %1596 = vmatprep.subr.bf16.mxu0 0
        %1597 = vmatpush1.bf16.msra.mxu0 0
        %1598 = vmatprep.subr.bf16.mxu0 0
        %1599 = vmatpush1.bf16.msra.mxu0 0
        %1600 = vmatprep.subr.bf16.mxu0 0
        %1601 = vmatpush1.bf16.msra.mxu0 0
        %1602 = vmatprep.subr.bf16.mxu0 0
        %1603 = vmatpush1.bf16.msra.mxu0 0
        %1604 = vmatprep.subr.bf16.mxu0 0
        %1605 = vmatpush1.bf16.msra.mxu0 0
        %1606 = vmatprep.subr.bf16.mxu0 0
        %1607 = vmatpush1.bf16.msra.mxu0 0
        %1608 = vmatprep.subr.bf16.mxu0 0
        %1609 = vmatpush1.bf16.msra.mxu0 0
        %1610 = vmatprep.subr.bf16.mxu0 0
        %1611 = vmatpush1.bf16.msra.mxu0 0
        %1612 = vmatprep.subr.bf16.mxu0 0
        %1613 = vmatpush1.bf16.msra.mxu0 0
        %1614 = vmatprep.subr.bf16.mxu0 0
        %1615 = vmatpush1.bf16.msra.mxu0 0
        %1616 = vmatprep.subr.bf16.mxu0 0
        %1617 = vmatpush1.bf16.msra.mxu0 0
        %1618 = vmatprep.subr.bf16.mxu0 0
        %1619 = vmatpush1.bf16.msra.mxu0 0
        %1620 = vmatprep.subr.bf16.mxu0 0
        %1621 = vmatpush1.bf16.msra.mxu0 0
        %1622 = vmatprep.subr.bf16.mxu0 0
        %1623 = vmatpush1.bf16.msra.mxu0 0
        %1624 = vmatprep.mubr.bf16.mxu0 0
        %1625 = vmatmul.mubr.bf16.gmra.mrb[0].mxu0 %v1575
        %v1626 = vpop.f32.mrb[0].mxu0
        %v1627 = vadd.f32 0.0, %v1626
        %v1628 = vpop.f32.mrb[0].mxu0
        %v1629 = vpop.f32.mrb[0].mxu0
        %v1630 = vadd.f32 0.0, %v1629
        %v1631 = vpop.f32.mrb[0].mxu0
        %1632 = vmatprep.mubr.bf16.mxu0 0
        %1633 = vmatmul.mubr.bf16.gmra.mrb[0].mxu0 %v1578
        %v1634 = vpop.f32.mrb[0].mxu0
        %v1635 = vadd.f32 0.0, %v1634
        %v1636 = vpop.f32.mrb[0].mxu0
        %v1637 = vpop.f32.mrb[0].mxu0
        %v1638 = vadd.f32 0.0, %v1637
        %v1639 = vpop.f32.mrb[0].mxu0
        %1640 = vmatprep.mubr.bf16.mxu0 0
        %1641 = vmatmul.mubr.bf16.gmra.mrb[0].mxu0 %v1581
        %v1642 = vpop.f32.mrb[0].mxu0
        %v1643 = vadd.f32 0.0, %v1642
        %v1644 = vpop.f32.mrb[0].mxu0
        %v1645 = vpop.f32.mrb[0].mxu0
        %v1646 = vadd.f32 0.0, %v1645
        %v1647 = vpop.f32.mrb[0].mxu0
        %1648 = vmatprep.mubr.bf16.mxu0 0
        %1649 = vmatmul.mubr.bf16.gmra.mrb[0].mxu0 %v1584
        %v1650 = vpop.f32.mrb[0].mxu0
        %v1651 = vadd.f32 0.0, %v1650
        %v1652 = vpop.f32.mrb[0].mxu0
        %v1653 = vpop.f32.mrb[0].mxu0
        %v1654 = vadd.f32 0.0, %v1653
        %v1655 = vpop.f32.mrb[0].mxu0
        %1656 = vmatprep.mubr.bf16.mxu0 0
        %1657 = vmatmul.mubr.bf16.gmra.mrb[0].mxu0 %v1587
        %v1658 = vpop.f32.mrb[0].mxu0
        %v1659 = vadd.f32 0.0, %v1658
        %v1660 = vpop.f32.mrb[0].mxu0
        %v1661 = vpop.f32.mrb[0].mxu0
        %v1662 = vpop.f32.mrb[0].mxu0
        %1663 = vdwg.mxu0
        %v1664 = vadd.f32 %v1491, %v1627
        %v1665 = vadd.f32 %v1492, %v1630
        %v1666 = vadd.f32 %v1493, %v1635
        %v1667 = vadd.f32 %v1494, %v1638
        %v1668 = vadd.f32 %v1495, %v1643
        %v1669 = vadd.f32 %v1496, %v1646
        %v1670 = vadd.f32 %v1497, %v1651
        %v1671 = vadd.f32 %v1498, %v1654
        %v1672 = vadd.f32 %v1499, %v1659
        %v1673 = vld [vmem:[%s368 + $0x4] sm:$0xe]
        %v1675 = vunpack.c.l.b16 %v1673
        %v1676 = vpack.c.b16 %v1348, %v1675
        %vm1677 = vcmask 1046528
        %v1678 = vrot.slane %v1676, 1
        %v1679 = vrot.slane %v1358, 1
        %v1680 = vsel %vm1677, %v1678, %v1679
        %v1681 = vrot.slane %v1359, 1
        %v1682 = vsel %vm1677, %v1679, %v1681
        %v1683 = vrot.slane %v1360, 1
        %v1684 = vsel %vm1677, %v1681, %v1683
        %v1685 = vrot.slane %v1361, 1
        %v1686 = vsel %vm1677, %v1683, %v1685
        %v1688 = vsel %vm513, %v1680, 0
        %v1691 = vsel %vm513, %v1682, 0
        %v1694 = vsel %vm513, %v1684, 0
        %v1697 = vsel %vm513, %v1686, 0
        %v1700 = vsel %vm513, %v1685, 0
        %v1703 = vsel %vm529, %v471, 0
        %1705 = vmatprep.subr.bf16.mxu0 0
        %1706 = vmatpush1.bf16.msra.mxu0 %v1703
        %1707 = vmatprep.subr.bf16.mxu0 0
        %1708 = vmatpush1.bf16.msra.mxu0 0
        %1709 = vmatprep.subr.bf16.mxu0 0
        %1710 = vmatpush1.bf16.msra.mxu0 0
        %1711 = vmatprep.subr.bf16.mxu0 0
        %1712 = vmatpush1.bf16.msra.mxu0 0
        %1713 = vmatprep.subr.bf16.mxu0 0
        %1714 = vmatpush1.bf16.msra.mxu0 0
        %1715 = vmatprep.subr.bf16.mxu0 0
        %1716 = vmatpush1.bf16.msra.mxu0 0
        %1717 = vmatprep.subr.bf16.mxu0 0
        %1718 = vmatpush1.bf16.msra.mxu0 0
        %1719 = vmatprep.subr.bf16.mxu0 0
        %1720 = vmatpush1.bf16.msra.mxu0 0
        %1721 = vmatprep.subr.bf16.mxu0 0
        %1722 = vmatpush1.bf16.msra.mxu0 0
        %1723 = vmatprep.subr.bf16.mxu0 0
        %1724 = vmatpush1.bf16.msra.mxu0 0
        %1725 = vmatprep.subr.bf16.mxu0 0
        %1726 = vmatpush1.bf16.msra.mxu0 0
        %1727 = vmatprep.subr.bf16.mxu0 0
        %1728 = vmatpush1.bf16.msra.mxu0 0
        %1729 = vmatprep.subr.bf16.mxu0 0
        %1730 = vmatpush1.bf16.msra.mxu0 0
        %1731 = vmatprep.subr.bf16.mxu0 0
        %1732 = vmatpush1.bf16.msra.mxu0 0
        %1733 = vmatprep.subr.bf16.mxu0 0
        %1734 = vmatpush1.bf16.msra.mxu0 0
        %1735 = vmatprep.subr.bf16.mxu0 0
        %1736 = vmatpush1.bf16.msra.mxu0 0
        %1737 = vmatprep.mubr.bf16.mxu0 0
        %1738 = vmatmul.mubr.bf16.gmra.mrb[0].mxu0 %v1688
        %v1739 = vpop.f32.mrb[0].mxu0
        %v1740 = vadd.f32 0.0, %v1739
        %v1741 = vpop.f32.mrb[0].mxu0
        %v1742 = vpop.f32.mrb[0].mxu0
        %v1743 = vadd.f32 0.0, %v1742
        %v1744 = vpop.f32.mrb[0].mxu0
        %1745 = vmatprep.mubr.bf16.mxu0 0
        %1746 = vmatmul.mubr.bf16.gmra.mrb[0].mxu0 %v1691
        %v1747 = vpop.f32.mrb[0].mxu0
        %v1748 = vadd.f32 0.0, %v1747
        %v1749 = vpop.f32.mrb[0].mxu0
        %v1750 = vpop.f32.mrb[0].mxu0
        %v1751 = vadd.f32 0.0, %v1750
        %v1752 = vpop.f32.mrb[0].mxu0
        %1753 = vmatprep.mubr.bf16.mxu0 0
        %1754 = vmatmul.mubr.bf16.gmra.mrb[0].mxu0 %v1694
        %v1755 = vpop.f32.mrb[0].mxu0
        %v1756 = vadd.f32 0.0, %v1755
        %v1757 = vpop.f32.mrb[0].mxu0
        %v1758 = vpop.f32.mrb[0].mxu0
        %v1759 = vadd.f32 0.0, %v1758
        %v1760 = vpop.f32.mrb[0].mxu0
        %1761 = vmatprep.mubr.bf16.mxu0 0
        %1762 = vmatmul.mubr.bf16.gmra.mrb[0].mxu0 %v1697
        %v1763 = vpop.f32.mrb[0].mxu0
        %v1764 = vadd.f32 0.0, %v1763
        %v1765 = vpop.f32.mrb[0].mxu0
        %v1766 = vpop.f32.mrb[0].mxu0
        %v1767 = vadd.f32 0.0, %v1766
        %v1768 = vpop.f32.mrb[0].mxu0
        %1769 = vmatprep.mubr.bf16.mxu0 0
        %1770 = vmatmul.mubr.bf16.gmra.mrb[0].mxu0 %v1700
        %v1771 = vpop.f32.mrb[0].mxu0
        %v1772 = vadd.f32 0.0, %v1771
        %v1773 = vpop.f32.mrb[0].mxu0
        %v1774 = vpop.f32.mrb[0].mxu0
        %v1775 = vpop.f32.mrb[0].mxu0
        %1776 = vdwg.mxu0
        %v1777 = vadd.f32 %v1664, %v1740
        %v1778 = vadd.f32 %v1665, %v1743
        %v1779 = vadd.f32 %v1666, %v1748
        %v1780 = vadd.f32 %v1667, %v1751
        %v1781 = vadd.f32 %v1668, %v1756
        %v1782 = vadd.f32 %v1669, %v1759
        %v1783 = vadd.f32 %v1670, %v1764
        %v1784 = vadd.f32 %v1671, %v1767
        %v1785 = vadd.f32 %v1672, %v1772
        %1786 = vst.msk [vmem:[%s446] sm:$0xff] %vm513, %v1777
        %1787 = vst.msk [vmem:[%s446 + $0x8] sm:$0xff] %vm513, %v1778
        %1788 = vst.msk [vmem:[%s446 + $0x10] sm:$0xff] %vm513, %v1779
        %1789 = vst.msk [vmem:[%s446 + $0x18] sm:$0xff] %vm513, %v1780
        %1790 = vst.msk [vmem:[%s446 + $0x20] sm:$0xff] %vm513, %v1781
        %1791 = vst.msk [vmem:[%s446 + $0x28] sm:$0xff] %vm513, %v1782
        %1792 = vst.msk [vmem:[%s446 + $0x30] sm:$0xff] %vm513, %v1783
        %1793 = vst.msk [vmem:[%s446 + $0x38] sm:$0xff] %vm513, %v1784
        %1794 = vst.msk [vmem:[%s446 + $0x40] sm:$0xff] %vm513, %v1785
        %v1795 = vld [vmem:[#allocation11] sm:$0xff]
        %v1796 = vld [vmem:[#allocation11 + $0x8] sm:$0xff]
        %v1797 = vld [vmem:[#allocation11 + $0x10] sm:$0xff]
        %v1798 = vld [vmem:[#allocation11 + $0x18] sm:$0xff]
        %v1799 = vld [vmem:[#allocation11 + $0x20] sm:$0xff]
        %v1800 = vld [vmem:[#allocation11 + $0x28] sm:$0xff]
        %v1801 = vld [vmem:[#allocation11 + $0x30] sm:$0xff]
        %v1802 = vld [vmem:[#allocation11 + $0x38] sm:$0xff]
        %v1803 = vld [vmem:[#allocation11 + $0x40] sm:$0xff]
        %1805 = vset.pattern.permute.xlu0 0
        %1806 = vperm.xlu0 %1805, %v1795
        %v1807 = vpop.permute.xlu0 %1806
        %1810 = vset.pattern.permute.xlu0 0
        %1811 = vperm.xlu0 %1810, %v1796
        %v1812 = vpop.permute.xlu0 %1811
        %1815 = vset.pattern.permute.xlu0 0
        %1816 = vperm.xlu0 %1815, %v1797
        %v1817 = vpop.permute.xlu0 %1816
        %1820 = vset.pattern.permute.xlu0 0
        %1821 = vperm.xlu0 %1820, %v1798
        %v1822 = vpop.permute.xlu0 %1821
        %1825 = vset.pattern.permute.xlu0 0
        %1826 = vperm.xlu0 %1825, %v1799
        %v1827 = vpop.permute.xlu0 %1826
        %1830 = vset.pattern.permute.xlu0 0
        %1831 = vperm.xlu0 %1830, %v1800
        %v1832 = vpop.permute.xlu0 %1831
        %1835 = vset.pattern.permute.xlu0 0
        %1836 = vperm.xlu0 %1835, %v1801
        %v1837 = vpop.permute.xlu0 %1836
        %1840 = vset.pattern.permute.xlu0 0
        %1841 = vperm.xlu0 %1840, %v1802
        %v1842 = vpop.permute.xlu0 %1841
        %1845 = vset.pattern.permute.xlu0 0
        %1846 = vperm.xlu0 %1845, %v1803
        %v1847 = vpop.permute.xlu0 %1846
        %v1849 = vmul.f32 %v1777, %v1807
        %v1850 = vmul.f32 %v1778, %v1812
        %v1851 = vmul.f32 %v1779, %v1817
        %v1852 = vmul.f32 %v1780, %v1822
        %v1853 = vmul.f32 %v1781, %v1827
        %v1854 = vmul.f32 %v1782, %v1832
        %v1855 = vmul.f32 %v1783, %v1837
        %v1856 = vmul.f32 %v1784, %v1842
        %v1857 = vmul.f32 %v1785, %v1847
        %v1858 = vsel %vm513, %v1849, 0.0
        %v1859 = vsel %vm513, %v1850, 0.0
        %v1860 = vadd.f32 %v1858, %v1859
        %v1861 = vsel %vm513, %v1851, 0.0
        %v1862 = vadd.f32 %v1860, %v1861
        %v1863 = vsel %vm513, %v1852, 0.0
        %v1864 = vadd.f32 %v1862, %v1863
        %v1865 = vsel %vm513, %v1853, 0.0
        %v1866 = vadd.f32 %v1864, %v1865
        %v1867 = vsel %vm513, %v1854, 0.0
        %v1868 = vadd.f32 %v1866, %v1867
        %v1869 = vsel %vm513, %v1855, 0.0
        %v1870 = vadd.f32 %v1868, %v1869
        %v1871 = vsel %vm513, %v1856, 0.0
        %v1872 = vadd.f32 %v1870, %v1871
        %v1873 = vsel %vm513, %v1857, 0.0
        %v1874 = vadd.f32 %v1872, %v1873
        %v1875 = vrot.slane %v1874, 4
        %v1876 = vadd.f32 %v1874, %v1875
        %v1877 = vrot.slane %v1876, 2
        %v1878 = vadd.f32 %v1876, %v1877
        %v1879 = vrot.slane %v1878, 1
        %v1880 = vadd.f32 %v1878, %v1879
        %v1881 = vadd.f32 %v1880, 0.0
        %v1882 = vmul.f32 %v1849, %v1849
        %v1883 = vmul.f32 %v1850, %v1850
        %v1884 = vmul.f32 %v1851, %v1851
        %v1885 = vmul.f32 %v1852, %v1852
        %v1886 = vmul.f32 %v1853, %v1853
        %v1887 = vmul.f32 %v1854, %v1854
        %v1888 = vmul.f32 %v1855, %v1855
        %v1889 = vmul.f32 %v1856, %v1856
        %v1890 = vmul.f32 %v1857, %v1857
        %v1891 = vsel %vm513, %v1882, 0.0
        %v1892 = vsel %vm513, %v1883, 0.0
        %v1893 = vadd.f32 %v1891, %v1892
        %v1894 = vsel %vm513, %v1884, 0.0
        %v1895 = vadd.f32 %v1893, %v1894
        %v1896 = vsel %vm513, %v1885, 0.0
        %v1897 = vadd.f32 %v1895, %v1896
        %v1898 = vsel %vm513, %v1886, 0.0
        %v1899 = vadd.f32 %v1897, %v1898
        %v1900 = vsel %vm513, %v1887, 0.0
        %v1901 = vadd.f32 %v1899, %v1900
        %v1902 = vsel %vm513, %v1888, 0.0
        %v1903 = vadd.f32 %v1901, %v1902
        %v1904 = vsel %vm513, %v1889, 0.0
        %v1905 = vadd.f32 %v1903, %v1904
        %v1906 = vsel %vm513, %v1890, 0.0
        %v1907 = vadd.f32 %v1905, %v1906
        %v1908 = vrot.slane %v1907, 4
        %v1909 = vadd.f32 %v1907, %v1908
        %v1910 = vrot.slane %v1909, 2
        %v1911 = vadd.f32 %v1909, %v1910
        %v1912 = vrot.slane %v1911, 1
        %v1913 = vadd.f32 %v1911, %v1912
        %v1914 = vadd.f32 %v1913, 0.0
        %vm1915 = vcmask 24576
        %1916 = vst.msk [vmem:[%s453] sm:$0x1] %vm1915, %v1881
        %1917 = vst.msk [vmem:[%s453 + $0x1] sm:$0x1] %vm1915, %v1914
        %s1918 = sand.u32 %s189, 1
        %s1919 = scalar_lea.sflag [#allocation4], %s1918
        %s1920 = sand.u32 %s189, 1
        %s1921 = smul.addr %s1920, 72
        %s1922 = scalar_lea.vmem [#allocation13], %s1921
        %s1923 = sand.u32 %s215, 1
        %s1924 = scalar_lea.sflag [#allocation15], %s1923
        %s1925 = sand.u32 %s215, 1
        %s1926 = smul.addr %s1925, 2
        %s1927 = scalar_lea.vmem [#allocation14], %s1926
        // Predicated region
        $region69: #{bottleneck_block.9} parent=43 // pred_check
          %p1928 = pneg %p199
        $region70: #{bottleneck_block.9} parent=43 // pred_check_branch
          %1930 = sbr.rel (%p1928) target = $region72
        $region71: #{bottleneck_block.9} parent=43 // pred_region
          %s1932 = ssub.s32 1152, 1152
          %1933 = vsyncadd %s1919, %s1932
          %s1934 = smul.addr %s35, 9
          %s1935 = smul.addr %s1934, 128
          %s1936 = scalar_lea.hbm %s6, %s1935
          %s1937 = sshll.u32 %s1922, 4
          %s1938 = int_to_ptr.vmem [resolvable:$true] %s1937
          %1943 = dma.vmem_to_hbm [thread:$0]  %s1938, 1152, %s1936, %s1919, 128, 128, 8
        $region72: #{bottleneck_block.9} parent=43 // pred_fallthru
          _
        // Predicated region
        $region73: #{bottleneck_block.9} parent=43 // pred_check
          %p1944 = pneg %p225
        $region74: #{bottleneck_block.9} parent=43 // pred_check_branch
          %1946 = sbr.rel (%p1944) target = $region76
        $region75: #{bottleneck_block.9} parent=43 // pred_region
          %s1948 = ssub.s32 32, 32
          %1949 = vsyncadd %s1924, %s1948
          %s1950 = smul.addr %s35, 32
          %s1951 = scalar_lea.hbm %s7, %s1950
          %s1953 = sshll.u32 %s1927, 4
          %s1954 = int_to_ptr.vmem [resolvable:$true] %s1953
          %1956 = dma.vmem_to_hbm [thread:$0]  %s1954, 32, %s1951, %s1924
        $region76: #{bottleneck_block.9} parent=43 // pred_fallthru
          _
      $region44: #{bottleneck_block.9} parent=5 // pred_fallthru
        _
      %p1957 = scmp.le.s32.totalorder 2, %s30
      // Predicated region
      $region77: #{bottleneck_block.9} parent=5 // pred_check
        %p1958 = pneg %p1957
      $region78: #{bottleneck_block.9} parent=5 // pred_check_branch
        %1960 = sbr.rel (%p1958) target = $region80
      $region79: #{bottleneck_block.9} parent=5 // pred_region
        %s1961 = ssub.s32 %s30, 2
        // Predicated region
        $region81: #{bottleneck_block.9} parent=79 // pred_check
          %p1962 = pneg %p205
        $region82: #{bottleneck_block.9} parent=79 // pred_check_branch
          %1964 = sbr.rel (%p1962) target = $region84
        $region83: #{bottleneck_block.9} parent=79 // pred_region
          %s1965 = sand.u32 %s190, 1
          %s1966 = scalar_lea.sflag [#allocation4], %s1965
          %s1967 = sand.u32 %s190, 1
          %s1968 = smul.addr %s1967, 72
          %s1969 = scalar_lea.vmem [#allocation13], %s1968
          %1970 = dma.done %s1966, 1152
        $region84: #{bottleneck_block.9} parent=79 // pred_fallthru
          _
        // Predicated region
        $region85: #{bottleneck_block.9} parent=79 // pred_check
          %p1971 = pneg %p231
        $region86: #{bottleneck_block.9} parent=79 // pred_check_branch
          %1973 = sbr.rel (%p1971) target = $region88
        $region87: #{bottleneck_block.9} parent=79 // pred_region
          %s1974 = sand.u32 %s216, 1
          %s1975 = scalar_lea.sflag [#allocation15], %s1974
          %s1976 = sand.u32 %s216, 1
          %s1977 = smul.addr %s1976, 2
          %s1978 = scalar_lea.vmem [#allocation14], %s1977
          %1979 = dma.done %s1975, 32
        $region88: #{bottleneck_block.9} parent=79 // pred_fallthru
          _
      $region80: #{bottleneck_block.9} parent=5 // pred_fallthru
        _
    $region6: #{bottleneck_block.9} parent=1 // loop_footer
      %s34 = sadd.s32 1, %s30
    $region7: #{bottleneck_block.9} parent=1 // loop_footer_branch
      %29 = sbr.rel target = $region3
    $region8: #{bottleneck_block.9} parent=1 // loop_exit
      _
    %1980 = vsyncpa [#allocation3], 1
    %s1981 = scalar_lea.sflag [#allocation3], 1
    %1982 = vsyncpa %s1981, 1
    %1983 = vsyncpa [#allocation6], 1
    %s1984 = scalar_lea.sflag [#allocation6], 1
    %1985 = vsyncpa %s1984, 1
    %1986 = vsyncpa [#allocation9], 1
    %s1987 = scalar_lea.sflag [#allocation9], 1
    %1988 = vsyncpa %s1987, 1
    %1989 = vsyncpa [#allocation12], 1
    %1990 = vsyncpa [#allocation4], 1
    %s1991 = scalar_lea.sflag [#allocation4], 1
    %1992 = vsyncpa %s1991, 1
    %1993 = vsyncpa [#allocation15], 1
    %s1994 = scalar_lea.sflag [#allocation15], 1
    %1995 = vsyncpa %s1994, 1

</llo_original>
